<compile_context>
chip_gen: v7x
topology: tpu7x:2x2x1
jax: 0.10.0
libtpu: 0.0.40
codegen_flags: <defaults>
</compile_context>

<pallas_src>
import functools

import jax
import jax.numpy as jnp
from jax.experimental import pallas as pl
from jax.experimental.pallas import tpu as pltpu

LANE = 128                      # channel padding target (vreg lane width)
TILE_M = 256                    # row tile for the 1x1 (downsample) matmul
# 48 MiB: generous for these block sizes, but safely below v7x's 64 MiB physical VMEM
# (v5e/v6e have 128 MiB, so this is fine everywhere).
_VMEM_LIMIT_BYTES = 48 * 1024 * 1024


def _round_up(x, m):
    return ((x + m - 1) // m) * m


# --------------------------------------------------------------------------- #
# Pallas kernels
# --------------------------------------------------------------------------- #
def _conv3x3_kernel(ph_ref, w_ref, b_ref, *rest, stride, ho, wo, relu, has_residual):
    """Fused 3x3 conv (+folded BN bias) [+ residual] [+ ReLU] for one image.

    ph_ref: (stride*stride, 1, Hq, Wq, Cin)  bf16 phase-decomposed padded input
    w_ref : (9, Cin, Cout)                    bf16 weights (BN scale folded in)
    b_ref : (1, Cout)                         f32  folded BN bias
    rest  : [r_ref (1, ho, wo, Cout) bf16]?, o_ref (1, ho, wo, Cout)
    """
    if has_residual:
        r_ref, o_ref = rest
    else:
        (o_ref,) = rest

    cin = ph_ref.shape[-1]
    cout = w_ref.shape[-1]
    m = ho * wo

    acc = jnp.zeros((m, cout), jnp.float32)
    # Static unrolled tap loop: 9 shift-and-matmul accumulations on the MXU.
    for di in range(3):
        for dj in range(3):
            phase = (di % stride) * stride + (dj % stride)
            r0 = di // stride
            c0 = dj // stride
            patch = ph_ref[phase, 0, r0:r0 + ho, c0:c0 + wo, :]      # (ho, wo, cin) bf16
            acc = acc + jnp.dot(patch.reshape(m, cin),
                                w_ref[di * 3 + dj],
                                preferred_element_type=jnp.float32)

    acc = acc + b_ref[...]                                            # folded BN bias
    if has_residual:
        acc = acc + r_ref[...].reshape(m, cout).astype(jnp.float32)   # residual add
    if relu:
        acc = jnp.maximum(acc, 0.0)
    o_ref[...] = acc.reshape(1, ho, wo, cout).astype(o_ref.dtype)


def _matmul_bias_kernel(x_ref, w_ref, b_ref, o_ref):
    """(TILE_M, Cin) @ (Cin, Cout) + bias  — used for the 1x1 downsample conv + BN."""
    acc = jnp.dot(x_ref[...], w_ref[...], preferred_element_type=jnp.float32)
    acc = acc + b_ref[...]
    o_ref[...] = acc.astype(o_ref.dtype)


# --------------------------------------------------------------------------- #
# Wrappers around pallas_call
# --------------------------------------------------------------------------- #
def conv3x3_bn_act(x, wmat9, bias, *, stride, relu, residual=None,
                   out_dtype=jnp.bfloat16):
    """3x3 conv (pad=1) + folded BN [+ residual] [+ ReLU]; NHWC, channels lane-padded.

    x      : (N, H, W, Cin) bf16
    wmat9  : (9, Cin, Cout) bf16 (BN scale already folded in)
    bias   : (1, Cout)      f32
    """
    N, H, W, Cin = x.shape
    Cout = wmat9.shape[2]
    xp = jnp.pad(x, ((0, 0), (1, 1), (1, 1), (0, 0)))
    Hp, Wp = H + 2, W + 2
    Ho = (Hp - 3) // stride + 1
    Wo = (Wp - 3) // stride + 1

    if stride == 1:
        phases = xp[None]                                    # (1, N, Hp, Wp, Cin)
        Hq, Wq = Hp, Wp
    else:                                                    # stride == 2
        Hq, Wq = Ho + 1, Wo + 1
        xp = jnp.pad(xp, ((0, 0), (0, 2 * Hq - Hp), (0, 2 * Wq - Wp), (0, 0)))
        phases = jnp.stack([xp[:, p::2, q::2, :] for p in range(2) for q in range(2)],
                           axis=0)                            # (4, N, Hq, Wq, Cin) — 1x size
    s2 = stride * stride

    # TODO(synk): for very large spatial inputs, add an H-tile grid axis with halo rows
    # instead of one whole (padded) image per grid step.
    ph_spec = pl.BlockSpec((s2, 1, Hq, Wq, Cin), lambda n: (0, n, 0, 0, 0))
    w_spec = pl.BlockSpec((9, Cin, Cout), lambda n: (0, 0, 0))      # VMEM-resident weights
    b_spec = pl.BlockSpec((1, Cout), lambda n: (0, 0))
    o_spec = pl.BlockSpec((1, Ho, Wo, Cout), lambda n: (n, 0, 0, 0))

    in_specs = [ph_spec, w_spec, b_spec]
    args = [phases, wmat9, bias]
    has_residual = residual is not None
    if has_residual:
        in_specs.append(pl.BlockSpec((1, Ho, Wo, Cout), lambda n: (n, 0, 0, 0)))
        args.append(residual.astype(jnp.bfloat16))

    kern = functools.partial(_conv3x3_kernel, stride=stride, ho=Ho, wo=Wo,
                             relu=relu, has_residual=has_residual)
    out = pl.pallas_call(
        kern,
        out_shape=jax.ShapeDtypeStruct((N, Ho, Wo, Cout), out_dtype),
        grid=(N,),
        in_specs=in_specs,
        out_specs=o_spec,
        compiler_params=pltpu.CompilerParams(
            dimension_semantics=("parallel",),
            vmem_limit_bytes=_VMEM_LIMIT_BYTES),
    )(*args)
    return out


def conv1x1_bn(x, wmat, bias, *, stride, out_dtype=jnp.bfloat16):
    """1x1 conv (pad=0) + folded BN — the BasicBlock downsample path."""
    if stride > 1:
        x = x[:, ::stride, ::stride, :]
    N, Ho, Wo, Cin = x.shape
    Cout = wmat.shape[1]
    M = N * Ho * Wo
    x2 = x.reshape(M, Cin)

    out = pl.pallas_call(
        _matmul_bias_kernel,
        out_shape=jax.ShapeDtypeStruct((M, Cout), out_dtype),
        grid=(pl.cdiv(M, TILE_M),),                      # ragged last block, no jnp.pad
        in_specs=[pl.BlockSpec((TILE_M, Cin), lambda i: (i, 0)),
                  pl.BlockSpec((Cin, Cout), lambda i: (0, 0)),
                  pl.BlockSpec((1, Cout), lambda i: (0, 0))],
        out_specs=pl.BlockSpec((TILE_M, Cout), lambda i: (i, 0)),
        compiler_params=pltpu.CompilerParams(
            dimension_semantics=("parallel",),
            vmem_limit_bytes=_VMEM_LIMIT_BYTES),
    )(x2, wmat, bias)
    return out.reshape(N, Ho, Wo, Cout)


# --------------------------------------------------------------------------- #
# Parameter prep (deterministic init mirroring PyTorch, BN folded into weights)
# --------------------------------------------------------------------------- #
def _fold_bn(channels, eps=1e-5):
    gamma = jnp.ones((channels,), jnp.float32)
    beta = jnp.zeros((channels,), jnp.float32)
    mean = jnp.zeros((channels,), jnp.float32)   # eval-mode running stats
    var = jnp.ones((channels,), jnp.float32)
    scale = gamma / jnp.sqrt(var + eps)
    bias = beta - mean * scale
    return scale, bias


def _kaiming_conv(key, shape):
    cout, _, kh, kw = shape
    std = (2.0 / (cout * kh * kw)) ** 0.5
    return std * jax.random.normal(key, shape, jnp.float32)


def _prep_conv3x3(w, scale, bias, cin_p, cout_p):
    cout, cin = w.shape[0], w.shape[1]
    wf = w * scale[:, None, None, None]                              # fold BN scale
    wf = jnp.pad(wf, ((0, cout_p - cout), (0, cin_p - cin), (0, 0), (0, 0)))
    wmat = jnp.transpose(wf, (2, 3, 1, 0)).reshape(9, cin_p, cout_p).astype(jnp.bfloat16)
    b = jnp.pad(bias, (0, cout_p - cout)).reshape(1, cout_p).astype(jnp.float32)
    return wmat, b


def _prep_conv1x1(w, scale, bias, cin_p, cout_p):
    cout, cin = w.shape[0], w.shape[1]
    wf = w[:, :, 0, 0] * scale[:, None]                              # fold BN scale
    wf = jnp.pad(wf, ((0, cout_p - cout), (0, cin_p - cin)))
    wmat = wf.T.astype(jnp.bfloat16)                                 # (cin_p, cout_p)
    b = jnp.pad(bias, (0, cout_p - cout)).reshape(1, cout_p).astype(jnp.float32)
    return wmat, b


def init_basic_block(key, inplanes, planes, stride):
    k1, k2, k3 = jax.random.split(key, 3)
    p = {"inplanes": inplanes, "planes": planes, "stride": stride}
    p["w1"] = _kaiming_conv(k1, (planes, inplanes, 3, 3))
    p["bn1"] = _fold_bn(planes)
    p["w2"] = _kaiming_conv(k2, (planes, planes, 3, 3))
    p["bn2"] = _fold_bn(planes)
    if stride != 1 or inplanes != planes:
        p["wd"] = _kaiming_conv(k3, (planes, inplanes, 1, 1))
        p["bnd"] = _fold_bn(planes)
    else:
        p["wd"] = None
    return p


# --------------------------------------------------------------------------- #
# BasicBlock forward (NCHW in / NCHW out, matching the PyTorch module)
# --------------------------------------------------------------------------- #
def basic_block_forward(p, x_nchw):
    inplanes, planes, stride = p["inplanes"], p["planes"], p["stride"]
    cin_p = _round_up(inplanes, LANE)
    cout_p = _round_up(planes, LANE)

    # NCHW -> NHWC, lane-pad channels to a multiple of 128, cast to bf16 for the MXU.
    x = jnp.transpose(x_nchw.astype(jnp.float32), (0, 2, 3, 1))
    x = jnp.pad(x, ((0, 0), (0, 0), (0, 0), (0, cin_p - inplanes))).astype(jnp.bfloat16)

    w1m, b1 = _prep_conv3x3(p["w1"], *p["bn1"], cin_p, cout_p)
    w2m, b2 = _prep_conv3x3(p["w2"], *p["bn2"], cout_p, cout_p)

    if p["wd"] is not None:
        wdm, bd = _prep_conv1x1(p["wd"], *p["bnd"], cin_p, cout_p)
        identity = conv1x1_bn(x, wdm, bd, stride=stride)              # downsample(x)
        add_residual = True
    else:
        identity = x
        # PyTorch: `if out.shape == residual.shape: out += residual`
        add_residual = (stride == 1 and inplanes == planes)

    out = conv3x3_bn_act(x, w1m, b1, stride=stride, relu=True,
                         out_dtype=jnp.bfloat16)                      # conv1+bn1+relu
    out = conv3x3_bn_act(out, w2m, b2, stride=1, relu=True,
                         residual=identity if add_residual else None,
                         out_dtype=jnp.float32)                       # conv2+bn2+add+relu

    out = out[..., :planes]                                           # drop lane padding
    return jnp.transpose(out, (0, 3, 1, 2))                           # NHWC -> NCHW


# --------------------------------------------------------------------------- #
if __name__ == "__main__":
    key = jax.random.PRNGKey(0)
    kp1, kp2, kx = jax.random.split(key, 3)

    # Block A: 64 -> 64, stride 1, identity residual (no downsample).
    block_a = init_basic_block(kp1, 64, 64, 1)
    # Block B: 64 -> 128, stride 2, with 1x1/stride-2 downsample residual.
    block_b = init_basic_block(kp2, 64, 128, 2)

    x = jax.random.normal(kx, (2, 64, 16, 16), jnp.float32)           # NCHW like PyTorch

    y_a = basic_block_forward(block_a, x)
    y_b = basic_block_forward(block_b, y_a)
    y_a, y_b = jax.block_until_ready((y_a, y_b))

    assert y_a.shape == (2, 64, 16, 16)
    assert y_b.shape == (2, 128, 8, 8)
    assert bool(jnp.all(jnp.isfinite(y_a))) and bool(jnp.all(jnp.isfinite(y_b)))
    assert bool(jnp.all(y_a >= 0.0)) and bool(jnp.all(y_b >= 0.0))    # post-ReLU outputs
    print("KERNEL_OK")
</pallas_src>

<mosaic_0001>
module attributes {stable_mosaic.version = 11 : i64} {
  func.func @_conv3x3_kernel(%arg0: i32, %arg1: memref<1x1x18x18x128xbf16, #tpu.memory_space<vmem>>, %arg2: memref<9x128x128xbf16, #tpu.memory_space<vmem>>, %arg3: memref<1x128xf32, #tpu.memory_space<vmem>>, %arg4: memref<1x16x16x128xbf16, #tpu.memory_space<vmem>>) attributes {dimension_semantics = [#tpu.dimension_semantics<parallel>], iteration_bounds = array<i64: 2>, scalar_prefetch = 0 : i64, scratch_operands = 0 : i64, tpu.core_type = #tpu.core_type<tc>, window_params = [{transform_indices = @transform_0, window_bounds = array<i64: 1, 1, 18, 18, 128>}, {pipeline_mode = #tpu.pipeline_mode<synchronous>, transform_indices = @transform_1, window_bounds = array<i64: 9, 128, 128>}, {pipeline_mode = #tpu.pipeline_mode<synchronous>, transform_indices = @transform_2, window_bounds = array<i64: 1, 128>}, {transform_indices = @transform_3, window_bounds = array<i64: 1, 16, 16, 128>}]} {
    %cst = arith.constant 0.000000e+00 : f32
    %0 = vector.broadcast %cst : f32 to vector<256x128xf32>
    %c0 = arith.constant 0 : index
    %c0_0 = arith.constant 0 : index
    %c0_1 = arith.constant 0 : index
    %c0_2 = arith.constant 0 : index
    %c0_3 = arith.constant 0 : index
    %1 = vector.load %arg1[%c0, %c0_0, %c0_1, %c0_2, %c0_3] : memref<1x1x18x18x128xbf16, #tpu.memory_space<vmem>>, vector<1x1x16x16x128xbf16>
    %2 = vector.shape_cast %1 : vector<1x1x16x16x128xbf16> to vector<16x16x128xbf16>
    %3 = vector.shape_cast %2 : vector<16x16x128xbf16> to vector<256x128xbf16>
    %c0_4 = arith.constant 0 : index
    %c0_5 = arith.constant 0 : index
    %c0_6 = arith.constant 0 : index
    %4 = vector.load %arg2[%c0_4, %c0_5, %c0_6] : memref<9x128x128xbf16, #tpu.memory_space<vmem>>, vector<1x128x128xbf16>
    %5 = vector.shape_cast %4 : vector<1x128x128xbf16> to vector<128x128xbf16>
    %cst_7 = arith.constant dense<0.000000e+00> : vector<256x128xf32>
    %6 = tpu.matmul %3, %5, %cst_7 {dimension_numbers = #tpu.dot_dimension_numbers<[1], [0], [0], [1], [0, 0, 1, 1], [], []>} : vector<256x128xbf16>, vector<128x128xbf16>, vector<256x128xf32> -> vector<256x128xf32>
    %7 = arith.addf %0, %6 : vector<256x128xf32>
    %c0_8 = arith.constant 0 : index
    %c0_9 = arith.constant 0 : index
    %c0_10 = arith.constant 0 : index
    %c1 = arith.constant 1 : index
    %c0_11 = arith.constant 0 : index
    %8 = vector.load %arg1[%c0_8, %c0_9, %c0_10, %c1, %c0_11] : memref<1x1x18x18x128xbf16, #tpu.memory_space<vmem>>, vector<1x1x16x16x128xbf16>
    %9 = vector.shape_cast %8 : vector<1x1x16x16x128xbf16> to vector<16x16x128xbf16>
    %10 = vector.shape_cast %9 : vector<16x16x128xbf16> to vector<256x128xbf16>
    %c1_12 = arith.constant 1 : index
    %c0_13 = arith.constant 0 : index
    %c0_14 = arith.constant 0 : index
    %11 = vector.load %arg2[%c1_12, %c0_13, %c0_14] : memref<9x128x128xbf16, #tpu.memory_space<vmem>>, vector<1x128x128xbf16>
    %12 = vector.shape_cast %11 : vector<1x128x128xbf16> to vector<128x128xbf16>
    %cst_15 = arith.constant dense<0.000000e+00> : vector<256x128xf32>
    %13 = tpu.matmul %10, %12, %cst_15 {dimension_numbers = #tpu.dot_dimension_numbers<[1], [0], [0], [1], [0, 0, 1, 1], [], []>} : vector<256x128xbf16>, vector<128x128xbf16>, vector<256x128xf32> -> vector<256x128xf32>
    %14 = arith.addf %7, %13 : vector<256x128xf32>
    %c0_16 = arith.constant 0 : index
    %c0_17 = arith.constant 0 : index
    %c0_18 = arith.constant 0 : index
    %c2 = arith.constant 2 : index
    %c0_19 = arith.constant 0 : index
    %15 = vector.load %arg1[%c0_16, %c0_17, %c0_18, %c2, %c0_19] : memref<1x1x18x18x128xbf16, #tpu.memory_space<vmem>>, vector<1x1x16x16x128xbf16>
    %16 = vector.shape_cast %15 : vector<1x1x16x16x128xbf16> to vector<16x16x128xbf16>
    %17 = vector.shape_cast %16 : vector<16x16x128xbf16> to vector<256x128xbf16>
    %c2_20 = arith.constant 2 : index
    %c0_21 = arith.constant 0 : index
    %c0_22 = arith.constant 0 : index
    %18 = vector.load %arg2[%c2_20, %c0_21, %c0_22] : memref<9x128x128xbf16, #tpu.memory_space<vmem>>, vector<1x128x128xbf16>
    %19 = vector.shape_cast %18 : vector<1x128x128xbf16> to vector<128x128xbf16>
    %cst_23 = arith.constant dense<0.000000e+00> : vector<256x128xf32>
    %20 = tpu.matmul %17, %19, %cst_23 {dimension_numbers = #tpu.dot_dimension_numbers<[1], [0], [0], [1], [0, 0, 1, 1], [], []>} : vector<256x128xbf16>, vector<128x128xbf16>, vector<256x128xf32> -> vector<256x128xf32>
    %21 = arith.addf %14, %20 : vector<256x128xf32>
    %c0_24 = arith.constant 0 : index
    %c0_25 = arith.constant 0 : index
    %c1_26 = arith.constant 1 : index
    %c0_27 = arith.constant 0 : index
    %c0_28 = arith.constant 0 : index
    %22 = vector.load %arg1[%c0_24, %c0_25, %c1_26, %c0_27, %c0_28] : memref<1x1x18x18x128xbf16, #tpu.memory_space<vmem>>, vector<1x1x16x16x128xbf16>
    %23 = vector.shape_cast %22 : vector<1x1x16x16x128xbf16> to vector<16x16x128xbf16>
    %24 = vector.shape_cast %23 : vector<16x16x128xbf16> to vector<256x128xbf16>
    %c3 = arith.constant 3 : index
    %c0_29 = arith.constant 0 : index
    %c0_30 = arith.constant 0 : index
    %25 = vector.load %arg2[%c3, %c0_29, %c0_30] : memref<9x128x128xbf16, #tpu.memory_space<vmem>>, vector<1x128x128xbf16>
    %26 = vector.shape_cast %25 : vector<1x128x128xbf16> to vector<128x128xbf16>
    %cst_31 = arith.constant dense<0.000000e+00> : vector<256x128xf32>
    %27 = tpu.matmul %24, %26, %cst_31 {dimension_numbers = #tpu.dot_dimension_numbers<[1], [0], [0], [1], [0, 0, 1, 1], [], []>} : vector<256x128xbf16>, vector<128x128xbf16>, vector<256x128xf32> -> vector<256x128xf32>
    %28 = arith.addf %21, %27 : vector<256x128xf32>
    %c0_32 = arith.constant 0 : index
    %c0_33 = arith.constant 0 : index
    %c1_34 = arith.constant 1 : index
    %c1_35 = arith.constant 1 : index
    %c0_36 = arith.constant 0 : index
    %29 = vector.load %arg1[%c0_32, %c0_33, %c1_34, %c1_35, %c0_36] : memref<1x1x18x18x128xbf16, #tpu.memory_space<vmem>>, vector<1x1x16x16x128xbf16>
    %30 = vector.shape_cast %29 : vector<1x1x16x16x128xbf16> to vector<16x16x128xbf16>
    %31 = vector.shape_cast %30 : vector<16x16x128xbf16> to vector<256x128xbf16>
    %c4 = arith.constant 4 : index
    %c0_37 = arith.constant 0 : index
    %c0_38 = arith.constant 0 : index
    %32 = vector.load %arg2[%c4, %c0_37, %c0_38] : memref<9x128x128xbf16, #tpu.memory_space<vmem>>, vector<1x128x128xbf16>
    %33 = vector.shape_cast %32 : vector<1x128x128xbf16> to vector<128x128xbf16>
    %cst_39 = arith.constant dense<0.000000e+00> : vector<256x128xf32>
    %34 = tpu.matmul %31, %33, %cst_39 {dimension_numbers = #tpu.dot_dimension_numbers<[1], [0], [0], [1], [0, 0, 1, 1], [], []>} : vector<256x128xbf16>, vector<128x128xbf16>, vector<256x128xf32> -> vector<256x128xf32>
    %35 = arith.addf %28, %34 : vector<256x128xf32>
    %c0_40 = arith.constant 0 : index
    %c0_41 = arith.constant 0 : index
    %c1_42 = arith.constant 1 : index
    %c2_43 = arith.constant 2 : index
    %c0_44 = arith.constant 0 : index
    %36 = vector.load %arg1[%c0_40, %c0_41, %c1_42, %c2_43, %c0_44] : memref<1x1x18x18x128xbf16, #tpu.memory_space<vmem>>, vector<1x1x16x16x128xbf16>
    %37 = vector.shape_cast %36 : vector<1x1x16x16x128xbf16> to vector<16x16x128xbf16>
    %38 = vector.shape_cast %37 : vector<16x16x128xbf16> to vector<256x128xbf16>
    %c5 = arith.constant 5 : index
    %c0_45 = arith.constant 0 : index
    %c0_46 = arith.constant 0 : index
    %39 = vector.load %arg2[%c5, %c0_45, %c0_46] : memref<9x128x128xbf16, #tpu.memory_space<vmem>>, vector<1x128x128xbf16>
    %40 = vector.shape_cast %39 : vector<1x128x128xbf16> to vector<128x128xbf16>
    %cst_47 = arith.constant dense<0.000000e+00> : vector<256x128xf32>
    %41 = tpu.matmul %38, %40, %cst_47 {dimension_numbers = #tpu.dot_dimension_numbers<[1], [0], [0], [1], [0, 0, 1, 1], [], []>} : vector<256x128xbf16>, vector<128x128xbf16>, vector<256x128xf32> -> vector<256x128xf32>
    %42 = arith.addf %35, %41 : vector<256x128xf32>
    %c0_48 = arith.constant 0 : index
    %c0_49 = arith.constant 0 : index
    %c2_50 = arith.constant 2 : index
    %c0_51 = arith.constant 0 : index
    %c0_52 = arith.constant 0 : index
    %43 = vector.load %arg1[%c0_48, %c0_49, %c2_50, %c0_51, %c0_52] : memref<1x1x18x18x128xbf16, #tpu.memory_space<vmem>>, vector<1x1x16x16x128xbf16>
    %44 = vector.shape_cast %43 : vector<1x1x16x16x128xbf16> to vector<16x16x128xbf16>
    %45 = vector.shape_cast %44 : vector<16x16x128xbf16> to vector<256x128xbf16>
    %c6 = arith.constant 6 : index
    %c0_53 = arith.constant 0 : index
    %c0_54 = arith.constant 0 : index
    %46 = vector.load %arg2[%c6, %c0_53, %c0_54] : memref<9x128x128xbf16, #tpu.memory_space<vmem>>, vector<1x128x128xbf16>
    %47 = vector.shape_cast %46 : vector<1x128x128xbf16> to vector<128x128xbf16>
    %cst_55 = arith.constant dense<0.000000e+00> : vector<256x128xf32>
    %48 = tpu.matmul %45, %47, %cst_55 {dimension_numbers = #tpu.dot_dimension_numbers<[1], [0], [0], [1], [0, 0, 1, 1], [], []>} : vector<256x128xbf16>, vector<128x128xbf16>, vector<256x128xf32> -> vector<256x128xf32>
    %49 = arith.addf %42, %48 : vector<256x128xf32>
    %c0_56 = arith.constant 0 : index
    %c0_57 = arith.constant 0 : index
    %c2_58 = arith.constant 2 : index
    %c1_59 = arith.constant 1 : index
    %c0_60 = arith.constant 0 : index
    %50 = vector.load %arg1[%c0_56, %c0_57, %c2_58, %c1_59, %c0_60] : memref<1x1x18x18x128xbf16, #tpu.memory_space<vmem>>, vector<1x1x16x16x128xbf16>
    %51 = vector.shape_cast %50 : vector<1x1x16x16x128xbf16> to vector<16x16x128xbf16>
    %52 = vector.shape_cast %51 : vector<16x16x128xbf16> to vector<256x128xbf16>
    %c7 = arith.constant 7 : index
    %c0_61 = arith.constant 0 : index
    %c0_62 = arith.constant 0 : index
    %53 = vector.load %arg2[%c7, %c0_61, %c0_62] : memref<9x128x128xbf16, #tpu.memory_space<vmem>>, vector<1x128x128xbf16>
    %54 = vector.shape_cast %53 : vector<1x128x128xbf16> to vector<128x128xbf16>
    %cst_63 = arith.constant dense<0.000000e+00> : vector<256x128xf32>
    %55 = tpu.matmul %52, %54, %cst_63 {dimension_numbers = #tpu.dot_dimension_numbers<[1], [0], [0], [1], [0, 0, 1, 1], [], []>} : vector<256x128xbf16>, vector<128x128xbf16>, vector<256x128xf32> -> vector<256x128xf32>
    %56 = arith.addf %49, %55 : vector<256x128xf32>
    %c0_64 = arith.constant 0 : index
    %c0_65 = arith.constant 0 : index
    %c2_66 = arith.constant 2 : index
    %c2_67 = arith.constant 2 : index
    %c0_68 = arith.constant 0 : index
    %57 = vector.load %arg1[%c0_64, %c0_65, %c2_66, %c2_67, %c0_68] : memref<1x1x18x18x128xbf16, #tpu.memory_space<vmem>>, vector<1x1x16x16x128xbf16>
    %58 = vector.shape_cast %57 : vector<1x1x16x16x128xbf16> to vector<16x16x128xbf16>
    %59 = vector.shape_cast %58 : vector<16x16x128xbf16> to vector<256x128xbf16>
    %c8 = arith.constant 8 : index
    %c0_69 = arith.constant 0 : index
    %c0_70 = arith.constant 0 : index
    %60 = vector.load %arg2[%c8, %c0_69, %c0_70] : memref<9x128x128xbf16, #tpu.memory_space<vmem>>, vector<1x128x128xbf16>
    %61 = vector.shape_cast %60 : vector<1x128x128xbf16> to vector<128x128xbf16>
    %cst_71 = arith.constant dense<0.000000e+00> : vector<256x128xf32>
    %62 = tpu.matmul %59, %61, %cst_71 {dimension_numbers = #tpu.dot_dimension_numbers<[1], [0], [0], [1], [0, 0, 1, 1], [], []>} : vector<256x128xbf16>, vector<128x128xbf16>, vector<256x128xf32> -> vector<256x128xf32>
    %63 = arith.addf %56, %62 : vector<256x128xf32>
    %c0_72 = arith.constant 0 : index
    %c0_73 = arith.constant 0 : index
    %64 = vector.load %arg3[%c0_72, %c0_73] : memref<1x128xf32, #tpu.memory_space<vmem>>, vector<1x128xf32>
    %65 = vector.broadcast %64 : vector<1x128xf32> to vector<256x128xf32>
    %66 = arith.addf %63, %65 : vector<256x128xf32>
    %cst_74 = arith.constant 0.000000e+00 : f32
    %67 = vector.broadcast %cst_74 : f32 to vector<256x128xf32>
    %68 = arith.maximumf %66, %67 : vector<256x128xf32>
    %69 = vector.shape_cast %68 : vector<256x128xf32> to vector<1x16x16x128xf32>
    %70 = arith.truncf %69 : vector<1x16x16x128xf32> to vector<1x16x16x128xbf16>
    %c0_75 = arith.constant 0 : index
    %c0_76 = arith.constant 0 : index
    %c0_77 = arith.constant 0 : index
    %c0_78 = arith.constant 0 : index
    %71 = vector.load %arg4[%c0_75, %c0_76, %c0_77, %c0_78] : memref<1x16x16x128xbf16, #tpu.memory_space<vmem>>, vector<1x16x16x128xbf16>
    tpu.vector_store %arg4[%c0_75, %c0_76, %c0_77, %c0_78], %70 {strides = array<i32>} : memref<1x16x16x128xbf16, #tpu.memory_space<vmem>>, vector<1x16x16x128xbf16>,
    return
  }
  func.func @transform_0(%arg0: i32) -> (i32, i32, i32, i32, i32) {
    %c0_i32 = arith.constant 0 : i32
    %c0_i32_0 = arith.constant 0 : i32
    %c0_i32_1 = arith.constant 0 : i32
    %c0_i32_2 = arith.constant 0 : i32
    %c0_i32_3 = arith.constant 0 : i32
    return %c0_i32, %arg0, %c0_i32_0, %c0_i32_1, %c0_i32_2 : i32, i32, i32, i32, i32
  }
  func.func @transform_1(%arg0: i32) -> (i32, i32, i32) {
    %c0_i32 = arith.constant 0 : i32
    %c0_i32_0 = arith.constant 0 : i32
    %c0_i32_1 = arith.constant 0 : i32
    %c0_i32_2 = arith.constant 0 : i32
    return %c0_i32, %c0_i32_0, %c0_i32_1 : i32, i32, i32
  }
  func.func @transform_2(%arg0: i32) -> (i32, i32) {
    %c0_i32 = arith.constant 0 : i32
    %c0_i32_0 = arith.constant 0 : i32
    %c0_i32_1 = arith.constant 0 : i32
    return %c0_i32, %c0_i32_0 : i32, i32
  }
  func.func @transform_3(%arg0: i32) -> (i32, i32, i32, i32) {
    %c0_i32 = arith.constant 0 : i32
    %c0_i32_0 = arith.constant 0 : i32
    %c0_i32_1 = arith.constant 0 : i32
    %c0_i32_2 = arith.constant 0 : i32
    return %arg0, %c0_i32, %c0_i32_0, %c0_i32_1 : i32, i32, i32, i32
  }
}

</mosaic_0001>

<llo_original>
// kernel: tpu_custom_call.1
$region0: #{tpu_custom_call.1}
  #allocation0 [shape = 'u32[]', space=smem, size = 0x4, offset = 0x4, fixed_abs, tag = 'smem constant byte address 0x4 - core index']
  #allocation1 [shape = 'u32[144,128]{1,0:T(1,128)}', space=vmem, size = 0x12000, scoped, tag = 'internal scratch']
  %s0 = inlined_call_operand.vmem [shape: bf16[1,2,18,18,128], index: 0, kind: input, shape index: {}]
  %s1 = inlined_call_operand.vmem [shape: bf16[9,128,128], index: 1, kind: input, shape index: {}]
  %s2 = inlined_call_operand.vmem [shape: f32[1,128], index: 2, kind: input, shape index: {}]
  %s3 = inlined_call_operand.hbm [shape: bf16[2,16,16,128], index: 3, kind: output, shape index: {}]
  %s4 = sld [smem:[#allocation0]]
  $region45: #{tpu_custom_call.1} parent=0
    _
  %s6 = ssub.s32 1, %s4
  %s7 = scalar_select 0, %s6, %s4
  $region1: #{tpu_custom_call.1} parent=0
    #allocation2 [shape = 'u8[131072]{0}', space=vmem, size = 0x20000, scoped, tag = 'output window, operand 0']
    #allocation3 [shape = 's32[2]{0}', space=sflag, size = 0x8, scoped, tag = 'scoped memory for tpu_custom_call.1']
    %8 = vsyncpa [#allocation3], 0
    %s9 = scalar_lea.sflag [#allocation3], 1
    %10 = vsyncpa %s9, 0
    loop: start=0, step=1, limit=4
    $region2: #{tpu_custom_call.1} parent=1 // loop_pre_header
      _
    $region3: #{tpu_custom_call.1} parent=1 // loop_header
      %s12 = sphi 0, %s16
      %p13 = scmp.ge.s32.totalorder %s12, 4
      %s22 = sphi 0, %s24
      %s25 = sphi 0, %s22
      %s26 = sphi 0, %s25
      %s42 = sphi 0, %s26
      %s46 = sphi 0, %s46
      %s48 = sphi 0, %s46
      %s49 = sphi 0, %s48
      %s63 = sphi 0, %s49
      %s67 = sphi 0, %s67
      %s69 = sphi 0, %s67
      %s70 = sphi 0, %s69
      %s84 = sphi 0, %s70
      %s90 = sphi 0, %s92
      %s93 = sphi 0, %s90
      %s94 = sphi 0, %s93
      %s110 = sphi 0, %s94
    $region4: #{tpu_custom_call.1} parent=1 // loop_header_branch
      %15 = sbr.rel (%p13) target = $region8
    $region5: #{tpu_custom_call.1} parent=1 // loop_body
      %s17 = ssub.s32 %s12, 1
      %s18 = ssub.s32 %s12, 2
      %s19 = sadd.s32 %s12, 1
      %s20 = ssub.s32 %s12, %s19
      %p21 = scmp.eq.s32.totalorder %s20, 0
      %s23 = sadd.s32 %s22, 1
      %s24 = scalar_select %p21, %s22, %s23
      %p27 = pneg %p21
      %p28 = scmp.eq.s32.totalorder %s12, 1
      %p29 = por %p27, %p28
      %p30 = scmp.ne.s32.totalorder %s22, %s25
      %p31 = scmp.eq.s32.totalorder %s12, 0
      %p32 = por %p30, %p31
      %p33 = scmp.ne.s32.totalorder %s22, %s25
      %p34 = scmp.eq.s32.totalorder %s17, 1
      %p35 = por %p33, %p34
      %p36 = scmp.ne.s32.totalorder %s25, %s26
      %p37 = scmp.eq.s32.totalorder %s17, 0
      %p38 = por %p36, %p37
      %p39 = scmp.ne.s32.totalorder %s25, %s26
      %p40 = scmp.eq.s32.totalorder %s18, 1
      %p41 = por %p39, %p40
      %p43 = scmp.ne.s32.totalorder %s26, %s42
      %p44 = scmp.eq.s32.totalorder %s18, 0
      %p45 = por %p43, %p44
      %s47 = sadd.s32 %s46, 1
      %p50 = scmp.eq.s32.totalorder %s12, 1
      %p51 = scmp.ne.s32.totalorder %s46, %s48
      %p52 = scmp.eq.s32.totalorder %s12, 0
      %p53 = por %p51, %p52
      %p54 = scmp.ne.s32.totalorder %s46, %s48
      %p55 = scmp.eq.s32.totalorder %s17, 1
      %p56 = por %p54, %p55
      %p57 = scmp.ne.s32.totalorder %s48, %s49
      %p58 = scmp.eq.s32.totalorder %s17, 0
      %p59 = por %p57, %p58
      %p60 = scmp.ne.s32.totalorder %s48, %s49
      %p61 = scmp.eq.s32.totalorder %s18, 1
      %p62 = por %p60, %p61
      %p64 = scmp.ne.s32.totalorder %s49, %s63
      %p65 = scmp.eq.s32.totalorder %s18, 0
      %p66 = por %p64, %p65
      %s68 = sadd.s32 %s67, 1
      %p71 = scmp.eq.s32.totalorder %s12, 1
      %p72 = scmp.ne.s32.totalorder %s67, %s69
      %p73 = scmp.eq.s32.totalorder %s12, 0
      %p74 = por %p72, %p73
      %p75 = scmp.ne.s32.totalorder %s67, %s69
      %p76 = scmp.eq.s32.totalorder %s17, 1
      %p77 = por %p75, %p76
      %p78 = scmp.ne.s32.totalorder %s69, %s70
      %p79 = scmp.eq.s32.totalorder %s17, 0
      %p80 = por %p78, %p79
      %p81 = scmp.ne.s32.totalorder %s69, %s70
      %p82 = scmp.eq.s32.totalorder %s18, 1
      %p83 = por %p81, %p82
      %p85 = scmp.ne.s32.totalorder %s70, %s84
      %p86 = scmp.eq.s32.totalorder %s18, 0
      %p87 = por %p85, %p86
      %s88 = ssub.s32 %s12, %s19
      %p89 = scmp.eq.s32.totalorder %s88, 0
      %s91 = sadd.s32 %s90, 1
      %s92 = scalar_select %p89, %s90, %s91
      %p95 = pneg %p89
      %p96 = scmp.eq.s32.totalorder %s12, 1
      %p97 = por %p95, %p96
      %p98 = scmp.ne.s32.totalorder %s90, %s93
      %p99 = scmp.eq.s32.totalorder %s12, 0
      %p100 = por %p98, %p99
      %p101 = scmp.ne.s32.totalorder %s90, %s93
      %p102 = scmp.eq.s32.totalorder %s17, 1
      %p103 = por %p101, %p102
      %p104 = scmp.ne.s32.totalorder %s93, %s94
      %p105 = scmp.eq.s32.totalorder %s17, 0
      %p106 = por %p104, %p105
      %p107 = scmp.ne.s32.totalorder %s93, %s94
      %p108 = scmp.eq.s32.totalorder %s18, 1
      %p109 = por %p107, %p108
      %p111 = scmp.ne.s32.totalorder %s94, %s110
      %p112 = scmp.eq.s32.totalorder %s18, 0
      %p113 = por %p111, %p112
      %p114 = scmp.le.s32.totalorder 1, %s12
      %p115 = scmp.lt.s32.totalorder %s12, 3
      %p116 = pnand %p114, %p115
      %p117 = pneg %p116
      // Predicated region
      $region9: #{tpu_custom_call.1} parent=5 // pred_check
        _
      $region10: #{tpu_custom_call.1} parent=5 // pred_check_branch
        %119 = sbr.rel (%p116) target = $region12
      $region11: #{tpu_custom_call.1} parent=5 // pred_region
        %s120 = ssub.s32 %s12, 1
        // Predicated region
        $region13: #{tpu_custom_call.1} parent=11 // pred_check
          %p121 = pneg %p59
        $region14: #{tpu_custom_call.1} parent=11 // pred_check_branch
          %123 = sbr.rel (%p121) target = $region16
        $region15: #{tpu_custom_call.1} parent=11 // pred_region
          _
        $region16: #{tpu_custom_call.1} parent=11 // pred_fallthru
          _
        // Predicated region
        $region17: #{tpu_custom_call.1} parent=11 // pred_check
          %p124 = pneg %p80
        $region18: #{tpu_custom_call.1} parent=11 // pred_check_branch
          %126 = sbr.rel (%p124) target = $region20
        $region19: #{tpu_custom_call.1} parent=11 // pred_region
          _
        $region20: #{tpu_custom_call.1} parent=11 // pred_fallthru
          _
      $region12: #{tpu_custom_call.1} parent=5 // pred_fallthru
        _
      %p127 = scmp.lt.s32.totalorder %s12, 2
      // Predicated region
      $region21: #{tpu_custom_call.1} parent=5 // pred_check
        %p128 = pneg %p127
      $region22: #{tpu_custom_call.1} parent=5 // pred_check_branch
        %130 = sbr.rel (%p128) target = $region24
      $region23: #{tpu_custom_call.1} parent=5 // pred_region
        // Predicated region
        $region25: #{tpu_custom_call.1} parent=23 // pred_check
          %p131 = pneg %p32
        $region26: #{tpu_custom_call.1} parent=23 // pred_check_branch
          %133 = sbr.rel (%p131) target = $region28
        $region27: #{tpu_custom_call.1} parent=23 // pred_region
          %p134 = scmp.lt.s32.totalorder %s12, 1
          %s135 = scalar_select %p134, %s12, 1
          %s136 = smul.addr %s135, 54
          %s137 = smul.addr %s136, 4
          %s138 = scalar_lea.vmem %s0, %s137
        $region28: #{tpu_custom_call.1} parent=23 // pred_fallthru
          _
      $region24: #{tpu_custom_call.1} parent=5 // pred_fallthru
        _
      %p139 = scmp.le.s32.totalorder 1, %s12
      %p140 = scmp.lt.s32.totalorder %s12, 3
      %p141 = pnand %p139, %p140
      %p142 = pneg %p141
      // Predicated region
      $region29: #{tpu_custom_call.1} parent=5 // pred_check
        _
      $region30: #{tpu_custom_call.1} parent=5 // pred_check_branch
        %144 = sbr.rel (%p141) target = $region32
      $region31: #{tpu_custom_call.1} parent=5 // pred_region
        %s145 = ssub.s32 %s12, 1
        %p146 = scmp.lt.s32.totalorder %s17, 1
        %s147 = scalar_select %p146, %s17, 1
        %s148 = smul.addr %s147, 54
        %s149 = smul.addr %s148, 4
        %s150 = scalar_lea.vmem %s0, %s149
        %p151 = pneg %p38
        %p152 = pneg %p35
        %p153 = pneg %p59
        %p154 = pneg %p56
        %p155 = pneg %p80
        %p156 = pneg %p77
        %p157 = pneg %p106
        %p158 = pneg %p103
        %s159 = sand.u32 %s93, 1
        %s160 = scalar_lea.sflag [#allocation3], %s159
        %s161 = sand.u32 %s93, 1
        %s162 = smul.addr %s161, 128
        %s163 = scalar_lea.vmem [#allocation2], %s162
        %p164 = scmp.lt.s32.totalorder %s17, 1
        %s165 = scalar_select %p164, %s17, 1
        %s166 = smul.addr %s165, 54
        %s167 = smul.addr %s166, 4
        %s168 = scalar_lea.vmem %s0, %s167
        %v170 = vld [vmem:[%s168] sm:$0xf]
        %v171 = vld [vmem:[%s168 + $0x4] sm:$0xf]
        %v172 = vld [vmem:[%s168 + $0xc] sm:$0xf]
        %v173 = vld [vmem:[%s168 + $0x10] sm:$0xf]
        %v174 = vld [vmem:[%s168 + $0x18] sm:$0xf]
        %v175 = vld [vmem:[%s168 + $0x1c] sm:$0xf]
        %v176 = vld [vmem:[%s168 + $0x24] sm:$0xf]
        %v177 = vld [vmem:[%s168 + $0x28] sm:$0xf]
        %v178 = vld [vmem:[%s168 + $0x30] sm:$0xf]
        %v179 = vld [vmem:[%s168 + $0x34] sm:$0xf]
        %v180 = vld [vmem:[%s168 + $0x3c] sm:$0xf]
        %v181 = vld [vmem:[%s168 + $0x40] sm:$0xf]
        %v182 = vld [vmem:[%s168 + $0x48] sm:$0xf]
        %v183 = vld [vmem:[%s168 + $0x4c] sm:$0xf]
        %v184 = vld [vmem:[%s168 + $0x54] sm:$0xf]
        %v185 = vld [vmem:[%s168 + $0x58] sm:$0xf]
        %v186 = vld [vmem:[%s168 + $0x60] sm:$0xf]
        %v187 = vld [vmem:[%s168 + $0x64] sm:$0xf]
        %v188 = vld [vmem:[%s168 + $0x6c] sm:$0xf]
        %v189 = vld [vmem:[%s168 + $0x70] sm:$0xf]
        %v190 = vld [vmem:[%s168 + $0x78] sm:$0xf]
        %v191 = vld [vmem:[%s168 + $0x7c] sm:$0xf]
        %v192 = vld [vmem:[%s168 + $0x84] sm:$0xf]
        %v193 = vld [vmem:[%s168 + $0x88] sm:$0xf]
        %v194 = vld [vmem:[%s168 + $0x90] sm:$0xf]
        %v195 = vld [vmem:[%s168 + $0x94] sm:$0xf]
        %v196 = vld [vmem:[%s168 + $0x9c] sm:$0xf]
        %v197 = vld [vmem:[%s168 + $0xa0] sm:$0xf]
        %v198 = vld [vmem:[%s168 + $0xa8] sm:$0xf]
        %v199 = vld [vmem:[%s168 + $0xac] sm:$0xf]
        %v200 = vld [vmem:[%s168 + $0xb4] sm:$0xf]
        %v201 = vld [vmem:[%s168 + $0xb8] sm:$0xf]
        %v202 = vld [vmem:[%s1] sm:$0xf]
        %v203 = vld [vmem:[%s1 + $0x4] sm:$0xf]
        %v204 = vld [vmem:[%s1 + $0x8] sm:$0xf]
        %v205 = vld [vmem:[%s1 + $0xc] sm:$0xf]
        %v206 = vld [vmem:[%s1 + $0x10] sm:$0xf]
        %v207 = vld [vmem:[%s1 + $0x14] sm:$0xf]
        %v208 = vld [vmem:[%s1 + $0x18] sm:$0xf]
        %v209 = vld [vmem:[%s1 + $0x1c] sm:$0xf]
        %v210 = vld [vmem:[%s1 + $0x20] sm:$0xf]
        %v211 = vld [vmem:[%s1 + $0x24] sm:$0xf]
        %v212 = vld [vmem:[%s1 + $0x28] sm:$0xf]
        %v213 = vld [vmem:[%s1 + $0x2c] sm:$0xf]
        %v214 = vld [vmem:[%s1 + $0x30] sm:$0xf]
        %v215 = vld [vmem:[%s1 + $0x34] sm:$0xf]
        %v216 = vld [vmem:[%s1 + $0x38] sm:$0xf]
        %v217 = vld [vmem:[%s1 + $0x3c] sm:$0xf]
        %v218 = vld [vmem:[%s168 + $0x8] sm:$0x1]
        %v219 = vld [vmem:[%s168 + $0x14] sm:$0x1]
        %v220 = vld [vmem:[%s168 + $0x20] sm:$0x1]
        %v221 = vld [vmem:[%s168 + $0x2c] sm:$0x1]
        %v222 = vld [vmem:[%s168 + $0x38] sm:$0x1]
        %v223 = vld [vmem:[%s168 + $0x44] sm:$0x1]
        %v224 = vld [vmem:[%s168 + $0x50] sm:$0x1]
        %v225 = vld [vmem:[%s168 + $0x5c] sm:$0x1]
        %v226 = vld [vmem:[%s168 + $0x68] sm:$0x1]
        %v227 = vld [vmem:[%s168 + $0x74] sm:$0x1]
        %v228 = vld [vmem:[%s168 + $0x80] sm:$0x1]
        %v229 = vld [vmem:[%s168 + $0x8c] sm:$0x1]
        %v230 = vld [vmem:[%s168 + $0x98] sm:$0x1]
        %v231 = vld [vmem:[%s168 + $0xa4] sm:$0x1]
        %v232 = vld [vmem:[%s168 + $0xb0] sm:$0x1]
        %v233 = vld [vmem:[%s168 + $0xbc] sm:$0x1]
        %vm234 = vsmask.f32 3328
        %vm235 = vsmask.f32 7440
        %vm236 = vmor %vm234, %vm235
        %v238 = vshrl.u32 %v170, 16
        %v240 = vrot.slane %v238, 4
        %v241 = vshll.u32 %v170, 16
        %v243 = vrot.slane %v241, 5
        %v244 = vor.u32 %v240, %v243
        %v245 = vrot.slane %v244, 4
        %v247 = vshll.u32 %v171, 16
        %v249 = vrot.slane %v247, 5
        %v250 = vsel %vm236, %v245, %v249
        %v251 = vshrl.u32 %v171, 16
        %v253 = vrot.slane %v251, 4
        %v254 = vor.u32 %v253, %v249
        %v255 = vrot.slane %v254, 4
        %v257 = vshll.u32 %v218, 16
        %v259 = vrot.slane %v257, 5
        %v260 = vsel %vm236, %v255, %v259
        %v262 = vshrl.u32 %v172, 16
        %v264 = vrot.slane %v262, 4
        %v265 = vshll.u32 %v172, 16
        %v267 = vrot.slane %v265, 5
        %v268 = vor.u32 %v264, %v267
        %v269 = vrot.slane %v268, 4
        %v271 = vshll.u32 %v173, 16
        %v273 = vrot.slane %v271, 5
        %v274 = vsel %vm236, %v269, %v273
        %v275 = vshrl.u32 %v173, 16
        %v277 = vrot.slane %v275, 4
        %v278 = vor.u32 %v277, %v273
        %v279 = vrot.slane %v278, 4
        %v281 = vshll.u32 %v219, 16
        %v283 = vrot.slane %v281, 5
        %v284 = vsel %vm236, %v279, %v283
        %v286 = vshrl.u32 %v174, 16
        %v288 = vrot.slane %v286, 4
        %v289 = vshll.u32 %v174, 16
        %v291 = vrot.slane %v289, 5
        %v292 = vor.u32 %v288, %v291
        %v293 = vrot.slane %v292, 4
        %v295 = vshll.u32 %v175, 16
        %v297 = vrot.slane %v295, 5
        %v298 = vsel %vm236, %v293, %v297
        %v299 = vshrl.u32 %v175, 16
        %v301 = vrot.slane %v299, 4
        %v302 = vor.u32 %v301, %v297
        %v303 = vrot.slane %v302, 4
        %v305 = vshll.u32 %v220, 16
        %v307 = vrot.slane %v305, 5
        %v308 = vsel %vm236, %v303, %v307
        %v310 = vshrl.u32 %v176, 16
        %v312 = vrot.slane %v310, 4
        %v313 = vshll.u32 %v176, 16
        %v315 = vrot.slane %v313, 5
        %v316 = vor.u32 %v312, %v315
        %v317 = vrot.slane %v316, 4
        %v319 = vshll.u32 %v177, 16
        %v321 = vrot.slane %v319, 5
        %v322 = vsel %vm236, %v317, %v321
        %v323 = vshrl.u32 %v177, 16
        %v325 = vrot.slane %v323, 4
        %v326 = vor.u32 %v325, %v321
        %v327 = vrot.slane %v326, 4
        %v329 = vshll.u32 %v221, 16
        %v331 = vrot.slane %v329, 5
        %v332 = vsel %vm236, %v327, %v331
        %v334 = vshrl.u32 %v178, 16
        %v336 = vrot.slane %v334, 4
        %v337 = vshll.u32 %v178, 16
        %v339 = vrot.slane %v337, 5
        %v340 = vor.u32 %v336, %v339
        %v341 = vrot.slane %v340, 4
        %v343 = vshll.u32 %v179, 16
        %v345 = vrot.slane %v343, 5
        %v346 = vsel %vm236, %v341, %v345
        %v347 = vshrl.u32 %v179, 16
        %v349 = vrot.slane %v347, 4
        %v350 = vor.u32 %v349, %v345
        %v351 = vrot.slane %v350, 4
        %v353 = vshll.u32 %v222, 16
        %v355 = vrot.slane %v353, 5
        %v356 = vsel %vm236, %v351, %v355
        %v358 = vshrl.u32 %v180, 16
        %v360 = vrot.slane %v358, 4
        %v361 = vshll.u32 %v180, 16
        %v363 = vrot.slane %v361, 5
        %v364 = vor.u32 %v360, %v363
        %v365 = vrot.slane %v364, 4
        %v367 = vshll.u32 %v181, 16
        %v369 = vrot.slane %v367, 5
        %v370 = vsel %vm236, %v365, %v369
        %v371 = vshrl.u32 %v181, 16
        %v373 = vrot.slane %v371, 4
        %v374 = vor.u32 %v373, %v369
        %v375 = vrot.slane %v374, 4
        %v377 = vshll.u32 %v223, 16
        %v379 = vrot.slane %v377, 5
        %v380 = vsel %vm236, %v375, %v379
        %v382 = vshrl.u32 %v182, 16
        %v384 = vrot.slane %v382, 4
        %v385 = vshll.u32 %v182, 16
        %v387 = vrot.slane %v385, 5
        %v388 = vor.u32 %v384, %v387
        %v389 = vrot.slane %v388, 4
        %v391 = vshll.u32 %v183, 16
        %v393 = vrot.slane %v391, 5
        %v394 = vsel %vm236, %v389, %v393
        %v395 = vshrl.u32 %v183, 16
        %v397 = vrot.slane %v395, 4
        %v398 = vor.u32 %v397, %v393
        %v399 = vrot.slane %v398, 4
        %v401 = vshll.u32 %v224, 16
        %v403 = vrot.slane %v401, 5
        %v404 = vsel %vm236, %v399, %v403
        %v406 = vshrl.u32 %v184, 16
        %v408 = vrot.slane %v406, 4
        %v409 = vshll.u32 %v184, 16
        %v411 = vrot.slane %v409, 5
        %v412 = vor.u32 %v408, %v411
        %v413 = vrot.slane %v412, 4
        %v415 = vshll.u32 %v185, 16
        %v417 = vrot.slane %v415, 5
        %v418 = vsel %vm236, %v413, %v417
        %v419 = vshrl.u32 %v185, 16
        %v421 = vrot.slane %v419, 4
        %v422 = vor.u32 %v421, %v417
        %v423 = vrot.slane %v422, 4
        %v425 = vshll.u32 %v225, 16
        %v427 = vrot.slane %v425, 5
        %v428 = vsel %vm236, %v423, %v427
        %v430 = vshrl.u32 %v186, 16
        %v432 = vrot.slane %v430, 4
        %v433 = vshll.u32 %v186, 16
        %v435 = vrot.slane %v433, 5
        %v436 = vor.u32 %v432, %v435
        %v437 = vrot.slane %v436, 4
        %v439 = vshll.u32 %v187, 16
        %v441 = vrot.slane %v439, 5
        %v442 = vsel %vm236, %v437, %v441
        %v443 = vshrl.u32 %v187, 16
        %v445 = vrot.slane %v443, 4
        %v446 = vor.u32 %v445, %v441
        %v447 = vrot.slane %v446, 4
        %v449 = vshll.u32 %v226, 16
        %v451 = vrot.slane %v449, 5
        %v452 = vsel %vm236, %v447, %v451
        %v454 = vshrl.u32 %v188, 16
        %v456 = vrot.slane %v454, 4
        %v457 = vshll.u32 %v188, 16
        %v459 = vrot.slane %v457, 5
        %v460 = vor.u32 %v456, %v459
        %v461 = vrot.slane %v460, 4
        %v463 = vshll.u32 %v189, 16
        %v465 = vrot.slane %v463, 5
        %v466 = vsel %vm236, %v461, %v465
        %v467 = vshrl.u32 %v189, 16
        %v469 = vrot.slane %v467, 4
        %v470 = vor.u32 %v469, %v465
        %v471 = vrot.slane %v470, 4
        %v473 = vshll.u32 %v227, 16
        %v475 = vrot.slane %v473, 5
        %v476 = vsel %vm236, %v471, %v475
        %v478 = vshrl.u32 %v190, 16
        %v480 = vrot.slane %v478, 4
        %v481 = vshll.u32 %v190, 16
        %v483 = vrot.slane %v481, 5
        %v484 = vor.u32 %v480, %v483
        %v485 = vrot.slane %v484, 4
        %v487 = vshll.u32 %v191, 16
        %v489 = vrot.slane %v487, 5
        %v490 = vsel %vm236, %v485, %v489
        %v491 = vshrl.u32 %v191, 16
        %v493 = vrot.slane %v491, 4
        %v494 = vor.u32 %v493, %v489
        %v495 = vrot.slane %v494, 4
        %v497 = vshll.u32 %v228, 16
        %v499 = vrot.slane %v497, 5
        %v500 = vsel %vm236, %v495, %v499
        %v502 = vshrl.u32 %v192, 16
        %v504 = vrot.slane %v502, 4
        %v505 = vshll.u32 %v192, 16
        %v507 = vrot.slane %v505, 5
        %v508 = vor.u32 %v504, %v507
        %v509 = vrot.slane %v508, 4
        %v511 = vshll.u32 %v193, 16
        %v513 = vrot.slane %v511, 5
        %v514 = vsel %vm236, %v509, %v513
        %v515 = vshrl.u32 %v193, 16
        %v517 = vrot.slane %v515, 4
        %v518 = vor.u32 %v517, %v513
        %v519 = vrot.slane %v518, 4
        %v521 = vshll.u32 %v229, 16
        %v523 = vrot.slane %v521, 5
        %v524 = vsel %vm236, %v519, %v523
        %v526 = vshrl.u32 %v194, 16
        %v528 = vrot.slane %v526, 4
        %v529 = vshll.u32 %v194, 16
        %v531 = vrot.slane %v529, 5
        %v532 = vor.u32 %v528, %v531
        %v533 = vrot.slane %v532, 4
        %v535 = vshll.u32 %v195, 16
        %v537 = vrot.slane %v535, 5
        %v538 = vsel %vm236, %v533, %v537
        %v539 = vshrl.u32 %v195, 16
        %v541 = vrot.slane %v539, 4
        %v542 = vor.u32 %v541, %v537
        %v543 = vrot.slane %v542, 4
        %v545 = vshll.u32 %v230, 16
        %v547 = vrot.slane %v545, 5
        %v548 = vsel %vm236, %v543, %v547
        %v550 = vshrl.u32 %v196, 16
        %v552 = vrot.slane %v550, 4
        %v553 = vshll.u32 %v196, 16
        %v555 = vrot.slane %v553, 5
        %v556 = vor.u32 %v552, %v555
        %v557 = vrot.slane %v556, 4
        %v559 = vshll.u32 %v197, 16
        %v561 = vrot.slane %v559, 5
        %v562 = vsel %vm236, %v557, %v561
        %v563 = vshrl.u32 %v197, 16
        %v565 = vrot.slane %v563, 4
        %v566 = vor.u32 %v565, %v561
        %v567 = vrot.slane %v566, 4
        %v569 = vshll.u32 %v231, 16
        %v571 = vrot.slane %v569, 5
        %v572 = vsel %vm236, %v567, %v571
        %v574 = vshrl.u32 %v198, 16
        %v576 = vrot.slane %v574, 4
        %v577 = vshll.u32 %v198, 16
        %v579 = vrot.slane %v577, 5
        %v580 = vor.u32 %v576, %v579
        %v581 = vrot.slane %v580, 4
        %v583 = vshll.u32 %v199, 16
        %v585 = vrot.slane %v583, 5
        %v586 = vsel %vm236, %v581, %v585
        %v587 = vshrl.u32 %v199, 16
        %v589 = vrot.slane %v587, 4
        %v590 = vor.u32 %v589, %v585
        %v591 = vrot.slane %v590, 4
        %v593 = vshll.u32 %v232, 16
        %v595 = vrot.slane %v593, 5
        %v596 = vsel %vm236, %v591, %v595
        %v598 = vshrl.u32 %v200, 16
        %v600 = vrot.slane %v598, 4
        %v601 = vshll.u32 %v200, 16
        %v603 = vrot.slane %v601, 5
        %v604 = vor.u32 %v600, %v603
        %v605 = vrot.slane %v604, 4
        %v607 = vshll.u32 %v201, 16
        %v609 = vrot.slane %v607, 5
        %v610 = vsel %vm236, %v605, %v609
        %v611 = vshrl.u32 %v201, 16
        %v613 = vrot.slane %v611, 4
        %v614 = vor.u32 %v613, %v609
        %v615 = vrot.slane %v614, 4
        %v617 = vshll.u32 %v233, 16
        %v619 = vrot.slane %v617, 5
        %v620 = vsel %vm236, %v615, %v619
        %s621 = scalar_lea.vmem %s1, 64
        %v622 = vld [vmem:[%s621] sm:$0xf]
        %v623 = vld [vmem:[%s621 + $0x4] sm:$0xf]
        %v624 = vld [vmem:[%s621 + $0x8] sm:$0xf]
        %v625 = vld [vmem:[%s621 + $0xc] sm:$0xf]
        %v626 = vld [vmem:[%s621 + $0x10] sm:$0xf]
        %v627 = vld [vmem:[%s621 + $0x14] sm:$0xf]
        %v628 = vld [vmem:[%s621 + $0x18] sm:$0xf]
        %v629 = vld [vmem:[%s621 + $0x1c] sm:$0xf]
        %v630 = vld [vmem:[%s621 + $0x20] sm:$0xf]
        %v631 = vld [vmem:[%s621 + $0x24] sm:$0xf]
        %v632 = vld [vmem:[%s621 + $0x28] sm:$0xf]
        %v633 = vld [vmem:[%s621 + $0x2c] sm:$0xf]
        %v634 = vld [vmem:[%s621 + $0x30] sm:$0xf]
        %v635 = vld [vmem:[%s621 + $0x34] sm:$0xf]
        %v636 = vld [vmem:[%s621 + $0x38] sm:$0xf]
        %v637 = vld [vmem:[%s621 + $0x3c] sm:$0xf]
        %v638 = vunpack.c.l.b16 %v250
        %v639 = vunpack.c.l.b16 %v260
        %v640 = vunpack.c.l.b16 %v274
        %v641 = vunpack.c.l.b16 %v284
        %v642 = vunpack.c.l.b16 %v298
        %v643 = vunpack.c.l.b16 %v308
        %v644 = vunpack.c.l.b16 %v322
        %v645 = vunpack.c.l.b16 %v332
        %v646 = vunpack.c.l.b16 %v346
        %v647 = vunpack.c.l.b16 %v356
        %v648 = vunpack.c.l.b16 %v370
        %v649 = vunpack.c.l.b16 %v380
        %v650 = vunpack.c.l.b16 %v394
        %v651 = vunpack.c.l.b16 %v404
        %v652 = vunpack.c.l.b16 %v418
        %v653 = vunpack.c.l.b16 %v428
        %v654 = vunpack.c.l.b16 %v442
        %v655 = vunpack.c.l.b16 %v452
        %v656 = vunpack.c.l.b16 %v466
        %v657 = vunpack.c.l.b16 %v476
        %v658 = vunpack.c.l.b16 %v490
        %v659 = vunpack.c.l.b16 %v500
        %v660 = vunpack.c.l.b16 %v514
        %v661 = vunpack.c.l.b16 %v524
        %v662 = vunpack.c.l.b16 %v538
        %v663 = vunpack.c.l.b16 %v548
        %v664 = vunpack.c.l.b16 %v562
        %v665 = vunpack.c.l.b16 %v572
        %v666 = vunpack.c.l.b16 %v586
        %v667 = vunpack.c.l.b16 %v596
        %v668 = vunpack.c.l.b16 %v610
        %v669 = vunpack.c.l.b16 %v620
        %v670 = vpack.c.b16 %v639, %v638
        %v671 = vpack.c.b16 %v641, %v640
        %v672 = vpack.c.b16 %v643, %v642
        %v673 = vpack.c.b16 %v645, %v644
        %v674 = vpack.c.b16 %v647, %v646
        %v675 = vpack.c.b16 %v649, %v648
        %v676 = vpack.c.b16 %v651, %v650
        %v677 = vpack.c.b16 %v653, %v652
        %v678 = vpack.c.b16 %v655, %v654
        %v679 = vpack.c.b16 %v657, %v656
        %v680 = vpack.c.b16 %v659, %v658
        %v681 = vpack.c.b16 %v661, %v660
        %v682 = vpack.c.b16 %v663, %v662
        %v683 = vpack.c.b16 %v665, %v664
        %v684 = vpack.c.b16 %v667, %v666
        %v685 = vpack.c.b16 %v669, %v668
        %v718 = vunpack.c.l.b16 %v622
        %v719 = vunpack.c.l.b16 %v623
        %v720 = vunpack.c.l.b16 %v624
        %v721 = vunpack.c.l.b16 %v625
        %v722 = vunpack.c.l.b16 %v626
        %v723 = vunpack.c.l.b16 %v627
        %v724 = vunpack.c.l.b16 %v628
        %v725 = vunpack.c.l.b16 %v629
        %v726 = vunpack.c.l.b16 %v630
        %v727 = vunpack.c.l.b16 %v631
        %v728 = vunpack.c.l.b16 %v632
        %v729 = vunpack.c.l.b16 %v633
        %v730 = vunpack.c.l.b16 %v634
        %v731 = vunpack.c.l.b16 %v635
        %v732 = vunpack.c.l.b16 %v636
        %v733 = vunpack.c.l.b16 %v637
        %v734 = vpack.c.b16 %v719, %v718
        %v735 = vpack.c.b16 %v721, %v720
        %v736 = vpack.c.b16 %v723, %v722
        %v737 = vpack.c.b16 %v725, %v724
        %v738 = vpack.c.b16 %v727, %v726
        %v739 = vpack.c.b16 %v729, %v728
        %v740 = vpack.c.b16 %v731, %v730
        %v741 = vpack.c.b16 %v733, %v732
        %750 = vmatprep.subr.bf16.mxu0 0
        %751 = vmatpush1.bf16.msra.mxu0 %v734
        %752 = vmatprep.subr.bf16.mxu0 0
        %753 = vmatpush1.bf16.msra.mxu0 %v735
        %754 = vmatprep.subr.bf16.mxu0 0
        %755 = vmatpush1.bf16.msra.mxu0 %v736
        %756 = vmatprep.subr.bf16.mxu0 0
        %757 = vmatpush1.bf16.msra.mxu0 %v737
        %758 = vmatprep.subr.bf16.mxu0 0
        %759 = vmatpush1.bf16.msra.mxu0 %v738
        %760 = vmatprep.subr.bf16.mxu0 0
        %761 = vmatpush1.bf16.msra.mxu0 %v739
        %762 = vmatprep.subr.bf16.mxu0 0
        %763 = vmatpush1.bf16.msra.mxu0 %v740
        %764 = vmatprep.subr.bf16.mxu0 0
        %765 = vmatpush1.bf16.msra.mxu0 %v741
        %766 = vmatprep.subr.bf16.mxu0 0
        %767 = vmatpush1.bf16.msra.mxu0 0
        %768 = vmatprep.subr.bf16.mxu0 0
        %769 = vmatpush1.bf16.msra.mxu0 0
        %770 = vmatprep.subr.bf16.mxu0 0
        %771 = vmatpush1.bf16.msra.mxu0 0
        %772 = vmatprep.subr.bf16.mxu0 0
        %773 = vmatpush1.bf16.msra.mxu0 0
        %774 = vmatprep.subr.bf16.mxu0 0
        %775 = vmatpush1.bf16.msra.mxu0 0
        %776 = vmatprep.subr.bf16.mxu0 0
        %777 = vmatpush1.bf16.msra.mxu0 0
        %778 = vmatprep.subr.bf16.mxu0 0
        %779 = vmatpush1.bf16.msra.mxu0 0
        %780 = vmatprep.subr.bf16.mxu0 0
        %781 = vmatpush1.bf16.msra.mxu0 0
        %782 = vmatprep.mubr.bf16.mxu0 0
        %783 = vmatmul.mubr.bf16.gmra.mrb[0].mxu0 %v670
        %v784 = vpop.f32.mrb[0].mxu0
        %v785 = vadd.f32 0.0, %v784
        %v786 = vpop.f32.mrb[0].mxu0
        %v787 = vpop.f32.mrb[0].mxu0
        %v788 = vadd.f32 0.0, %v787
        %v789 = vpop.f32.mrb[0].mxu0
        %790 = vmatprep.mubr.bf16.mxu0 0
        %791 = vmatmul.mubr.bf16.gmra.mrb[0].mxu0 %v671
        %v792 = vpop.f32.mrb[0].mxu0
        %v793 = vadd.f32 0.0, %v792
        %v794 = vpop.f32.mrb[0].mxu0
        %v795 = vpop.f32.mrb[0].mxu0
        %v796 = vadd.f32 0.0, %v795
        %v797 = vpop.f32.mrb[0].mxu0
        %798 = vmatprep.mubr.bf16.mxu0 0
        %799 = vmatmul.mubr.bf16.gmra.mrb[0].mxu0 %v672
        %v800 = vpop.f32.mrb[0].mxu0
        %v801 = vadd.f32 0.0, %v800
        %v802 = vpop.f32.mrb[0].mxu0
        %v803 = vpop.f32.mrb[0].mxu0
        %v804 = vadd.f32 0.0, %v803
        %v805 = vpop.f32.mrb[0].mxu0
        %806 = vmatprep.mubr.bf16.mxu0 0
        %807 = vmatmul.mubr.bf16.gmra.mrb[0].mxu0 %v673
        %v808 = vpop.f32.mrb[0].mxu0
        %v809 = vadd.f32 0.0, %v808
        %v810 = vpop.f32.mrb[0].mxu0
        %v811 = vpop.f32.mrb[0].mxu0
        %v812 = vadd.f32 0.0, %v811
        %v813 = vpop.f32.mrb[0].mxu0
        %814 = vmatprep.mubr.bf16.mxu0 0
        %815 = vmatmul.mubr.bf16.gmra.mrb[0].mxu0 %v674
        %v816 = vpop.f32.mrb[0].mxu0
        %v817 = vadd.f32 0.0, %v816
        %v818 = vpop.f32.mrb[0].mxu0
        %v819 = vpop.f32.mrb[0].mxu0
        %v820 = vadd.f32 0.0, %v819
        %v821 = vpop.f32.mrb[0].mxu0
        %822 = vmatprep.mubr.bf16.mxu0 0
        %823 = vmatmul.mubr.bf16.gmra.mrb[0].mxu0 %v675
        %v824 = vpop.f32.mrb[0].mxu0
        %v825 = vadd.f32 0.0, %v824
        %v826 = vpop.f32.mrb[0].mxu0
        %v827 = vpop.f32.mrb[0].mxu0
        %v828 = vadd.f32 0.0, %v827
        %v829 = vpop.f32.mrb[0].mxu0
        %830 = vmatprep.mubr.bf16.mxu0 0
        %831 = vmatmul.mubr.bf16.gmra.mrb[0].mxu0 %v676
        %v832 = vpop.f32.mrb[0].mxu0
        %v833 = vadd.f32 0.0, %v832
        %v834 = vpop.f32.mrb[0].mxu0
        %v835 = vpop.f32.mrb[0].mxu0
        %v836 = vadd.f32 0.0, %v835
        %v837 = vpop.f32.mrb[0].mxu0
        %838 = vmatprep.mubr.bf16.mxu0 0
        %839 = vmatmul.mubr.bf16.gmra.mrb[0].mxu0 %v677
        %v840 = vpop.f32.mrb[0].mxu0
        %v841 = vadd.f32 0.0, %v840
        %v842 = vpop.f32.mrb[0].mxu0
        %v843 = vpop.f32.mrb[0].mxu0
        %v844 = vadd.f32 0.0, %v843
        %v845 = vpop.f32.mrb[0].mxu0
        %846 = vmatprep.mubr.bf16.mxu0 0
        %847 = vmatmul.mubr.bf16.gmra.mrb[0].mxu0 %v678
        %v848 = vpop.f32.mrb[0].mxu0
        %v849 = vadd.f32 0.0, %v848
        %v850 = vpop.f32.mrb[0].mxu0
        %v851 = vpop.f32.mrb[0].mxu0
        %v852 = vadd.f32 0.0, %v851
        %v853 = vpop.f32.mrb[0].mxu0
        %854 = vmatprep.mubr.bf16.mxu0 0
        %855 = vmatmul.mubr.bf16.gmra.mrb[0].mxu0 %v679
        %v856 = vpop.f32.mrb[0].mxu0
        %v857 = vadd.f32 0.0, %v856
        %v858 = vpop.f32.mrb[0].mxu0
        %v859 = vpop.f32.mrb[0].mxu0
        %v860 = vadd.f32 0.0, %v859
        %v861 = vpop.f32.mrb[0].mxu0
        %862 = vmatprep.mubr.bf16.mxu0 0
        %863 = vmatmul.mubr.bf16.gmra.mrb[0].mxu0 %v680
        %v864 = vpop.f32.mrb[0].mxu0
        %v865 = vadd.f32 0.0, %v864
        %v866 = vpop.f32.mrb[0].mxu0
        %v867 = vpop.f32.mrb[0].mxu0
        %v868 = vadd.f32 0.0, %v867
        %v869 = vpop.f32.mrb[0].mxu0
        %870 = vmatprep.mubr.bf16.mxu0 0
        %871 = vmatmul.mubr.bf16.gmra.mrb[0].mxu0 %v681
        %v872 = vpop.f32.mrb[0].mxu0
        %v873 = vadd.f32 0.0, %v872
        %v874 = vpop.f32.mrb[0].mxu0
        %v875 = vpop.f32.mrb[0].mxu0
        %v876 = vadd.f32 0.0, %v875
        %v877 = vpop.f32.mrb[0].mxu0
        %878 = vmatprep.mubr.bf16.mxu0 0
        %879 = vmatmul.mubr.bf16.gmra.mrb[0].mxu0 %v682
        %v880 = vpop.f32.mrb[0].mxu0
        %v881 = vadd.f32 0.0, %v880
        %v882 = vpop.f32.mrb[0].mxu0
        %v883 = vpop.f32.mrb[0].mxu0
        %v884 = vadd.f32 0.0, %v883
        %v885 = vpop.f32.mrb[0].mxu0
        %886 = vmatprep.mubr.bf16.mxu0 0
        %887 = vmatmul.mubr.bf16.gmra.mrb[0].mxu0 %v683
        %v888 = vpop.f32.mrb[0].mxu0
        %v889 = vadd.f32 0.0, %v888
        %v890 = vpop.f32.mrb[0].mxu0
        %v891 = vpop.f32.mrb[0].mxu0
        %v892 = vadd.f32 0.0, %v891
        %v893 = vpop.f32.mrb[0].mxu0
        %894 = vmatprep.mubr.bf16.mxu0 0
        %895 = vmatmul.mubr.bf16.gmra.mrb[0].mxu0 %v684
        %v896 = vpop.f32.mrb[0].mxu0
        %v897 = vadd.f32 0.0, %v896
        %v898 = vpop.f32.mrb[0].mxu0
        %v899 = vpop.f32.mrb[0].mxu0
        %v900 = vadd.f32 0.0, %v899
        %v901 = vpop.f32.mrb[0].mxu0
        %902 = vmatprep.mubr.bf16.mxu0 0
        %903 = vmatmul.mubr.bf16.gmra.mrb[0].mxu0 %v685
        %v904 = vpop.f32.mrb[0].mxu0
        %v905 = vadd.f32 0.0, %v904
        %v906 = vpop.f32.mrb[0].mxu0
        %v907 = vpop.f32.mrb[0].mxu0
        %v908 = vadd.f32 0.0, %v907
        %v909 = vpop.f32.mrb[0].mxu0
        %910 = vdwg.mxu0
        %v943 = vunpack.c.l.b16 %v170
        %v944 = vunpack.c.l.b16 %v171
        %v945 = vunpack.c.l.b16 %v172
        %v946 = vunpack.c.l.b16 %v173
        %v947 = vunpack.c.l.b16 %v174
        %v948 = vunpack.c.l.b16 %v175
        %v949 = vunpack.c.l.b16 %v176
        %v950 = vunpack.c.l.b16 %v177
        %v951 = vunpack.c.l.b16 %v178
        %v952 = vunpack.c.l.b16 %v179
        %v953 = vunpack.c.l.b16 %v180
        %v954 = vunpack.c.l.b16 %v181
        %v955 = vunpack.c.l.b16 %v182
        %v956 = vunpack.c.l.b16 %v183
        %v957 = vunpack.c.l.b16 %v184
        %v958 = vunpack.c.l.b16 %v185
        %v959 = vunpack.c.l.b16 %v186
        %v960 = vunpack.c.l.b16 %v187
        %v961 = vunpack.c.l.b16 %v188
        %v962 = vunpack.c.l.b16 %v189
        %v963 = vunpack.c.l.b16 %v190
        %v964 = vunpack.c.l.b16 %v191
        %v965 = vunpack.c.l.b16 %v192
        %v966 = vunpack.c.l.b16 %v193
        %v967 = vunpack.c.l.b16 %v194
        %v968 = vunpack.c.l.b16 %v195
        %v969 = vunpack.c.l.b16 %v196
        %v970 = vunpack.c.l.b16 %v197
        %v971 = vunpack.c.l.b16 %v198
        %v972 = vunpack.c.l.b16 %v199
        %v973 = vunpack.c.l.b16 %v200
        %v974 = vunpack.c.l.b16 %v201
        %v975 = vpack.c.b16 %v944, %v943
        %v976 = vpack.c.b16 %v946, %v945
        %v977 = vpack.c.b16 %v948, %v947
        %v978 = vpack.c.b16 %v950, %v949
        %v979 = vpack.c.b16 %v952, %v951
        %v980 = vpack.c.b16 %v954, %v953
        %v981 = vpack.c.b16 %v956, %v955
        %v982 = vpack.c.b16 %v958, %v957
        %v983 = vpack.c.b16 %v960, %v959
        %v984 = vpack.c.b16 %v962, %v961
        %v985 = vpack.c.b16 %v964, %v963
        %v986 = vpack.c.b16 %v966, %v965
        %v987 = vpack.c.b16 %v968, %v967
        %v988 = vpack.c.b16 %v970, %v969
        %v989 = vpack.c.b16 %v972, %v971
        %v990 = vpack.c.b16 %v974, %v973
        %v1023 = vunpack.c.l.b16 %v202
        %v1024 = vunpack.c.l.b16 %v203
        %v1025 = vunpack.c.l.b16 %v204
        %v1026 = vunpack.c.l.b16 %v205
        %v1027 = vunpack.c.l.b16 %v206
        %v1028 = vunpack.c.l.b16 %v207
        %v1029 = vunpack.c.l.b16 %v208
        %v1030 = vunpack.c.l.b16 %v209
        %v1031 = vunpack.c.l.b16 %v210
        %v1032 = vunpack.c.l.b16 %v211
        %v1033 = vunpack.c.l.b16 %v212
        %v1034 = vunpack.c.l.b16 %v213
        %v1035 = vunpack.c.l.b16 %v214
        %v1036 = vunpack.c.l.b16 %v215
        %v1037 = vunpack.c.l.b16 %v216
        %v1038 = vunpack.c.l.b16 %v217
        %v1039 = vpack.c.b16 %v1024, %v1023
        %v1040 = vpack.c.b16 %v1026, %v1025
        %v1041 = vpack.c.b16 %v1028, %v1027
        %v1042 = vpack.c.b16 %v1030, %v1029
        %v1043 = vpack.c.b16 %v1032, %v1031
        %v1044 = vpack.c.b16 %v1034, %v1033
        %v1045 = vpack.c.b16 %v1036, %v1035
        %v1046 = vpack.c.b16 %v1038, %v1037
        %1055 = vmatprep.subr.bf16.mxu0 0
        %1056 = vmatpush1.bf16.msra.mxu0 %v1039
        %1057 = vmatprep.subr.bf16.mxu0 0
        %1058 = vmatpush1.bf16.msra.mxu0 %v1040
        %1059 = vmatprep.subr.bf16.mxu0 0
        %1060 = vmatpush1.bf16.msra.mxu0 %v1041
        %1061 = vmatprep.subr.bf16.mxu0 0
        %1062 = vmatpush1.bf16.msra.mxu0 %v1042
        %1063 = vmatprep.subr.bf16.mxu0 0
        %1064 = vmatpush1.bf16.msra.mxu0 %v1043
        %1065 = vmatprep.subr.bf16.mxu0 0
        %1066 = vmatpush1.bf16.msra.mxu0 %v1044
        %1067 = vmatprep.subr.bf16.mxu0 0
        %1068 = vmatpush1.bf16.msra.mxu0 %v1045
        %1069 = vmatprep.subr.bf16.mxu0 0
        %1070 = vmatpush1.bf16.msra.mxu0 %v1046
        %1071 = vmatprep.subr.bf16.mxu0 0
        %1072 = vmatpush1.bf16.msra.mxu0 0
        %1073 = vmatprep.subr.bf16.mxu0 0
        %1074 = vmatpush1.bf16.msra.mxu0 0
        %1075 = vmatprep.subr.bf16.mxu0 0
        %1076 = vmatpush1.bf16.msra.mxu0 0
        %1077 = vmatprep.subr.bf16.mxu0 0
        %1078 = vmatpush1.bf16.msra.mxu0 0
        %1079 = vmatprep.subr.bf16.mxu0 0
        %1080 = vmatpush1.bf16.msra.mxu0 0
        %1081 = vmatprep.subr.bf16.mxu0 0
        %1082 = vmatpush1.bf16.msra.mxu0 0
        %1083 = vmatprep.subr.bf16.mxu0 0
        %1084 = vmatpush1.bf16.msra.mxu0 0
        %1085 = vmatprep.subr.bf16.mxu0 0
        %1086 = vmatpush1.bf16.msra.mxu0 0
        %1087 = vmatprep.mubr.bf16.mxu0 0
        %1088 = vmatmul.mubr.bf16.gmra.mrb[0].mxu0 %v975
        %v1089 = vpop.f32.mrb[0].mxu0
        %v1090 = vadd.f32 %v785, %v1089
        %v1091 = vpop.f32.mrb[0].mxu0
        %v1092 = vpop.f32.mrb[0].mxu0
        %v1093 = vadd.f32 %v788, %v1092
        %v1094 = vpop.f32.mrb[0].mxu0
        %1095 = vmatprep.mubr.bf16.mxu0 0
        %1096 = vmatmul.mubr.bf16.gmra.mrb[0].mxu0 %v976
        %v1097 = vpop.f32.mrb[0].mxu0
        %v1098 = vadd.f32 %v793, %v1097
        %v1099 = vpop.f32.mrb[0].mxu0
        %v1100 = vpop.f32.mrb[0].mxu0
        %v1101 = vadd.f32 %v796, %v1100
        %v1102 = vpop.f32.mrb[0].mxu0
        %1103 = vmatprep.mubr.bf16.mxu0 0
        %1104 = vmatmul.mubr.bf16.gmra.mrb[0].mxu0 %v977
        %v1105 = vpop.f32.mrb[0].mxu0
        %v1106 = vadd.f32 %v801, %v1105
        %v1107 = vpop.f32.mrb[0].mxu0
        %v1108 = vpop.f32.mrb[0].mxu0
        %v1109 = vadd.f32 %v804, %v1108
        %v1110 = vpop.f32.mrb[0].mxu0
        %1111 = vmatprep.mubr.bf16.mxu0 0
        %1112 = vmatmul.mubr.bf16.gmra.mrb[0].mxu0 %v978
        %v1113 = vpop.f32.mrb[0].mxu0
        %v1114 = vadd.f32 %v809, %v1113
        %v1115 = vpop.f32.mrb[0].mxu0
        %v1116 = vpop.f32.mrb[0].mxu0
        %v1117 = vadd.f32 %v812, %v1116
        %v1118 = vpop.f32.mrb[0].mxu0
        %1119 = vmatprep.mubr.bf16.mxu0 0
        %1120 = vmatmul.mubr.bf16.gmra.mrb[0].mxu0 %v979
        %v1121 = vpop.f32.mrb[0].mxu0
        %v1122 = vadd.f32 %v817, %v1121
        %v1123 = vpop.f32.mrb[0].mxu0
        %v1124 = vpop.f32.mrb[0].mxu0
        %v1125 = vadd.f32 %v820, %v1124
        %v1126 = vpop.f32.mrb[0].mxu0
        %1127 = vmatprep.mubr.bf16.mxu0 0
        %1128 = vmatmul.mubr.bf16.gmra.mrb[0].mxu0 %v980
        %v1129 = vpop.f32.mrb[0].mxu0
        %v1130 = vadd.f32 %v825, %v1129
        %v1131 = vpop.f32.mrb[0].mxu0
        %v1132 = vpop.f32.mrb[0].mxu0
        %v1133 = vadd.f32 %v828, %v1132
        %v1134 = vpop.f32.mrb[0].mxu0
        %1135 = vmatprep.mubr.bf16.mxu0 0
        %1136 = vmatmul.mubr.bf16.gmra.mrb[0].mxu0 %v981
        %v1137 = vpop.f32.mrb[0].mxu0
        %v1138 = vadd.f32 %v833, %v1137
        %v1139 = vpop.f32.mrb[0].mxu0
        %v1140 = vpop.f32.mrb[0].mxu0
        %v1141 = vadd.f32 %v836, %v1140
        %v1142 = vpop.f32.mrb[0].mxu0
        %1143 = vmatprep.mubr.bf16.mxu0 0
        %1144 = vmatmul.mubr.bf16.gmra.mrb[0].mxu0 %v982
        %v1145 = vpop.f32.mrb[0].mxu0
        %v1146 = vadd.f32 %v841, %v1145
        %v1147 = vpop.f32.mrb[0].mxu0
        %v1148 = vpop.f32.mrb[0].mxu0
        %v1149 = vadd.f32 %v844, %v1148
        %v1150 = vpop.f32.mrb[0].mxu0
        %1151 = vmatprep.mubr.bf16.mxu0 0
        %1152 = vmatmul.mubr.bf16.gmra.mrb[0].mxu0 %v983
        %v1153 = vpop.f32.mrb[0].mxu0
        %v1154 = vadd.f32 %v849, %v1153
        %v1155 = vpop.f32.mrb[0].mxu0
        %v1156 = vpop.f32.mrb[0].mxu0
        %v1157 = vadd.f32 %v852, %v1156
        %v1158 = vpop.f32.mrb[0].mxu0
        %1159 = vmatprep.mubr.bf16.mxu0 0
        %1160 = vmatmul.mubr.bf16.gmra.mrb[0].mxu0 %v984
        %v1161 = vpop.f32.mrb[0].mxu0
        %v1162 = vadd.f32 %v857, %v1161
        %v1163 = vpop.f32.mrb[0].mxu0
        %v1164 = vpop.f32.mrb[0].mxu0
        %v1165 = vadd.f32 %v860, %v1164
        %v1166 = vpop.f32.mrb[0].mxu0
        %1167 = vmatprep.mubr.bf16.mxu0 0
        %1168 = vmatmul.mubr.bf16.gmra.mrb[0].mxu0 %v985
        %v1169 = vpop.f32.mrb[0].mxu0
        %v1170 = vadd.f32 %v865, %v1169
        %v1171 = vpop.f32.mrb[0].mxu0
        %v1172 = vpop.f32.mrb[0].mxu0
        %v1173 = vadd.f32 %v868, %v1172
        %v1174 = vpop.f32.mrb[0].mxu0
        %1175 = vmatprep.mubr.bf16.mxu0 0
        %1176 = vmatmul.mubr.bf16.gmra.mrb[0].mxu0 %v986
        %v1177 = vpop.f32.mrb[0].mxu0
        %v1178 = vadd.f32 %v873, %v1177
        %v1179 = vpop.f32.mrb[0].mxu0
        %v1180 = vpop.f32.mrb[0].mxu0
        %v1181 = vadd.f32 %v876, %v1180
        %v1182 = vpop.f32.mrb[0].mxu0
        %1183 = vmatprep.mubr.bf16.mxu0 0
        %1184 = vmatmul.mubr.bf16.gmra.mrb[0].mxu0 %v987
        %v1185 = vpop.f32.mrb[0].mxu0
        %v1186 = vadd.f32 %v881, %v1185
        %v1187 = vpop.f32.mrb[0].mxu0
        %v1188 = vpop.f32.mrb[0].mxu0
        %v1189 = vadd.f32 %v884, %v1188
        %v1190 = vpop.f32.mrb[0].mxu0
        %1191 = vmatprep.mubr.bf16.mxu0 0
        %1192 = vmatmul.mubr.bf16.gmra.mrb[0].mxu0 %v988
        %v1193 = vpop.f32.mrb[0].mxu0
        %v1194 = vadd.f32 %v889, %v1193
        %v1195 = vpop.f32.mrb[0].mxu0
        %v1196 = vpop.f32.mrb[0].mxu0
        %v1197 = vadd.f32 %v892, %v1196
        %v1198 = vpop.f32.mrb[0].mxu0
        %1199 = vmatprep.mubr.bf16.mxu0 0
        %1200 = vmatmul.mubr.bf16.gmra.mrb[0].mxu0 %v989
        %v1201 = vpop.f32.mrb[0].mxu0
        %v1202 = vadd.f32 %v897, %v1201
        %v1203 = vpop.f32.mrb[0].mxu0
        %v1204 = vpop.f32.mrb[0].mxu0
        %v1205 = vadd.f32 %v900, %v1204
        %v1206 = vpop.f32.mrb[0].mxu0
        %1207 = vmatprep.mubr.bf16.mxu0 0
        %1208 = vmatmul.mubr.bf16.gmra.mrb[0].mxu0 %v990
        %v1209 = vpop.f32.mrb[0].mxu0
        %v1210 = vadd.f32 %v905, %v1209
        %v1211 = vpop.f32.mrb[0].mxu0
        %v1212 = vpop.f32.mrb[0].mxu0
        %v1213 = vadd.f32 %v908, %v1212
        %v1214 = vpop.f32.mrb[0].mxu0
        %1215 = vdwg.mxu0
        %v1216 = vld [vmem:[%s168] sm:$0xe]
        %v1217 = vld [vmem:[%s168 + $0xc] sm:$0xe]
        %v1218 = vld [vmem:[%s168 + $0x18] sm:$0xe]
        %v1219 = vld [vmem:[%s168 + $0x24] sm:$0xe]
        %v1220 = vld [vmem:[%s168 + $0x30] sm:$0xe]
        %v1221 = vld [vmem:[%s168 + $0x3c] sm:$0xe]
        %v1222 = vld [vmem:[%s168 + $0x48] sm:$0xe]
        %v1223 = vld [vmem:[%s168 + $0x54] sm:$0xe]
        %v1224 = vld [vmem:[%s168 + $0x60] sm:$0xe]
        %v1225 = vld [vmem:[%s168 + $0x6c] sm:$0xe]
        %v1226 = vld [vmem:[%s168 + $0x78] sm:$0xe]
        %v1227 = vld [vmem:[%s168 + $0x84] sm:$0xe]
        %v1228 = vld [vmem:[%s168 + $0x90] sm:$0xe]
        %v1229 = vld [vmem:[%s168 + $0x9c] sm:$0xe]
        %v1230 = vld [vmem:[%s168 + $0xa8] sm:$0xe]
        %v1231 = vld [vmem:[%s168 + $0xb4] sm:$0xe]
        %vm1264 = vcmask 1042432
        %vm1265 = vcmask 1046532
        %vm1266 = vmor %vm1264, %vm1265
        %v1267 = vrot.slane %v1216, 5
        %v1268 = vrot.slane %v1267, 4
        %v1269 = vrot.slane %v171, 5
        %v1270 = vsel %vm1266, %v1268, %v1269
        %v1271 = vrot.slane %v1269, 4
        %v1272 = vrot.slane %v218, 5
        %v1273 = vsel %vm1266, %v1271, %v1272
        %v1274 = vrot.slane %v1217, 5
        %v1275 = vrot.slane %v1274, 4
        %v1276 = vrot.slane %v173, 5
        %v1277 = vsel %vm1266, %v1275, %v1276
        %v1278 = vrot.slane %v1276, 4
        %v1279 = vrot.slane %v219, 5
        %v1280 = vsel %vm1266, %v1278, %v1279
        %v1281 = vrot.slane %v1218, 5
        %v1282 = vrot.slane %v1281, 4
        %v1283 = vrot.slane %v175, 5
        %v1284 = vsel %vm1266, %v1282, %v1283
        %v1285 = vrot.slane %v1283, 4
        %v1286 = vrot.slane %v220, 5
        %v1287 = vsel %vm1266, %v1285, %v1286
        %v1288 = vrot.slane %v1219, 5
        %v1289 = vrot.slane %v1288, 4
        %v1290 = vrot.slane %v177, 5
        %v1291 = vsel %vm1266, %v1289, %v1290
        %v1292 = vrot.slane %v1290, 4
        %v1293 = vrot.slane %v221, 5
        %v1294 = vsel %vm1266, %v1292, %v1293
        %v1295 = vrot.slane %v1220, 5
        %v1296 = vrot.slane %v1295, 4
        %v1297 = vrot.slane %v179, 5
        %v1298 = vsel %vm1266, %v1296, %v1297
        %v1299 = vrot.slane %v1297, 4
        %v1300 = vrot.slane %v222, 5
        %v1301 = vsel %vm1266, %v1299, %v1300
        %v1302 = vrot.slane %v1221, 5
        %v1303 = vrot.slane %v1302, 4
        %v1304 = vrot.slane %v181, 5
        %v1305 = vsel %vm1266, %v1303, %v1304
        %v1306 = vrot.slane %v1304, 4
        %v1307 = vrot.slane %v223, 5
        %v1308 = vsel %vm1266, %v1306, %v1307
        %v1309 = vrot.slane %v1222, 5
        %v1310 = vrot.slane %v1309, 4
        %v1311 = vrot.slane %v183, 5
        %v1312 = vsel %vm1266, %v1310, %v1311
        %v1313 = vrot.slane %v1311, 4
        %v1314 = vrot.slane %v224, 5
        %v1315 = vsel %vm1266, %v1313, %v1314
        %v1316 = vrot.slane %v1223, 5
        %v1317 = vrot.slane %v1316, 4
        %v1318 = vrot.slane %v185, 5
        %v1319 = vsel %vm1266, %v1317, %v1318
        %v1320 = vrot.slane %v1318, 4
        %v1321 = vrot.slane %v225, 5
        %v1322 = vsel %vm1266, %v1320, %v1321
        %v1323 = vrot.slane %v1224, 5
        %v1324 = vrot.slane %v1323, 4
        %v1325 = vrot.slane %v187, 5
        %v1326 = vsel %vm1266, %v1324, %v1325
        %v1327 = vrot.slane %v1325, 4
        %v1328 = vrot.slane %v226, 5
        %v1329 = vsel %vm1266, %v1327, %v1328
        %v1330 = vrot.slane %v1225, 5
        %v1331 = vrot.slane %v1330, 4
        %v1332 = vrot.slane %v189, 5
        %v1333 = vsel %vm1266, %v1331, %v1332
        %v1334 = vrot.slane %v1332, 4
        %v1335 = vrot.slane %v227, 5
        %v1336 = vsel %vm1266, %v1334, %v1335
        %v1337 = vrot.slane %v1226, 5
        %v1338 = vrot.slane %v1337, 4
        %v1339 = vrot.slane %v191, 5
        %v1340 = vsel %vm1266, %v1338, %v1339
        %v1341 = vrot.slane %v1339, 4
        %v1342 = vrot.slane %v228, 5
        %v1343 = vsel %vm1266, %v1341, %v1342
        %v1344 = vrot.slane %v1227, 5
        %v1345 = vrot.slane %v1344, 4
        %v1346 = vrot.slane %v193, 5
        %v1347 = vsel %vm1266, %v1345, %v1346
        %v1348 = vrot.slane %v1346, 4
        %v1349 = vrot.slane %v229, 5
        %v1350 = vsel %vm1266, %v1348, %v1349
        %v1351 = vrot.slane %v1228, 5
        %v1352 = vrot.slane %v1351, 4
        %v1353 = vrot.slane %v195, 5
        %v1354 = vsel %vm1266, %v1352, %v1353
        %v1355 = vrot.slane %v1353, 4
        %v1356 = vrot.slane %v230, 5
        %v1357 = vsel %vm1266, %v1355, %v1356
        %v1358 = vrot.slane %v1229, 5
        %v1359 = vrot.slane %v1358, 4
        %v1360 = vrot.slane %v197, 5
        %v1361 = vsel %vm1266, %v1359, %v1360
        %v1362 = vrot.slane %v1360, 4
        %v1363 = vrot.slane %v231, 5
        %v1364 = vsel %vm1266, %v1362, %v1363
        %v1365 = vrot.slane %v1230, 5
        %v1366 = vrot.slane %v1365, 4
        %v1367 = vrot.slane %v199, 5
        %v1368 = vsel %vm1266, %v1366, %v1367
        %v1369 = vrot.slane %v1367, 4
        %v1370 = vrot.slane %v232, 5
        %v1371 = vsel %vm1266, %v1369, %v1370
        %v1372 = vrot.slane %v1231, 5
        %v1373 = vrot.slane %v1372, 4
        %v1374 = vrot.slane %v201, 5
        %v1375 = vsel %vm1266, %v1373, %v1374
        %v1376 = vrot.slane %v1374, 4
        %v1377 = vrot.slane %v233, 5
        %v1378 = vsel %vm1266, %v1376, %v1377
        %s1379 = scalar_lea.vmem %s1, 128
        %v1380 = vld [vmem:[%s1379] sm:$0xf]
        %v1381 = vld [vmem:[%s1379 + $0x4] sm:$0xf]
        %v1382 = vld [vmem:[%s1379 + $0x8] sm:$0xf]
        %v1383 = vld [vmem:[%s1379 + $0xc] sm:$0xf]
        %v1384 = vld [vmem:[%s1379 + $0x10] sm:$0xf]
        %v1385 = vld [vmem:[%s1379 + $0x14] sm:$0xf]
        %v1386 = vld [vmem:[%s1379 + $0x18] sm:$0xf]
        %v1387 = vld [vmem:[%s1379 + $0x1c] sm:$0xf]
        %v1388 = vld [vmem:[%s1379 + $0x20] sm:$0xf]
        %v1389 = vld [vmem:[%s1379 + $0x24] sm:$0xf]
        %v1390 = vld [vmem:[%s1379 + $0x28] sm:$0xf]
        %v1391 = vld [vmem:[%s1379 + $0x2c] sm:$0xf]
        %v1392 = vld [vmem:[%s1379 + $0x30] sm:$0xf]
        %v1393 = vld [vmem:[%s1379 + $0x34] sm:$0xf]
        %v1394 = vld [vmem:[%s1379 + $0x38] sm:$0xf]
        %v1395 = vld [vmem:[%s1379 + $0x3c] sm:$0xf]
        %v1396 = vunpack.c.l.b16 %v1270
        %v1397 = vunpack.c.l.b16 %v1273
        %v1398 = vunpack.c.l.b16 %v1277
        %v1399 = vunpack.c.l.b16 %v1280
        %v1400 = vunpack.c.l.b16 %v1284
        %v1401 = vunpack.c.l.b16 %v1287
        %v1402 = vunpack.c.l.b16 %v1291
        %v1403 = vunpack.c.l.b16 %v1294
        %v1404 = vunpack.c.l.b16 %v1298
        %v1405 = vunpack.c.l.b16 %v1301
        %v1406 = vunpack.c.l.b16 %v1305
        %v1407 = vunpack.c.l.b16 %v1308
        %v1408 = vunpack.c.l.b16 %v1312
        %v1409 = vunpack.c.l.b16 %v1315
        %v1410 = vunpack.c.l.b16 %v1319
        %v1411 = vunpack.c.l.b16 %v1322
        %v1412 = vunpack.c.l.b16 %v1326
        %v1413 = vunpack.c.l.b16 %v1329
        %v1414 = vunpack.c.l.b16 %v1333
        %v1415 = vunpack.c.l.b16 %v1336
        %v1416 = vunpack.c.l.b16 %v1340
        %v1417 = vunpack.c.l.b16 %v1343
        %v1418 = vunpack.c.l.b16 %v1347
        %v1419 = vunpack.c.l.b16 %v1350
        %v1420 = vunpack.c.l.b16 %v1354
        %v1421 = vunpack.c.l.b16 %v1357
        %v1422 = vunpack.c.l.b16 %v1361
        %v1423 = vunpack.c.l.b16 %v1364
        %v1424 = vunpack.c.l.b16 %v1368
        %v1425 = vunpack.c.l.b16 %v1371
        %v1426 = vunpack.c.l.b16 %v1375
        %v1427 = vunpack.c.l.b16 %v1378
        %v1428 = vpack.c.b16 %v1397, %v1396
        %v1429 = vpack.c.b16 %v1399, %v1398
        %v1430 = vpack.c.b16 %v1401, %v1400
        %v1431 = vpack.c.b16 %v1403, %v1402
        %v1432 = vpack.c.b16 %v1405, %v1404
        %v1433 = vpack.c.b16 %v1407, %v1406
        %v1434 = vpack.c.b16 %v1409, %v1408
        %v1435 = vpack.c.b16 %v1411, %v1410
        %v1436 = vpack.c.b16 %v1413, %v1412
        %v1437 = vpack.c.b16 %v1415, %v1414
        %v1438 = vpack.c.b16 %v1417, %v1416
        %v1439 = vpack.c.b16 %v1419, %v1418
        %v1440 = vpack.c.b16 %v1421, %v1420
        %v1441 = vpack.c.b16 %v1423, %v1422
        %v1442 = vpack.c.b16 %v1425, %v1424
        %v1443 = vpack.c.b16 %v1427, %v1426
        %v1476 = vunpack.c.l.b16 %v1380
        %v1477 = vunpack.c.l.b16 %v1381
        %v1478 = vunpack.c.l.b16 %v1382
        %v1479 = vunpack.c.l.b16 %v1383
        %v1480 = vunpack.c.l.b16 %v1384
        %v1481 = vunpack.c.l.b16 %v1385
        %v1482 = vunpack.c.l.b16 %v1386
        %v1483 = vunpack.c.l.b16 %v1387
        %v1484 = vunpack.c.l.b16 %v1388
        %v1485 = vunpack.c.l.b16 %v1389
        %v1486 = vunpack.c.l.b16 %v1390
        %v1487 = vunpack.c.l.b16 %v1391
        %v1488 = vunpack.c.l.b16 %v1392
        %v1489 = vunpack.c.l.b16 %v1393
        %v1490 = vunpack.c.l.b16 %v1394
        %v1491 = vunpack.c.l.b16 %v1395
        %v1492 = vpack.c.b16 %v1477, %v1476
        %v1493 = vpack.c.b16 %v1479, %v1478
        %v1494 = vpack.c.b16 %v1481, %v1480
        %v1495 = vpack.c.b16 %v1483, %v1482
        %v1496 = vpack.c.b16 %v1485, %v1484
        %v1497 = vpack.c.b16 %v1487, %v1486
        %v1498 = vpack.c.b16 %v1489, %v1488
        %v1499 = vpack.c.b16 %v1491, %v1490
        %1508 = vmatprep.subr.bf16.mxu0 0
        %1509 = vmatpush1.bf16.msra.mxu0 %v1492
        %1510 = vmatprep.subr.bf16.mxu0 0
        %1511 = vmatpush1.bf16.msra.mxu0 %v1493
        %1512 = vmatprep.subr.bf16.mxu0 0
        %1513 = vmatpush1.bf16.msra.mxu0 %v1494
        %1514 = vmatprep.subr.bf16.mxu0 0
        %1515 = vmatpush1.bf16.msra.mxu0 %v1495
        %1516 = vmatprep.subr.bf16.mxu0 0
        %1517 = vmatpush1.bf16.msra.mxu0 %v1496
        %1518 = vmatprep.subr.bf16.mxu0 0
        %1519 = vmatpush1.bf16.msra.mxu0 %v1497
        %1520 = vmatprep.subr.bf16.mxu0 0
        %1521 = vmatpush1.bf16.msra.mxu0 %v1498
        %1522 = vmatprep.subr.bf16.mxu0 0
        %1523 = vmatpush1.bf16.msra.mxu0 %v1499
        %1524 = vmatprep.subr.bf16.mxu0 0
        %1525 = vmatpush1.bf16.msra.mxu0 0
        %1526 = vmatprep.subr.bf16.mxu0 0
        %1527 = vmatpush1.bf16.msra.mxu0 0
        %1528 = vmatprep.subr.bf16.mxu0 0
        %1529 = vmatpush1.bf16.msra.mxu0 0
        %1530 = vmatprep.subr.bf16.mxu0 0
        %1531 = vmatpush1.bf16.msra.mxu0 0
        %1532 = vmatprep.subr.bf16.mxu0 0
        %1533 = vmatpush1.bf16.msra.mxu0 0
        %1534 = vmatprep.subr.bf16.mxu0 0
        %1535 = vmatpush1.bf16.msra.mxu0 0
        %1536 = vmatprep.subr.bf16.mxu0 0
        %1537 = vmatpush1.bf16.msra.mxu0 0
        %1538 = vmatprep.subr.bf16.mxu0 0
        %1539 = vmatpush1.bf16.msra.mxu0 0
        %1540 = vmatprep.mubr.bf16.mxu0 0
        %1541 = vmatmul.mubr.bf16.gmra.mrb[0].mxu0 %v1428
        %v1542 = vpop.f32.mrb[0].mxu0
        %v1543 = vadd.f32 0.0, %v1542
        %v1544 = vpop.f32.mrb[0].mxu0
        %v1545 = vpop.f32.mrb[0].mxu0
        %v1546 = vadd.f32 0.0, %v1545
        %v1547 = vpop.f32.mrb[0].mxu0
        %1548 = vmatprep.mubr.bf16.mxu0 0
        %1549 = vmatmul.mubr.bf16.gmra.mrb[0].mxu0 %v1429
        %v1550 = vpop.f32.mrb[0].mxu0
        %v1551 = vadd.f32 0.0, %v1550
        %v1552 = vpop.f32.mrb[0].mxu0
        %v1553 = vpop.f32.mrb[0].mxu0
        %v1554 = vadd.f32 0.0, %v1553
        %v1555 = vpop.f32.mrb[0].mxu0
        %1556 = vmatprep.mubr.bf16.mxu0 0
        %1557 = vmatmul.mubr.bf16.gmra.mrb[0].mxu0 %v1430
        %v1558 = vpop.f32.mrb[0].mxu0
        %v1559 = vadd.f32 0.0, %v1558
        %v1560 = vpop.f32.mrb[0].mxu0
        %v1561 = vpop.f32.mrb[0].mxu0
        %v1562 = vadd.f32 0.0, %v1561
        %v1563 = vpop.f32.mrb[0].mxu0
        %1564 = vmatprep.mubr.bf16.mxu0 0
        %1565 = vmatmul.mubr.bf16.gmra.mrb[0].mxu0 %v1431
        %v1566 = vpop.f32.mrb[0].mxu0
        %v1567 = vadd.f32 0.0, %v1566
        %v1568 = vpop.f32.mrb[0].mxu0
        %v1569 = vpop.f32.mrb[0].mxu0
        %v1570 = vadd.f32 0.0, %v1569
        %v1571 = vpop.f32.mrb[0].mxu0
        %1572 = vmatprep.mubr.bf16.mxu0 0
        %1573 = vmatmul.mubr.bf16.gmra.mrb[0].mxu0 %v1432
        %v1574 = vpop.f32.mrb[0].mxu0
        %v1575 = vadd.f32 0.0, %v1574
        %v1576 = vpop.f32.mrb[0].mxu0
        %v1577 = vpop.f32.mrb[0].mxu0
        %v1578 = vadd.f32 0.0, %v1577
        %v1579 = vpop.f32.mrb[0].mxu0
        %1580 = vmatprep.mubr.bf16.mxu0 0
        %1581 = vmatmul.mubr.bf16.gmra.mrb[0].mxu0 %v1433
        %v1582 = vpop.f32.mrb[0].mxu0
        %v1583 = vadd.f32 0.0, %v1582
        %v1584 = vpop.f32.mrb[0].mxu0
        %v1585 = vpop.f32.mrb[0].mxu0
        %v1586 = vadd.f32 0.0, %v1585
        %v1587 = vpop.f32.mrb[0].mxu0
        %1588 = vmatprep.mubr.bf16.mxu0 0
        %1589 = vmatmul.mubr.bf16.gmra.mrb[0].mxu0 %v1434
        %v1590 = vpop.f32.mrb[0].mxu0
        %v1591 = vadd.f32 0.0, %v1590
        %v1592 = vpop.f32.mrb[0].mxu0
        %v1593 = vpop.f32.mrb[0].mxu0
        %v1594 = vadd.f32 0.0, %v1593
        %v1595 = vpop.f32.mrb[0].mxu0
        %1596 = vmatprep.mubr.bf16.mxu0 0
        %1597 = vmatmul.mubr.bf16.gmra.mrb[0].mxu0 %v1435
        %v1598 = vpop.f32.mrb[0].mxu0
        %v1599 = vadd.f32 0.0, %v1598
        %v1600 = vpop.f32.mrb[0].mxu0
        %v1601 = vpop.f32.mrb[0].mxu0
        %v1602 = vadd.f32 0.0, %v1601
        %v1603 = vpop.f32.mrb[0].mxu0
        %1604 = vmatprep.mubr.bf16.mxu0 0
        %1605 = vmatmul.mubr.bf16.gmra.mrb[0].mxu0 %v1436
        %v1606 = vpop.f32.mrb[0].mxu0
        %v1607 = vadd.f32 0.0, %v1606
        %v1608 = vpop.f32.mrb[0].mxu0
        %v1609 = vpop.f32.mrb[0].mxu0
        %v1610 = vadd.f32 0.0, %v1609
        %v1611 = vpop.f32.mrb[0].mxu0
        %1612 = vmatprep.mubr.bf16.mxu0 0
        %1613 = vmatmul.mubr.bf16.gmra.mrb[0].mxu0 %v1437
        %v1614 = vpop.f32.mrb[0].mxu0
        %v1615 = vadd.f32 0.0, %v1614
        %v1616 = vpop.f32.mrb[0].mxu0
        %v1617 = vpop.f32.mrb[0].mxu0
        %v1618 = vadd.f32 0.0, %v1617
        %v1619 = vpop.f32.mrb[0].mxu0
        %1620 = vmatprep.mubr.bf16.mxu0 0
        %1621 = vmatmul.mubr.bf16.gmra.mrb[0].mxu0 %v1438
        %v1622 = vpop.f32.mrb[0].mxu0
        %v1623 = vadd.f32 0.0, %v1622
        %v1624 = vpop.f32.mrb[0].mxu0
        %v1625 = vpop.f32.mrb[0].mxu0
        %v1626 = vadd.f32 0.0, %v1625
        %v1627 = vpop.f32.mrb[0].mxu0
        %1628 = vmatprep.mubr.bf16.mxu0 0
        %1629 = vmatmul.mubr.bf16.gmra.mrb[0].mxu0 %v1439
        %v1630 = vpop.f32.mrb[0].mxu0
        %v1631 = vadd.f32 0.0, %v1630
        %v1632 = vpop.f32.mrb[0].mxu0
        %v1633 = vpop.f32.mrb[0].mxu0
        %v1634 = vadd.f32 0.0, %v1633
        %v1635 = vpop.f32.mrb[0].mxu0
        %1636 = vmatprep.mubr.bf16.mxu0 0
        %1637 = vmatmul.mubr.bf16.gmra.mrb[0].mxu0 %v1440
        %v1638 = vpop.f32.mrb[0].mxu0
        %v1639 = vadd.f32 0.0, %v1638
        %v1640 = vpop.f32.mrb[0].mxu0
        %v1641 = vpop.f32.mrb[0].mxu0
        %v1642 = vadd.f32 0.0, %v1641
        %v1643 = vpop.f32.mrb[0].mxu0
        %1644 = vmatprep.mubr.bf16.mxu0 0
        %1645 = vmatmul.mubr.bf16.gmra.mrb[0].mxu0 %v1441
        %v1646 = vpop.f32.mrb[0].mxu0
        %v1647 = vadd.f32 0.0, %v1646
        %v1648 = vpop.f32.mrb[0].mxu0
        %v1649 = vpop.f32.mrb[0].mxu0
        %v1650 = vadd.f32 0.0, %v1649
        %v1651 = vpop.f32.mrb[0].mxu0
        %1652 = vmatprep.mubr.bf16.mxu0 0
        %1653 = vmatmul.mubr.bf16.gmra.mrb[0].mxu0 %v1442
        %v1654 = vpop.f32.mrb[0].mxu0
        %v1655 = vadd.f32 0.0, %v1654
        %v1656 = vpop.f32.mrb[0].mxu0
        %v1657 = vpop.f32.mrb[0].mxu0
        %v1658 = vadd.f32 0.0, %v1657
        %v1659 = vpop.f32.mrb[0].mxu0
        %1660 = vmatprep.mubr.bf16.mxu0 0
        %1661 = vmatmul.mubr.bf16.gmra.mrb[0].mxu0 %v1443
        %v1662 = vpop.f32.mrb[0].mxu0
        %v1663 = vadd.f32 0.0, %v1662
        %v1664 = vpop.f32.mrb[0].mxu0
        %v1665 = vpop.f32.mrb[0].mxu0
        %v1666 = vadd.f32 0.0, %v1665
        %v1667 = vpop.f32.mrb[0].mxu0
        %1668 = vdwg.mxu0
        %v1669 = vadd.f32 %v1090, %v1543
        %v1670 = vadd.f32 %v1093, %v1546
        %v1671 = vadd.f32 %v1098, %v1551
        %v1672 = vadd.f32 %v1101, %v1554
        %v1673 = vadd.f32 %v1106, %v1559
        %v1674 = vadd.f32 %v1109, %v1562
        %v1675 = vadd.f32 %v1114, %v1567
        %v1676 = vadd.f32 %v1117, %v1570
        %v1677 = vadd.f32 %v1122, %v1575
        %v1678 = vadd.f32 %v1125, %v1578
        %v1679 = vadd.f32 %v1130, %v1583
        %v1680 = vadd.f32 %v1133, %v1586
        %v1681 = vadd.f32 %v1138, %v1591
        %v1682 = vadd.f32 %v1141, %v1594
        %v1683 = vadd.f32 %v1146, %v1599
        %v1684 = vadd.f32 %v1149, %v1602
        %v1685 = vadd.f32 %v1154, %v1607
        %v1686 = vadd.f32 %v1157, %v1610
        %v1687 = vadd.f32 %v1162, %v1615
        %v1688 = vadd.f32 %v1165, %v1618
        %v1689 = vadd.f32 %v1170, %v1623
        %v1690 = vadd.f32 %v1173, %v1626
        %v1691 = vadd.f32 %v1178, %v1631
        %v1692 = vadd.f32 %v1181, %v1634
        %v1693 = vadd.f32 %v1186, %v1639
        %v1694 = vadd.f32 %v1189, %v1642
        %v1695 = vadd.f32 %v1194, %v1647
        %v1696 = vadd.f32 %v1197, %v1650
        %v1697 = vadd.f32 %v1202, %v1655
        %v1698 = vadd.f32 %v1205, %v1658
        %v1699 = vadd.f32 %v1210, %v1663
        %v1700 = vadd.f32 %v1213, %v1666
        %s1701 = scalar_lea.vmem %s168, 12
        %v1702 = vld [vmem:[%s1701] sm:$0xf]
        %v1703 = vld [vmem:[%s1701 + $0x4] sm:$0xf]
        %v1704 = vld [vmem:[%s1701 + $0xc] sm:$0xf]
        %v1705 = vld [vmem:[%s1701 + $0x10] sm:$0xf]
        %v1706 = vld [vmem:[%s1701 + $0x18] sm:$0xf]
        %v1707 = vld [vmem:[%s1701 + $0x1c] sm:$0xf]
        %v1708 = vld [vmem:[%s1701 + $0x24] sm:$0xf]
        %v1709 = vld [vmem:[%s1701 + $0x28] sm:$0xf]
        %v1710 = vld [vmem:[%s1701 + $0x30] sm:$0xf]
        %v1711 = vld [vmem:[%s1701 + $0x34] sm:$0xf]
        %v1712 = vld [vmem:[%s1701 + $0x3c] sm:$0xf]
        %v1713 = vld [vmem:[%s1701 + $0x40] sm:$0xf]
        %v1714 = vld [vmem:[%s1701 + $0x48] sm:$0xf]
        %v1715 = vld [vmem:[%s1701 + $0x4c] sm:$0xf]
        %v1716 = vld [vmem:[%s1701 + $0x54] sm:$0xf]
        %v1717 = vld [vmem:[%s1701 + $0x58] sm:$0xf]
        %v1718 = vld [vmem:[%s1701 + $0x60] sm:$0xf]
        %v1719 = vld [vmem:[%s1701 + $0x64] sm:$0xf]
        %v1720 = vld [vmem:[%s1701 + $0x6c] sm:$0xf]
        %v1721 = vld [vmem:[%s1701 + $0x70] sm:$0xf]
        %v1722 = vld [vmem:[%s1701 + $0x78] sm:$0xf]
        %v1723 = vld [vmem:[%s1701 + $0x7c] sm:$0xf]
        %v1724 = vld [vmem:[%s1701 + $0x84] sm:$0xf]
        %v1725 = vld [vmem:[%s1701 + $0x88] sm:$0xf]
        %v1726 = vld [vmem:[%s1701 + $0x90] sm:$0xf]
        %v1727 = vld [vmem:[%s1701 + $0x94] sm:$0xf]
        %v1728 = vld [vmem:[%s1701 + $0x9c] sm:$0xf]
        %v1729 = vld [vmem:[%s1701 + $0xa0] sm:$0xf]
        %v1730 = vld [vmem:[%s1701 + $0xa8] sm:$0xf]
        %v1731 = vld [vmem:[%s1701 + $0xac] sm:$0xf]
        %v1732 = vld [vmem:[%s1701 + $0xb4] sm:$0xf]
        %v1733 = vld [vmem:[%s1701 + $0xb8] sm:$0xf]
        %s1734 = scalar_lea.vmem %s1, 192
        %v1735 = vld [vmem:[%s1734] sm:$0xf]
        %v1736 = vld [vmem:[%s1734 + $0x4] sm:$0xf]
        %v1737 = vld [vmem:[%s1734 + $0x8] sm:$0xf]
        %v1738 = vld [vmem:[%s1734 + $0xc] sm:$0xf]
        %v1739 = vld [vmem:[%s1734 + $0x10] sm:$0xf]
        %v1740 = vld [vmem:[%s1734 + $0x14] sm:$0xf]
        %v1741 = vld [vmem:[%s1734 + $0x18] sm:$0xf]
        %v1742 = vld [vmem:[%s1734 + $0x1c] sm:$0xf]
        %v1743 = vld [vmem:[%s1734 + $0x20] sm:$0xf]
        %v1744 = vld [vmem:[%s1734 + $0x24] sm:$0xf]
        %v1745 = vld [vmem:[%s1734 + $0x28] sm:$0xf]
        %v1746 = vld [vmem:[%s1734 + $0x2c] sm:$0xf]
        %v1747 = vld [vmem:[%s1734 + $0x30] sm:$0xf]
        %v1748 = vld [vmem:[%s1734 + $0x34] sm:$0xf]
        %v1749 = vld [vmem:[%s1734 + $0x38] sm:$0xf]
        %v1750 = vld [vmem:[%s1734 + $0x3c] sm:$0xf]
        %v1783 = vunpack.c.l.b16 %v1702
        %v1784 = vunpack.c.l.b16 %v1703
        %v1785 = vunpack.c.l.b16 %v1704
        %v1786 = vunpack.c.l.b16 %v1705
        %v1787 = vunpack.c.l.b16 %v1706
        %v1788 = vunpack.c.l.b16 %v1707
        %v1789 = vunpack.c.l.b16 %v1708
        %v1790 = vunpack.c.l.b16 %v1709
        %v1791 = vunpack.c.l.b16 %v1710
        %v1792 = vunpack.c.l.b16 %v1711
        %v1793 = vunpack.c.l.b16 %v1712
        %v1794 = vunpack.c.l.b16 %v1713
        %v1795 = vunpack.c.l.b16 %v1714
        %v1796 = vunpack.c.l.b16 %v1715
        %v1797 = vunpack.c.l.b16 %v1716
        %v1798 = vunpack.c.l.b16 %v1717
        %v1799 = vunpack.c.l.b16 %v1718
        %v1800 = vunpack.c.l.b16 %v1719
        %v1801 = vunpack.c.l.b16 %v1720
        %v1802 = vunpack.c.l.b16 %v1721
        %v1803 = vunpack.c.l.b16 %v1722
        %v1804 = vunpack.c.l.b16 %v1723
        %v1805 = vunpack.c.l.b16 %v1724
        %v1806 = vunpack.c.l.b16 %v1725
        %v1807 = vunpack.c.l.b16 %v1726
        %v1808 = vunpack.c.l.b16 %v1727
        %v1809 = vunpack.c.l.b16 %v1728
        %v1810 = vunpack.c.l.b16 %v1729
        %v1811 = vunpack.c.l.b16 %v1730
        %v1812 = vunpack.c.l.b16 %v1731
        %v1813 = vunpack.c.l.b16 %v1732
        %v1814 = vunpack.c.l.b16 %v1733
        %v1815 = vpack.c.b16 %v1784, %v1783
        %v1816 = vpack.c.b16 %v1786, %v1785
        %v1817 = vpack.c.b16 %v1788, %v1787
        %v1818 = vpack.c.b16 %v1790, %v1789
        %v1819 = vpack.c.b16 %v1792, %v1791
        %v1820 = vpack.c.b16 %v1794, %v1793
        %v1821 = vpack.c.b16 %v1796, %v1795
        %v1822 = vpack.c.b16 %v1798, %v1797
        %v1823 = vpack.c.b16 %v1800, %v1799
        %v1824 = vpack.c.b16 %v1802, %v1801
        %v1825 = vpack.c.b16 %v1804, %v1803
        %v1826 = vpack.c.b16 %v1806, %v1805
        %v1827 = vpack.c.b16 %v1808, %v1807
        %v1828 = vpack.c.b16 %v1810, %v1809
        %v1829 = vpack.c.b16 %v1812, %v1811
        %v1830 = vpack.c.b16 %v1814, %v1813
        %v1863 = vunpack.c.l.b16 %v1735
        %v1864 = vunpack.c.l.b16 %v1736
        %v1865 = vunpack.c.l.b16 %v1737
        %v1866 = vunpack.c.l.b16 %v1738
        %v1867 = vunpack.c.l.b16 %v1739
        %v1868 = vunpack.c.l.b16 %v1740
        %v1869 = vunpack.c.l.b16 %v1741
        %v1870 = vunpack.c.l.b16 %v1742
        %v1871 = vunpack.c.l.b16 %v1743
        %v1872 = vunpack.c.l.b16 %v1744
        %v1873 = vunpack.c.l.b16 %v1745
        %v1874 = vunpack.c.l.b16 %v1746
        %v1875 = vunpack.c.l.b16 %v1747
        %v1876 = vunpack.c.l.b16 %v1748
        %v1877 = vunpack.c.l.b16 %v1749
        %v1878 = vunpack.c.l.b16 %v1750
        %v1879 = vpack.c.b16 %v1864, %v1863
        %v1880 = vpack.c.b16 %v1866, %v1865
        %v1881 = vpack.c.b16 %v1868, %v1867
        %v1882 = vpack.c.b16 %v1870, %v1869
        %v1883 = vpack.c.b16 %v1872, %v1871
        %v1884 = vpack.c.b16 %v1874, %v1873
        %v1885 = vpack.c.b16 %v1876, %v1875
        %v1886 = vpack.c.b16 %v1878, %v1877
        %1895 = vmatprep.subr.bf16.mxu0 0
        %1896 = vmatpush1.bf16.msra.mxu0 %v1879
        %1897 = vmatprep.subr.bf16.mxu0 0
        %1898 = vmatpush1.bf16.msra.mxu0 %v1880
        %1899 = vmatprep.subr.bf16.mxu0 0
        %1900 = vmatpush1.bf16.msra.mxu0 %v1881
        %1901 = vmatprep.subr.bf16.mxu0 0
        %1902 = vmatpush1.bf16.msra.mxu0 %v1882
        %1903 = vmatprep.subr.bf16.mxu0 0
        %1904 = vmatpush1.bf16.msra.mxu0 %v1883
        %1905 = vmatprep.subr.bf16.mxu0 0
        %1906 = vmatpush1.bf16.msra.mxu0 %v1884
        %1907 = vmatprep.subr.bf16.mxu0 0
        %1908 = vmatpush1.bf16.msra.mxu0 %v1885
        %1909 = vmatprep.subr.bf16.mxu0 0
        %1910 = vmatpush1.bf16.msra.mxu0 %v1886
        %1911 = vmatprep.subr.bf16.mxu0 0
        %1912 = vmatpush1.bf16.msra.mxu0 0
        %1913 = vmatprep.subr.bf16.mxu0 0
        %1914 = vmatpush1.bf16.msra.mxu0 0
        %1915 = vmatprep.subr.bf16.mxu0 0
        %1916 = vmatpush1.bf16.msra.mxu0 0
        %1917 = vmatprep.subr.bf16.mxu0 0
        %1918 = vmatpush1.bf16.msra.mxu0 0
        %1919 = vmatprep.subr.bf16.mxu0 0
        %1920 = vmatpush1.bf16.msra.mxu0 0
        %1921 = vmatprep.subr.bf16.mxu0 0
        %1922 = vmatpush1.bf16.msra.mxu0 0
        %1923 = vmatprep.subr.bf16.mxu0 0
        %1924 = vmatpush1.bf16.msra.mxu0 0
        %1925 = vmatprep.subr.bf16.mxu0 0
        %1926 = vmatpush1.bf16.msra.mxu0 0
        %1927 = vmatprep.mubr.bf16.mxu0 0
        %1928 = vmatmul.mubr.bf16.gmra.mrb[0].mxu0 %v1815
        %v1929 = vpop.f32.mrb[0].mxu0
        %v1930 = vadd.f32 0.0, %v1929
        %v1931 = vpop.f32.mrb[0].mxu0
        %v1932 = vpop.f32.mrb[0].mxu0
        %v1933 = vadd.f32 0.0, %v1932
        %v1934 = vpop.f32.mrb[0].mxu0
        %1935 = vmatprep.mubr.bf16.mxu0 0
        %1936 = vmatmul.mubr.bf16.gmra.mrb[0].mxu0 %v1816
        %v1937 = vpop.f32.mrb[0].mxu0
        %v1938 = vadd.f32 0.0, %v1937
        %v1939 = vpop.f32.mrb[0].mxu0
        %v1940 = vpop.f32.mrb[0].mxu0
        %v1941 = vadd.f32 0.0, %v1940
        %v1942 = vpop.f32.mrb[0].mxu0
        %1943 = vmatprep.mubr.bf16.mxu0 0
        %1944 = vmatmul.mubr.bf16.gmra.mrb[0].mxu0 %v1817
        %v1945 = vpop.f32.mrb[0].mxu0
        %v1946 = vadd.f32 0.0, %v1945
        %v1947 = vpop.f32.mrb[0].mxu0
        %v1948 = vpop.f32.mrb[0].mxu0
        %v1949 = vadd.f32 0.0, %v1948
        %v1950 = vpop.f32.mrb[0].mxu0
        %1951 = vmatprep.mubr.bf16.mxu0 0
        %1952 = vmatmul.mubr.bf16.gmra.mrb[0].mxu0 %v1818
        %v1953 = vpop.f32.mrb[0].mxu0
        %v1954 = vadd.f32 0.0, %v1953
        %v1955 = vpop.f32.mrb[0].mxu0
        %v1956 = vpop.f32.mrb[0].mxu0
        %v1957 = vadd.f32 0.0, %v1956
        %v1958 = vpop.f32.mrb[0].mxu0
        %1959 = vmatprep.mubr.bf16.mxu0 0
        %1960 = vmatmul.mubr.bf16.gmra.mrb[0].mxu0 %v1819
        %v1961 = vpop.f32.mrb[0].mxu0
        %v1962 = vadd.f32 0.0, %v1961
        %v1963 = vpop.f32.mrb[0].mxu0
        %v1964 = vpop.f32.mrb[0].mxu0
        %v1965 = vadd.f32 0.0, %v1964
        %v1966 = vpop.f32.mrb[0].mxu0
        %1967 = vmatprep.mubr.bf16.mxu0 0
        %1968 = vmatmul.mubr.bf16.gmra.mrb[0].mxu0 %v1820
        %v1969 = vpop.f32.mrb[0].mxu0
        %v1970 = vadd.f32 0.0, %v1969
        %v1971 = vpop.f32.mrb[0].mxu0
        %v1972 = vpop.f32.mrb[0].mxu0
        %v1973 = vadd.f32 0.0, %v1972
        %v1974 = vpop.f32.mrb[0].mxu0
        %1975 = vmatprep.mubr.bf16.mxu0 0
        %1976 = vmatmul.mubr.bf16.gmra.mrb[0].mxu0 %v1821
        %v1977 = vpop.f32.mrb[0].mxu0
        %v1978 = vadd.f32 0.0, %v1977
        %v1979 = vpop.f32.mrb[0].mxu0
        %v1980 = vpop.f32.mrb[0].mxu0
        %v1981 = vadd.f32 0.0, %v1980
        %v1982 = vpop.f32.mrb[0].mxu0
        %1983 = vmatprep.mubr.bf16.mxu0 0
        %1984 = vmatmul.mubr.bf16.gmra.mrb[0].mxu0 %v1822
        %v1985 = vpop.f32.mrb[0].mxu0
        %v1986 = vadd.f32 0.0, %v1985
        %v1987 = vpop.f32.mrb[0].mxu0
        %v1988 = vpop.f32.mrb[0].mxu0
        %v1989 = vadd.f32 0.0, %v1988
        %v1990 = vpop.f32.mrb[0].mxu0
        %1991 = vmatprep.mubr.bf16.mxu0 0
        %1992 = vmatmul.mubr.bf16.gmra.mrb[0].mxu0 %v1823
        %v1993 = vpop.f32.mrb[0].mxu0
        %v1994 = vadd.f32 0.0, %v1993
        %v1995 = vpop.f32.mrb[0].mxu0
        %v1996 = vpop.f32.mrb[0].mxu0
        %v1997 = vadd.f32 0.0, %v1996
        %v1998 = vpop.f32.mrb[0].mxu0
        %1999 = vmatprep.mubr.bf16.mxu0 0
        %2000 = vmatmul.mubr.bf16.gmra.mrb[0].mxu0 %v1824
        %v2001 = vpop.f32.mrb[0].mxu0
        %v2002 = vadd.f32 0.0, %v2001
        %v2003 = vpop.f32.mrb[0].mxu0
        %v2004 = vpop.f32.mrb[0].mxu0
        %v2005 = vadd.f32 0.0, %v2004
        %v2006 = vpop.f32.mrb[0].mxu0
        %2007 = vmatprep.mubr.bf16.mxu0 0
        %2008 = vmatmul.mubr.bf16.gmra.mrb[0].mxu0 %v1825
        %v2009 = vpop.f32.mrb[0].mxu0
        %v2010 = vadd.f32 0.0, %v2009
        %v2011 = vpop.f32.mrb[0].mxu0
        %v2012 = vpop.f32.mrb[0].mxu0
        %v2013 = vadd.f32 0.0, %v2012
        %v2014 = vpop.f32.mrb[0].mxu0
        %2015 = vmatprep.mubr.bf16.mxu0 0
        %2016 = vmatmul.mubr.bf16.gmra.mrb[0].mxu0 %v1826
        %v2017 = vpop.f32.mrb[0].mxu0
        %v2018 = vadd.f32 0.0, %v2017
        %v2019 = vpop.f32.mrb[0].mxu0
        %v2020 = vpop.f32.mrb[0].mxu0
        %v2021 = vadd.f32 0.0, %v2020
        %v2022 = vpop.f32.mrb[0].mxu0
        %2023 = vmatprep.mubr.bf16.mxu0 0
        %2024 = vmatmul.mubr.bf16.gmra.mrb[0].mxu0 %v1827
        %v2025 = vpop.f32.mrb[0].mxu0
        %v2026 = vadd.f32 0.0, %v2025
        %v2027 = vpop.f32.mrb[0].mxu0
        %v2028 = vpop.f32.mrb[0].mxu0
        %v2029 = vadd.f32 0.0, %v2028
        %v2030 = vpop.f32.mrb[0].mxu0
        %2031 = vmatprep.mubr.bf16.mxu0 0
        %2032 = vmatmul.mubr.bf16.gmra.mrb[0].mxu0 %v1828
        %v2033 = vpop.f32.mrb[0].mxu0
        %v2034 = vadd.f32 0.0, %v2033
        %v2035 = vpop.f32.mrb[0].mxu0
        %v2036 = vpop.f32.mrb[0].mxu0
        %v2037 = vadd.f32 0.0, %v2036
        %v2038 = vpop.f32.mrb[0].mxu0
        %2039 = vmatprep.mubr.bf16.mxu0 0
        %2040 = vmatmul.mubr.bf16.gmra.mrb[0].mxu0 %v1829
        %v2041 = vpop.f32.mrb[0].mxu0
        %v2042 = vadd.f32 0.0, %v2041
        %v2043 = vpop.f32.mrb[0].mxu0
        %v2044 = vpop.f32.mrb[0].mxu0
        %v2045 = vadd.f32 0.0, %v2044
        %v2046 = vpop.f32.mrb[0].mxu0
        %2047 = vmatprep.mubr.bf16.mxu0 0
        %2048 = vmatmul.mubr.bf16.gmra.mrb[0].mxu0 %v1830
        %v2049 = vpop.f32.mrb[0].mxu0
        %v2050 = vadd.f32 0.0, %v2049
        %v2051 = vpop.f32.mrb[0].mxu0
        %v2052 = vpop.f32.mrb[0].mxu0
        %v2053 = vadd.f32 0.0, %v2052
        %v2054 = vpop.f32.mrb[0].mxu0
        %2055 = vdwg.mxu0
        %v2056 = vadd.f32 %v1669, %v1930
        %v2057 = vadd.f32 %v1670, %v1933
        %v2058 = vadd.f32 %v1671, %v1938
        %v2059 = vadd.f32 %v1672, %v1941
        %v2060 = vadd.f32 %v1673, %v1946
        %v2061 = vadd.f32 %v1674, %v1949
        %v2062 = vadd.f32 %v1675, %v1954
        %v2063 = vadd.f32 %v1676, %v1957
        %v2064 = vadd.f32 %v1677, %v1962
        %v2065 = vadd.f32 %v1678, %v1965
        %v2066 = vadd.f32 %v1679, %v1970
        %v2067 = vadd.f32 %v1680, %v1973
        %v2068 = vadd.f32 %v1681, %v1978
        %v2069 = vadd.f32 %v1682, %v1981
        %v2070 = vadd.f32 %v1683, %v1986
        %v2071 = vadd.f32 %v1684, %v1989
        %v2072 = vadd.f32 %v1685, %v1994
        %v2073 = vadd.f32 %v1686, %v1997
        %v2074 = vadd.f32 %v1687, %v2002
        %v2075 = vadd.f32 %v1688, %v2005
        %v2076 = vadd.f32 %v1689, %v2010
        %v2077 = vadd.f32 %v1690, %v2013
        %v2078 = vadd.f32 %v1691, %v2018
        %v2079 = vadd.f32 %v1692, %v2021
        %v2080 = vadd.f32 %v1693, %v2026
        %v2081 = vadd.f32 %v1694, %v2029
        %v2082 = vadd.f32 %v1695, %v2034
        %v2083 = vadd.f32 %v1696, %v2037
        %v2084 = vadd.f32 %v1697, %v2042
        %v2085 = vadd.f32 %v1698, %v2045
        %v2086 = vadd.f32 %v1699, %v2050
        %v2087 = vadd.f32 %v1700, %v2053
        %v2088 = vld [vmem:[%s1701] sm:$0xf]
        %v2089 = vld [vmem:[%s1701 + $0x4] sm:$0xf]
        %v2090 = vld [vmem:[%s1701 + $0x8] sm:$0x1]
        %v2091 = vld [vmem:[%s1701 + $0xc] sm:$0xf]
        %v2092 = vld [vmem:[%s1701 + $0x10] sm:$0xf]
        %v2093 = vld [vmem:[%s1701 + $0x14] sm:$0x1]
        %v2094 = vld [vmem:[%s1701 + $0x18] sm:$0xf]
        %v2095 = vld [vmem:[%s1701 + $0x1c] sm:$0xf]
        %v2096 = vld [vmem:[%s1701 + $0x20] sm:$0x1]
        %v2097 = vld [vmem:[%s1701 + $0x24] sm:$0xf]
        %v2098 = vld [vmem:[%s1701 + $0x28] sm:$0xf]
        %v2099 = vld [vmem:[%s1701 + $0x2c] sm:$0x1]
        %v2100 = vld [vmem:[%s1701 + $0x30] sm:$0xf]
        %v2101 = vld [vmem:[%s1701 + $0x34] sm:$0xf]
        %v2102 = vld [vmem:[%s1701 + $0x38] sm:$0x1]
        %v2103 = vld [vmem:[%s1701 + $0x3c] sm:$0xf]
        %v2104 = vld [vmem:[%s1701 + $0x40] sm:$0xf]
        %v2105 = vld [vmem:[%s1701 + $0x44] sm:$0x1]
        %v2106 = vld [vmem:[%s1701 + $0x48] sm:$0xf]
        %v2107 = vld [vmem:[%s1701 + $0x4c] sm:$0xf]
        %v2108 = vld [vmem:[%s1701 + $0x50] sm:$0x1]
        %v2109 = vld [vmem:[%s1701 + $0x54] sm:$0xf]
        %v2110 = vld [vmem:[%s1701 + $0x58] sm:$0xf]
        %v2111 = vld [vmem:[%s1701 + $0x5c] sm:$0x1]
        %v2112 = vld [vmem:[%s1701 + $0x60] sm:$0xf]
        %v2113 = vld [vmem:[%s1701 + $0x64] sm:$0xf]
        %v2114 = vld [vmem:[%s1701 + $0x68] sm:$0x1]
        %v2115 = vld [vmem:[%s1701 + $0x6c] sm:$0xf]
        %v2116 = vld [vmem:[%s1701 + $0x70] sm:$0xf]
        %v2117 = vld [vmem:[%s1701 + $0x74] sm:$0x1]
        %v2118 = vld [vmem:[%s1701 + $0x78] sm:$0xf]
        %v2119 = vld [vmem:[%s1701 + $0x7c] sm:$0xf]
        %v2120 = vld [vmem:[%s1701 + $0x80] sm:$0x1]
        %v2121 = vld [vmem:[%s1701 + $0x84] sm:$0xf]
        %v2122 = vld [vmem:[%s1701 + $0x88] sm:$0xf]
        %v2123 = vld [vmem:[%s1701 + $0x8c] sm:$0x1]
        %v2124 = vld [vmem:[%s1701 + $0x90] sm:$0xf]
        %v2125 = vld [vmem:[%s1701 + $0x94] sm:$0xf]
        %v2126 = vld [vmem:[%s1701 + $0x98] sm:$0x1]
        %v2127 = vld [vmem:[%s1701 + $0x9c] sm:$0xf]
        %v2128 = vld [vmem:[%s1701 + $0xa0] sm:$0xf]
        %v2129 = vld [vmem:[%s1701 + $0xa4] sm:$0x1]
        %v2130 = vld [vmem:[%s1701 + $0xa8] sm:$0xf]
        %v2131 = vld [vmem:[%s1701 + $0xac] sm:$0xf]
        %v2132 = vld [vmem:[%s1701 + $0xb0] sm:$0x1]
        %v2133 = vld [vmem:[%s1701 + $0xb4] sm:$0xf]
        %v2134 = vld [vmem:[%s1701 + $0xb8] sm:$0xf]
        %v2135 = vld [vmem:[%s1701 + $0xbc] sm:$0x1]
        %v2137 = vshrl.u32 %v2088, 16
        %v2139 = vrot.slane %v2137, 4
        %v2140 = vshll.u32 %v2088, 16
        %v2142 = vrot.slane %v2140, 5
        %v2143 = vor.u32 %v2139, %v2142
        %v2144 = vrot.slane %v2143, 4
        %v2146 = vshll.u32 %v2089, 16
        %v2148 = vrot.slane %v2146, 5
        %v2149 = vsel %vm236, %v2144, %v2148
        %v2150 = vshrl.u32 %v2089, 16
        %v2152 = vrot.slane %v2150, 4
        %v2153 = vor.u32 %v2152, %v2148
        %v2154 = vrot.slane %v2153, 4
        %v2156 = vshll.u32 %v2090, 16
        %v2158 = vrot.slane %v2156, 5
        %v2159 = vsel %vm236, %v2154, %v2158
        %v2161 = vshrl.u32 %v2091, 16
        %v2163 = vrot.slane %v2161, 4
        %v2164 = vshll.u32 %v2091, 16
        %v2166 = vrot.slane %v2164, 5
        %v2167 = vor.u32 %v2163, %v2166
        %v2168 = vrot.slane %v2167, 4
        %v2170 = vshll.u32 %v2092, 16
        %v2172 = vrot.slane %v2170, 5
        %v2173 = vsel %vm236, %v2168, %v2172
        %v2174 = vshrl.u32 %v2092, 16
        %v2176 = vrot.slane %v2174, 4
        %v2177 = vor.u32 %v2176, %v2172
        %v2178 = vrot.slane %v2177, 4
        %v2180 = vshll.u32 %v2093, 16
        %v2182 = vrot.slane %v2180, 5
        %v2183 = vsel %vm236, %v2178, %v2182
        %v2185 = vshrl.u32 %v2094, 16
        %v2187 = vrot.slane %v2185, 4
        %v2188 = vshll.u32 %v2094, 16
        %v2190 = vrot.slane %v2188, 5
        %v2191 = vor.u32 %v2187, %v2190
        %v2192 = vrot.slane %v2191, 4
        %v2194 = vshll.u32 %v2095, 16
        %v2196 = vrot.slane %v2194, 5
        %v2197 = vsel %vm236, %v2192, %v2196
        %v2198 = vshrl.u32 %v2095, 16
        %v2200 = vrot.slane %v2198, 4
        %v2201 = vor.u32 %v2200, %v2196
        %v2202 = vrot.slane %v2201, 4
        %v2204 = vshll.u32 %v2096, 16
        %v2206 = vrot.slane %v2204, 5
        %v2207 = vsel %vm236, %v2202, %v2206
        %v2209 = vshrl.u32 %v2097, 16
        %v2211 = vrot.slane %v2209, 4
        %v2212 = vshll.u32 %v2097, 16
        %v2214 = vrot.slane %v2212, 5
        %v2215 = vor.u32 %v2211, %v2214
        %v2216 = vrot.slane %v2215, 4
        %v2218 = vshll.u32 %v2098, 16
        %v2220 = vrot.slane %v2218, 5
        %v2221 = vsel %vm236, %v2216, %v2220
        %v2222 = vshrl.u32 %v2098, 16
        %v2224 = vrot.slane %v2222, 4
        %v2225 = vor.u32 %v2224, %v2220
        %v2226 = vrot.slane %v2225, 4
        %v2228 = vshll.u32 %v2099, 16
        %v2230 = vrot.slane %v2228, 5
        %v2231 = vsel %vm236, %v2226, %v2230
        %v2233 = vshrl.u32 %v2100, 16
        %v2235 = vrot.slane %v2233, 4
        %v2236 = vshll.u32 %v2100, 16
        %v2238 = vrot.slane %v2236, 5
        %v2239 = vor.u32 %v2235, %v2238
        %v2240 = vrot.slane %v2239, 4
        %v2242 = vshll.u32 %v2101, 16
        %v2244 = vrot.slane %v2242, 5
        %v2245 = vsel %vm236, %v2240, %v2244
        %v2246 = vshrl.u32 %v2101, 16
        %v2248 = vrot.slane %v2246, 4
        %v2249 = vor.u32 %v2248, %v2244
        %v2250 = vrot.slane %v2249, 4
        %v2252 = vshll.u32 %v2102, 16
        %v2254 = vrot.slane %v2252, 5
        %v2255 = vsel %vm236, %v2250, %v2254
        %v2257 = vshrl.u32 %v2103, 16
        %v2259 = vrot.slane %v2257, 4
        %v2260 = vshll.u32 %v2103, 16
        %v2262 = vrot.slane %v2260, 5
        %v2263 = vor.u32 %v2259, %v2262
        %v2264 = vrot.slane %v2263, 4
        %v2266 = vshll.u32 %v2104, 16
        %v2268 = vrot.slane %v2266, 5
        %v2269 = vsel %vm236, %v2264, %v2268
        %v2270 = vshrl.u32 %v2104, 16
        %v2272 = vrot.slane %v2270, 4
        %v2273 = vor.u32 %v2272, %v2268
        %v2274 = vrot.slane %v2273, 4
        %v2276 = vshll.u32 %v2105, 16
        %v2278 = vrot.slane %v2276, 5
        %v2279 = vsel %vm236, %v2274, %v2278
        %v2281 = vshrl.u32 %v2106, 16
        %v2283 = vrot.slane %v2281, 4
        %v2284 = vshll.u32 %v2106, 16
        %v2286 = vrot.slane %v2284, 5
        %v2287 = vor.u32 %v2283, %v2286
        %v2288 = vrot.slane %v2287, 4
        %v2290 = vshll.u32 %v2107, 16
        %v2292 = vrot.slane %v2290, 5
        %v2293 = vsel %vm236, %v2288, %v2292
        %v2294 = vshrl.u32 %v2107, 16
        %v2296 = vrot.slane %v2294, 4
        %v2297 = vor.u32 %v2296, %v2292
        %v2298 = vrot.slane %v2297, 4
        %v2300 = vshll.u32 %v2108, 16
        %v2302 = vrot.slane %v2300, 5
        %v2303 = vsel %vm236, %v2298, %v2302
        %v2305 = vshrl.u32 %v2109, 16
        %v2307 = vrot.slane %v2305, 4
        %v2308 = vshll.u32 %v2109, 16
        %v2310 = vrot.slane %v2308, 5
        %v2311 = vor.u32 %v2307, %v2310
        %v2312 = vrot.slane %v2311, 4
        %v2314 = vshll.u32 %v2110, 16
        %v2316 = vrot.slane %v2314, 5
        %v2317 = vsel %vm236, %v2312, %v2316
        %v2318 = vshrl.u32 %v2110, 16
        %v2320 = vrot.slane %v2318, 4
        %v2321 = vor.u32 %v2320, %v2316
        %v2322 = vrot.slane %v2321, 4
        %v2324 = vshll.u32 %v2111, 16
        %v2326 = vrot.slane %v2324, 5
        %v2327 = vsel %vm236, %v2322, %v2326
        %v2329 = vshrl.u32 %v2112, 16
        %v2331 = vrot.slane %v2329, 4
        %v2332 = vshll.u32 %v2112, 16
        %v2334 = vrot.slane %v2332, 5
        %v2335 = vor.u32 %v2331, %v2334
        %v2336 = vrot.slane %v2335, 4
        %v2338 = vshll.u32 %v2113, 16
        %v2340 = vrot.slane %v2338, 5
        %v2341 = vsel %vm236, %v2336, %v2340
        %v2342 = vshrl.u32 %v2113, 16
        %v2344 = vrot.slane %v2342, 4
        %v2345 = vor.u32 %v2344, %v2340
        %v2346 = vrot.slane %v2345, 4
        %v2348 = vshll.u32 %v2114, 16
        %v2350 = vrot.slane %v2348, 5
        %v2351 = vsel %vm236, %v2346, %v2350
        %v2353 = vshrl.u32 %v2115, 16
        %v2355 = vrot.slane %v2353, 4
        %v2356 = vshll.u32 %v2115, 16
        %v2358 = vrot.slane %v2356, 5
        %v2359 = vor.u32 %v2355, %v2358
        %v2360 = vrot.slane %v2359, 4
        %v2362 = vshll.u32 %v2116, 16
        %v2364 = vrot.slane %v2362, 5
        %v2365 = vsel %vm236, %v2360, %v2364
        %v2366 = vshrl.u32 %v2116, 16
        %v2368 = vrot.slane %v2366, 4
        %v2369 = vor.u32 %v2368, %v2364
        %v2370 = vrot.slane %v2369, 4
        %v2372 = vshll.u32 %v2117, 16
        %v2374 = vrot.slane %v2372, 5
        %v2375 = vsel %vm236, %v2370, %v2374
        %v2377 = vshrl.u32 %v2118, 16
        %v2379 = vrot.slane %v2377, 4
        %v2380 = vshll.u32 %v2118, 16
        %v2382 = vrot.slane %v2380, 5
        %v2383 = vor.u32 %v2379, %v2382
        %v2384 = vrot.slane %v2383, 4
        %v2386 = vshll.u32 %v2119, 16
        %v2388 = vrot.slane %v2386, 5
        %v2389 = vsel %vm236, %v2384, %v2388
        %v2390 = vshrl.u32 %v2119, 16
        %v2392 = vrot.slane %v2390, 4
        %v2393 = vor.u32 %v2392, %v2388
        %v2394 = vrot.slane %v2393, 4
        %v2396 = vshll.u32 %v2120, 16
        %v2398 = vrot.slane %v2396, 5
        %v2399 = vsel %vm236, %v2394, %v2398
        %v2401 = vshrl.u32 %v2121, 16
        %v2403 = vrot.slane %v2401, 4
        %v2404 = vshll.u32 %v2121, 16
        %v2406 = vrot.slane %v2404, 5
        %v2407 = vor.u32 %v2403, %v2406
        %v2408 = vrot.slane %v2407, 4
        %v2410 = vshll.u32 %v2122, 16
        %v2412 = vrot.slane %v2410, 5
        %v2413 = vsel %vm236, %v2408, %v2412
        %v2414 = vshrl.u32 %v2122, 16
        %v2416 = vrot.slane %v2414, 4
        %v2417 = vor.u32 %v2416, %v2412
        %v2418 = vrot.slane %v2417, 4
        %v2420 = vshll.u32 %v2123, 16
        %v2422 = vrot.slane %v2420, 5
        %v2423 = vsel %vm236, %v2418, %v2422
        %v2425 = vshrl.u32 %v2124, 16
        %v2427 = vrot.slane %v2425, 4
        %v2428 = vshll.u32 %v2124, 16
        %v2430 = vrot.slane %v2428, 5
        %v2431 = vor.u32 %v2427, %v2430
        %v2432 = vrot.slane %v2431, 4
        %v2434 = vshll.u32 %v2125, 16
        %v2436 = vrot.slane %v2434, 5
        %v2437 = vsel %vm236, %v2432, %v2436
        %v2438 = vshrl.u32 %v2125, 16
        %v2440 = vrot.slane %v2438, 4
        %v2441 = vor.u32 %v2440, %v2436
        %v2442 = vrot.slane %v2441, 4
        %v2444 = vshll.u32 %v2126, 16
        %v2446 = vrot.slane %v2444, 5
        %v2447 = vsel %vm236, %v2442, %v2446
        %v2449 = vshrl.u32 %v2127, 16
        %v2451 = vrot.slane %v2449, 4
        %v2452 = vshll.u32 %v2127, 16
        %v2454 = vrot.slane %v2452, 5
        %v2455 = vor.u32 %v2451, %v2454
        %v2456 = vrot.slane %v2455, 4
        %v2458 = vshll.u32 %v2128, 16
        %v2460 = vrot.slane %v2458, 5
        %v2461 = vsel %vm236, %v2456, %v2460
        %v2462 = vshrl.u32 %v2128, 16
        %v2464 = vrot.slane %v2462, 4
        %v2465 = vor.u32 %v2464, %v2460
        %v2466 = vrot.slane %v2465, 4
        %v2468 = vshll.u32 %v2129, 16
        %v2470 = vrot.slane %v2468, 5
        %v2471 = vsel %vm236, %v2466, %v2470
        %v2473 = vshrl.u32 %v2130, 16
        %v2475 = vrot.slane %v2473, 4
        %v2476 = vshll.u32 %v2130, 16
        %v2478 = vrot.slane %v2476, 5
        %v2479 = vor.u32 %v2475, %v2478
        %v2480 = vrot.slane %v2479, 4
        %v2482 = vshll.u32 %v2131, 16
        %v2484 = vrot.slane %v2482, 5
        %v2485 = vsel %vm236, %v2480, %v2484
        %v2486 = vshrl.u32 %v2131, 16
        %v2488 = vrot.slane %v2486, 4
        %v2489 = vor.u32 %v2488, %v2484
        %v2490 = vrot.slane %v2489, 4
        %v2492 = vshll.u32 %v2132, 16
        %v2494 = vrot.slane %v2492, 5
        %v2495 = vsel %vm236, %v2490, %v2494
        %v2497 = vshrl.u32 %v2133, 16
        %v2499 = vrot.slane %v2497, 4
        %v2500 = vshll.u32 %v2133, 16
        %v2502 = vrot.slane %v2500, 5
        %v2503 = vor.u32 %v2499, %v2502
        %v2504 = vrot.slane %v2503, 4
        %v2506 = vshll.u32 %v2134, 16
        %v2508 = vrot.slane %v2506, 5
        %v2509 = vsel %vm236, %v2504, %v2508
        %v2510 = vshrl.u32 %v2134, 16
        %v2512 = vrot.slane %v2510, 4
        %v2513 = vor.u32 %v2512, %v2508
        %v2514 = vrot.slane %v2513, 4
        %v2516 = vshll.u32 %v2135, 16
        %v2518 = vrot.slane %v2516, 5
        %v2519 = vsel %vm236, %v2514, %v2518
        %s2520 = scalar_lea.vmem %s1, 256
        %v2521 = vld [vmem:[%s2520] sm:$0xf]
        %v2522 = vld [vmem:[%s2520 + $0x4] sm:$0xf]
        %v2523 = vld [vmem:[%s2520 + $0x8] sm:$0xf]
        %v2524 = vld [vmem:[%s2520 + $0xc] sm:$0xf]
        %v2525 = vld [vmem:[%s2520 + $0x10] sm:$0xf]
        %v2526 = vld [vmem:[%s2520 + $0x14] sm:$0xf]
        %v2527 = vld [vmem:[%s2520 + $0x18] sm:$0xf]
        %v2528 = vld [vmem:[%s2520 + $0x1c] sm:$0xf]
        %v2529 = vld [vmem:[%s2520 + $0x20] sm:$0xf]
        %v2530 = vld [vmem:[%s2520 + $0x24] sm:$0xf]
        %v2531 = vld [vmem:[%s2520 + $0x28] sm:$0xf]
        %v2532 = vld [vmem:[%s2520 + $0x2c] sm:$0xf]
        %v2533 = vld [vmem:[%s2520 + $0x30] sm:$0xf]
        %v2534 = vld [vmem:[%s2520 + $0x34] sm:$0xf]
        %v2535 = vld [vmem:[%s2520 + $0x38] sm:$0xf]
        %v2536 = vld [vmem:[%s2520 + $0x3c] sm:$0xf]
        %v2537 = vunpack.c.l.b16 %v2149
        %v2538 = vunpack.c.l.b16 %v2159
        %v2539 = vunpack.c.l.b16 %v2173
        %v2540 = vunpack.c.l.b16 %v2183
        %v2541 = vunpack.c.l.b16 %v2197
        %v2542 = vunpack.c.l.b16 %v2207
        %v2543 = vunpack.c.l.b16 %v2221
        %v2544 = vunpack.c.l.b16 %v2231
        %v2545 = vunpack.c.l.b16 %v2245
        %v2546 = vunpack.c.l.b16 %v2255
        %v2547 = vunpack.c.l.b16 %v2269
        %v2548 = vunpack.c.l.b16 %v2279
        %v2549 = vunpack.c.l.b16 %v2293
        %v2550 = vunpack.c.l.b16 %v2303
        %v2551 = vunpack.c.l.b16 %v2317
        %v2552 = vunpack.c.l.b16 %v2327
        %v2553 = vunpack.c.l.b16 %v2341
        %v2554 = vunpack.c.l.b16 %v2351
        %v2555 = vunpack.c.l.b16 %v2365
        %v2556 = vunpack.c.l.b16 %v2375
        %v2557 = vunpack.c.l.b16 %v2389
        %v2558 = vunpack.c.l.b16 %v2399
        %v2559 = vunpack.c.l.b16 %v2413
        %v2560 = vunpack.c.l.b16 %v2423
        %v2561 = vunpack.c.l.b16 %v2437
        %v2562 = vunpack.c.l.b16 %v2447
        %v2563 = vunpack.c.l.b16 %v2461
        %v2564 = vunpack.c.l.b16 %v2471
        %v2565 = vunpack.c.l.b16 %v2485
        %v2566 = vunpack.c.l.b16 %v2495
        %v2567 = vunpack.c.l.b16 %v2509
        %v2568 = vunpack.c.l.b16 %v2519
        %v2569 = vpack.c.b16 %v2538, %v2537
        %v2570 = vpack.c.b16 %v2540, %v2539
        %v2571 = vpack.c.b16 %v2542, %v2541
        %v2572 = vpack.c.b16 %v2544, %v2543
        %v2573 = vpack.c.b16 %v2546, %v2545
        %v2574 = vpack.c.b16 %v2548, %v2547
        %v2575 = vpack.c.b16 %v2550, %v2549
        %v2576 = vpack.c.b16 %v2552, %v2551
        %v2577 = vpack.c.b16 %v2554, %v2553
        %v2578 = vpack.c.b16 %v2556, %v2555
        %v2579 = vpack.c.b16 %v2558, %v2557
        %v2580 = vpack.c.b16 %v2560, %v2559
        %v2581 = vpack.c.b16 %v2562, %v2561
        %v2582 = vpack.c.b16 %v2564, %v2563
        %v2583 = vpack.c.b16 %v2566, %v2565
        %v2584 = vpack.c.b16 %v2568, %v2567
        %v2617 = vunpack.c.l.b16 %v2521
        %v2618 = vunpack.c.l.b16 %v2522
        %v2619 = vunpack.c.l.b16 %v2523
        %v2620 = vunpack.c.l.b16 %v2524
        %v2621 = vunpack.c.l.b16 %v2525
        %v2622 = vunpack.c.l.b16 %v2526
        %v2623 = vunpack.c.l.b16 %v2527
        %v2624 = vunpack.c.l.b16 %v2528
        %v2625 = vunpack.c.l.b16 %v2529
        %v2626 = vunpack.c.l.b16 %v2530
        %v2627 = vunpack.c.l.b16 %v2531
        %v2628 = vunpack.c.l.b16 %v2532
        %v2629 = vunpack.c.l.b16 %v2533
        %v2630 = vunpack.c.l.b16 %v2534
        %v2631 = vunpack.c.l.b16 %v2535
        %v2632 = vunpack.c.l.b16 %v2536
        %v2633 = vpack.c.b16 %v2618, %v2617
        %v2634 = vpack.c.b16 %v2620, %v2619
        %v2635 = vpack.c.b16 %v2622, %v2621
        %v2636 = vpack.c.b16 %v2624, %v2623
        %v2637 = vpack.c.b16 %v2626, %v2625
        %v2638 = vpack.c.b16 %v2628, %v2627
        %v2639 = vpack.c.b16 %v2630, %v2629
        %v2640 = vpack.c.b16 %v2632, %v2631
        %2649 = vmatprep.subr.bf16.mxu0 0
        %2650 = vmatpush1.bf16.msra.mxu0 %v2633
        %2651 = vmatprep.subr.bf16.mxu0 0
        %2652 = vmatpush1.bf16.msra.mxu0 %v2634
        %2653 = vmatprep.subr.bf16.mxu0 0
        %2654 = vmatpush1.bf16.msra.mxu0 %v2635
        %2655 = vmatprep.subr.bf16.mxu0 0
        %2656 = vmatpush1.bf16.msra.mxu0 %v2636
        %2657 = vmatprep.subr.bf16.mxu0 0
        %2658 = vmatpush1.bf16.msra.mxu0 %v2637
        %2659 = vmatprep.subr.bf16.mxu0 0
        %2660 = vmatpush1.bf16.msra.mxu0 %v2638
        %2661 = vmatprep.subr.bf16.mxu0 0
        %2662 = vmatpush1.bf16.msra.mxu0 %v2639
        %2663 = vmatprep.subr.bf16.mxu0 0
        %2664 = vmatpush1.bf16.msra.mxu0 %v2640
        %2665 = vmatprep.subr.bf16.mxu0 0
        %2666 = vmatpush1.bf16.msra.mxu0 0
        %2667 = vmatprep.subr.bf16.mxu0 0
        %2668 = vmatpush1.bf16.msra.mxu0 0
        %2669 = vmatprep.subr.bf16.mxu0 0
        %2670 = vmatpush1.bf16.msra.mxu0 0
        %2671 = vmatprep.subr.bf16.mxu0 0
        %2672 = vmatpush1.bf16.msra.mxu0 0
        %2673 = vmatprep.subr.bf16.mxu0 0
        %2674 = vmatpush1.bf16.msra.mxu0 0
        %2675 = vmatprep.subr.bf16.mxu0 0
        %2676 = vmatpush1.bf16.msra.mxu0 0
        %2677 = vmatprep.subr.bf16.mxu0 0
        %2678 = vmatpush1.bf16.msra.mxu0 0
        %2679 = vmatprep.subr.bf16.mxu0 0
        %2680 = vmatpush1.bf16.msra.mxu0 0
        %2681 = vmatprep.mubr.bf16.mxu0 0
        %2682 = vmatmul.mubr.bf16.gmra.mrb[0].mxu0 %v2569
        %v2683 = vpop.f32.mrb[0].mxu0
        %v2684 = vadd.f32 0.0, %v2683
        %v2685 = vpop.f32.mrb[0].mxu0
        %v2686 = vpop.f32.mrb[0].mxu0
        %v2687 = vadd.f32 0.0, %v2686
        %v2688 = vpop.f32.mrb[0].mxu0
        %2689 = vmatprep.mubr.bf16.mxu0 0
        %2690 = vmatmul.mubr.bf16.gmra.mrb[0].mxu0 %v2570
        %v2691 = vpop.f32.mrb[0].mxu0
        %v2692 = vadd.f32 0.0, %v2691
        %v2693 = vpop.f32.mrb[0].mxu0
        %v2694 = vpop.f32.mrb[0].mxu0
        %v2695 = vadd.f32 0.0, %v2694
        %v2696 = vpop.f32.mrb[0].mxu0
        %2697 = vmatprep.mubr.bf16.mxu0 0
        %2698 = vmatmul.mubr.bf16.gmra.mrb[0].mxu0 %v2571
        %v2699 = vpop.f32.mrb[0].mxu0
        %v2700 = vadd.f32 0.0, %v2699
        %v2701 = vpop.f32.mrb[0].mxu0
        %v2702 = vpop.f32.mrb[0].mxu0
        %v2703 = vadd.f32 0.0, %v2702
        %v2704 = vpop.f32.mrb[0].mxu0
        %2705 = vmatprep.mubr.bf16.mxu0 0
        %2706 = vmatmul.mubr.bf16.gmra.mrb[0].mxu0 %v2572
        %v2707 = vpop.f32.mrb[0].mxu0
        %v2708 = vadd.f32 0.0, %v2707
        %v2709 = vpop.f32.mrb[0].mxu0
        %v2710 = vpop.f32.mrb[0].mxu0
        %v2711 = vadd.f32 0.0, %v2710
        %v2712 = vpop.f32.mrb[0].mxu0
        %2713 = vmatprep.mubr.bf16.mxu0 0
        %2714 = vmatmul.mubr.bf16.gmra.mrb[0].mxu0 %v2573
        %v2715 = vpop.f32.mrb[0].mxu0
        %v2716 = vadd.f32 0.0, %v2715
        %v2717 = vpop.f32.mrb[0].mxu0
        %v2718 = vpop.f32.mrb[0].mxu0
        %v2719 = vadd.f32 0.0, %v2718
        %v2720 = vpop.f32.mrb[0].mxu0
        %2721 = vmatprep.mubr.bf16.mxu0 0
        %2722 = vmatmul.mubr.bf16.gmra.mrb[0].mxu0 %v2574
        %v2723 = vpop.f32.mrb[0].mxu0
        %v2724 = vadd.f32 0.0, %v2723
        %v2725 = vpop.f32.mrb[0].mxu0
        %v2726 = vpop.f32.mrb[0].mxu0
        %v2727 = vadd.f32 0.0, %v2726
        %v2728 = vpop.f32.mrb[0].mxu0
        %2729 = vmatprep.mubr.bf16.mxu0 0
        %2730 = vmatmul.mubr.bf16.gmra.mrb[0].mxu0 %v2575
        %v2731 = vpop.f32.mrb[0].mxu0
        %v2732 = vadd.f32 0.0, %v2731
        %v2733 = vpop.f32.mrb[0].mxu0
        %v2734 = vpop.f32.mrb[0].mxu0
        %v2735 = vadd.f32 0.0, %v2734
        %v2736 = vpop.f32.mrb[0].mxu0
        %2737 = vmatprep.mubr.bf16.mxu0 0
        %2738 = vmatmul.mubr.bf16.gmra.mrb[0].mxu0 %v2576
        %v2739 = vpop.f32.mrb[0].mxu0
        %v2740 = vadd.f32 0.0, %v2739
        %v2741 = vpop.f32.mrb[0].mxu0
        %v2742 = vpop.f32.mrb[0].mxu0
        %v2743 = vadd.f32 0.0, %v2742
        %v2744 = vpop.f32.mrb[0].mxu0
        %2745 = vmatprep.mubr.bf16.mxu0 0
        %2746 = vmatmul.mubr.bf16.gmra.mrb[0].mxu0 %v2577
        %v2747 = vpop.f32.mrb[0].mxu0
        %v2748 = vadd.f32 0.0, %v2747
        %v2749 = vpop.f32.mrb[0].mxu0
        %v2750 = vpop.f32.mrb[0].mxu0
        %v2751 = vadd.f32 0.0, %v2750
        %v2752 = vpop.f32.mrb[0].mxu0
        %2753 = vmatprep.mubr.bf16.mxu0 0
        %2754 = vmatmul.mubr.bf16.gmra.mrb[0].mxu0 %v2578
        %v2755 = vpop.f32.mrb[0].mxu0
        %v2756 = vadd.f32 0.0, %v2755
        %v2757 = vpop.f32.mrb[0].mxu0
        %v2758 = vpop.f32.mrb[0].mxu0
        %v2759 = vadd.f32 0.0, %v2758
        %v2760 = vpop.f32.mrb[0].mxu0
        %2761 = vmatprep.mubr.bf16.mxu0 0
        %2762 = vmatmul.mubr.bf16.gmra.mrb[0].mxu0 %v2579
        %v2763 = vpop.f32.mrb[0].mxu0
        %v2764 = vadd.f32 0.0, %v2763
        %v2765 = vpop.f32.mrb[0].mxu0
        %v2766 = vpop.f32.mrb[0].mxu0
        %v2767 = vadd.f32 0.0, %v2766
        %v2768 = vpop.f32.mrb[0].mxu0
        %2769 = vmatprep.mubr.bf16.mxu0 0
        %2770 = vmatmul.mubr.bf16.gmra.mrb[0].mxu0 %v2580
        %v2771 = vpop.f32.mrb[0].mxu0
        %v2772 = vadd.f32 0.0, %v2771
        %v2773 = vpop.f32.mrb[0].mxu0
        %v2774 = vpop.f32.mrb[0].mxu0
        %v2775 = vadd.f32 0.0, %v2774
        %v2776 = vpop.f32.mrb[0].mxu0
        %2777 = vmatprep.mubr.bf16.mxu0 0
        %2778 = vmatmul.mubr.bf16.gmra.mrb[0].mxu0 %v2581
        %v2779 = vpop.f32.mrb[0].mxu0
        %v2780 = vadd.f32 0.0, %v2779
        %v2781 = vpop.f32.mrb[0].mxu0
        %v2782 = vpop.f32.mrb[0].mxu0
        %v2783 = vadd.f32 0.0, %v2782
        %v2784 = vpop.f32.mrb[0].mxu0
        %2785 = vmatprep.mubr.bf16.mxu0 0
        %2786 = vmatmul.mubr.bf16.gmra.mrb[0].mxu0 %v2582
        %v2787 = vpop.f32.mrb[0].mxu0
        %v2788 = vadd.f32 0.0, %v2787
        %v2789 = vpop.f32.mrb[0].mxu0
        %v2790 = vpop.f32.mrb[0].mxu0
        %v2791 = vadd.f32 0.0, %v2790
        %v2792 = vpop.f32.mrb[0].mxu0
        %2793 = vmatprep.mubr.bf16.mxu0 0
        %2794 = vmatmul.mubr.bf16.gmra.mrb[0].mxu0 %v2583
        %v2795 = vpop.f32.mrb[0].mxu0
        %v2796 = vadd.f32 0.0, %v2795
        %v2797 = vpop.f32.mrb[0].mxu0
        %v2798 = vpop.f32.mrb[0].mxu0
        %v2799 = vadd.f32 0.0, %v2798
        %v2800 = vpop.f32.mrb[0].mxu0
        %2801 = vmatprep.mubr.bf16.mxu0 0
        %2802 = vmatmul.mubr.bf16.gmra.mrb[0].mxu0 %v2584
        %v2803 = vpop.f32.mrb[0].mxu0
        %v2804 = vadd.f32 0.0, %v2803
        %v2805 = vpop.f32.mrb[0].mxu0
        %v2806 = vpop.f32.mrb[0].mxu0
        %v2807 = vadd.f32 0.0, %v2806
        %v2808 = vpop.f32.mrb[0].mxu0
        %2809 = vdwg.mxu0
        %v2810 = vadd.f32 %v2056, %v2684
        %v2811 = vadd.f32 %v2057, %v2687
        %v2812 = vadd.f32 %v2058, %v2692
        %v2813 = vadd.f32 %v2059, %v2695
        %v2814 = vadd.f32 %v2060, %v2700
        %v2815 = vadd.f32 %v2061, %v2703
        %v2816 = vadd.f32 %v2062, %v2708
        %v2817 = vadd.f32 %v2063, %v2711
        %v2818 = vadd.f32 %v2064, %v2716
        %v2819 = vadd.f32 %v2065, %v2719
        %v2820 = vadd.f32 %v2066, %v2724
        %v2821 = vadd.f32 %v2067, %v2727
        %v2822 = vadd.f32 %v2068, %v2732
        %v2823 = vadd.f32 %v2069, %v2735
        %v2824 = vadd.f32 %v2070, %v2740
        %v2825 = vadd.f32 %v2071, %v2743
        %v2826 = vadd.f32 %v2072, %v2748
        %v2827 = vadd.f32 %v2073, %v2751
        %v2828 = vadd.f32 %v2074, %v2756
        %v2829 = vadd.f32 %v2075, %v2759
        %v2830 = vadd.f32 %v2076, %v2764
        %v2831 = vadd.f32 %v2077, %v2767
        %v2832 = vadd.f32 %v2078, %v2772
        %v2833 = vadd.f32 %v2079, %v2775
        %v2834 = vadd.f32 %v2080, %v2780
        %v2835 = vadd.f32 %v2081, %v2783
        %v2836 = vadd.f32 %v2082, %v2788
        %v2837 = vadd.f32 %v2083, %v2791
        %v2838 = vadd.f32 %v2084, %v2796
        %v2839 = vadd.f32 %v2085, %v2799
        %v2840 = vadd.f32 %v2086, %v2804
        %v2841 = vadd.f32 %v2087, %v2807
        %v2842 = vld [vmem:[%s1701] sm:$0xe]
        %v2843 = vld [vmem:[%s1701 + $0xc] sm:$0xe]
        %v2844 = vld [vmem:[%s1701 + $0x18] sm:$0xe]
        %v2845 = vld [vmem:[%s1701 + $0x24] sm:$0xe]
        %v2846 = vld [vmem:[%s1701 + $0x30] sm:$0xe]
        %v2847 = vld [vmem:[%s1701 + $0x3c] sm:$0xe]
        %v2848 = vld [vmem:[%s1701 + $0x48] sm:$0xe]
        %v2849 = vld [vmem:[%s1701 + $0x54] sm:$0xe]
        %v2850 = vld [vmem:[%s1701 + $0x60] sm:$0xe]
        %v2851 = vld [vmem:[%s1701 + $0x6c] sm:$0xe]
        %v2852 = vld [vmem:[%s1701 + $0x78] sm:$0xe]
        %v2853 = vld [vmem:[%s1701 + $0x84] sm:$0xe]
        %v2854 = vld [vmem:[%s1701 + $0x90] sm:$0xe]
        %v2855 = vld [vmem:[%s1701 + $0x9c] sm:$0xe]
        %v2856 = vld [vmem:[%s1701 + $0xa8] sm:$0xe]
        %v2857 = vld [vmem:[%s1701 + $0xb4] sm:$0xe]
        %v2906 = vrot.slane %v2842, 5
        %v2907 = vrot.slane %v2906, 4
        %v2908 = vrot.slane %v2089, 5
        %v2909 = vsel %vm1266, %v2907, %v2908
        %v2910 = vrot.slane %v2908, 4
        %v2911 = vrot.slane %v2090, 5
        %v2912 = vsel %vm1266, %v2910, %v2911
        %v2913 = vrot.slane %v2843, 5
        %v2914 = vrot.slane %v2913, 4
        %v2915 = vrot.slane %v2092, 5
        %v2916 = vsel %vm1266, %v2914, %v2915
        %v2917 = vrot.slane %v2915, 4
        %v2918 = vrot.slane %v2093, 5
        %v2919 = vsel %vm1266, %v2917, %v2918
        %v2920 = vrot.slane %v2844, 5
        %v2921 = vrot.slane %v2920, 4
        %v2922 = vrot.slane %v2095, 5
        %v2923 = vsel %vm1266, %v2921, %v2922
        %v2924 = vrot.slane %v2922, 4
        %v2925 = vrot.slane %v2096, 5
        %v2926 = vsel %vm1266, %v2924, %v2925
        %v2927 = vrot.slane %v2845, 5
        %v2928 = vrot.slane %v2927, 4
        %v2929 = vrot.slane %v2098, 5
        %v2930 = vsel %vm1266, %v2928, %v2929
        %v2931 = vrot.slane %v2929, 4
        %v2932 = vrot.slane %v2099, 5
        %v2933 = vsel %vm1266, %v2931, %v2932
        %v2934 = vrot.slane %v2846, 5
        %v2935 = vrot.slane %v2934, 4
        %v2936 = vrot.slane %v2101, 5
        %v2937 = vsel %vm1266, %v2935, %v2936
        %v2938 = vrot.slane %v2936, 4
        %v2939 = vrot.slane %v2102, 5
        %v2940 = vsel %vm1266, %v2938, %v2939
        %v2941 = vrot.slane %v2847, 5
        %v2942 = vrot.slane %v2941, 4
        %v2943 = vrot.slane %v2104, 5
        %v2944 = vsel %vm1266, %v2942, %v2943
        %v2945 = vrot.slane %v2943, 4
        %v2946 = vrot.slane %v2105, 5
        %v2947 = vsel %vm1266, %v2945, %v2946
        %v2948 = vrot.slane %v2848, 5
        %v2949 = vrot.slane %v2948, 4
        %v2950 = vrot.slane %v2107, 5
        %v2951 = vsel %vm1266, %v2949, %v2950
        %v2952 = vrot.slane %v2950, 4
        %v2953 = vrot.slane %v2108, 5
        %v2954 = vsel %vm1266, %v2952, %v2953
        %v2955 = vrot.slane %v2849, 5
        %v2956 = vrot.slane %v2955, 4
        %v2957 = vrot.slane %v2110, 5
        %v2958 = vsel %vm1266, %v2956, %v2957
        %v2959 = vrot.slane %v2957, 4
        %v2960 = vrot.slane %v2111, 5
        %v2961 = vsel %vm1266, %v2959, %v2960
        %v2962 = vrot.slane %v2850, 5
        %v2963 = vrot.slane %v2962, 4
        %v2964 = vrot.slane %v2113, 5
        %v2965 = vsel %vm1266, %v2963, %v2964
        %v2966 = vrot.slane %v2964, 4
        %v2967 = vrot.slane %v2114, 5
        %v2968 = vsel %vm1266, %v2966, %v2967
        %v2969 = vrot.slane %v2851, 5
        %v2970 = vrot.slane %v2969, 4
        %v2971 = vrot.slane %v2116, 5
        %v2972 = vsel %vm1266, %v2970, %v2971
        %v2973 = vrot.slane %v2971, 4
        %v2974 = vrot.slane %v2117, 5
        %v2975 = vsel %vm1266, %v2973, %v2974
        %v2976 = vrot.slane %v2852, 5
        %v2977 = vrot.slane %v2976, 4
        %v2978 = vrot.slane %v2119, 5
        %v2979 = vsel %vm1266, %v2977, %v2978
        %v2980 = vrot.slane %v2978, 4
        %v2981 = vrot.slane %v2120, 5
        %v2982 = vsel %vm1266, %v2980, %v2981
        %v2983 = vrot.slane %v2853, 5
        %v2984 = vrot.slane %v2983, 4
        %v2985 = vrot.slane %v2122, 5
        %v2986 = vsel %vm1266, %v2984, %v2985
        %v2987 = vrot.slane %v2985, 4
        %v2988 = vrot.slane %v2123, 5
        %v2989 = vsel %vm1266, %v2987, %v2988
        %v2990 = vrot.slane %v2854, 5
        %v2991 = vrot.slane %v2990, 4
        %v2992 = vrot.slane %v2125, 5
        %v2993 = vsel %vm1266, %v2991, %v2992
        %v2994 = vrot.slane %v2992, 4
        %v2995 = vrot.slane %v2126, 5
        %v2996 = vsel %vm1266, %v2994, %v2995
        %v2997 = vrot.slane %v2855, 5
        %v2998 = vrot.slane %v2997, 4
        %v2999 = vrot.slane %v2128, 5
        %v3000 = vsel %vm1266, %v2998, %v2999
        %v3001 = vrot.slane %v2999, 4
        %v3002 = vrot.slane %v2129, 5
        %v3003 = vsel %vm1266, %v3001, %v3002
        %v3004 = vrot.slane %v2856, 5
        %v3005 = vrot.slane %v3004, 4
        %v3006 = vrot.slane %v2131, 5
        %v3007 = vsel %vm1266, %v3005, %v3006
        %v3008 = vrot.slane %v3006, 4
        %v3009 = vrot.slane %v2132, 5
        %v3010 = vsel %vm1266, %v3008, %v3009
        %v3011 = vrot.slane %v2857, 5
        %v3012 = vrot.slane %v3011, 4
        %v3013 = vrot.slane %v2134, 5
        %v3014 = vsel %vm1266, %v3012, %v3013
        %v3015 = vrot.slane %v3013, 4
        %v3016 = vrot.slane %v2135, 5
        %v3017 = vsel %vm1266, %v3015, %v3016
        %s3018 = scalar_lea.vmem %s1, 320
        %v3019 = vld [vmem:[%s3018] sm:$0xf]
        %v3020 = vld [vmem:[%s3018 + $0x4] sm:$0xf]
        %v3021 = vld [vmem:[%s3018 + $0x8] sm:$0xf]
        %v3022 = vld [vmem:[%s3018 + $0xc] sm:$0xf]
        %v3023 = vld [vmem:[%s3018 + $0x10] sm:$0xf]
        %v3024 = vld [vmem:[%s3018 + $0x14] sm:$0xf]
        %v3025 = vld [vmem:[%s3018 + $0x18] sm:$0xf]
        %v3026 = vld [vmem:[%s3018 + $0x1c] sm:$0xf]
        %v3027 = vld [vmem:[%s3018 + $0x20] sm:$0xf]
        %v3028 = vld [vmem:[%s3018 + $0x24] sm:$0xf]
        %v3029 = vld [vmem:[%s3018 + $0x28] sm:$0xf]
        %v3030 = vld [vmem:[%s3018 + $0x2c] sm:$0xf]
        %v3031 = vld [vmem:[%s3018 + $0x30] sm:$0xf]
        %v3032 = vld [vmem:[%s3018 + $0x34] sm:$0xf]
        %v3033 = vld [vmem:[%s3018 + $0x38] sm:$0xf]
        %v3034 = vld [vmem:[%s3018 + $0x3c] sm:$0xf]
        %v3035 = vunpack.c.l.b16 %v2909
        %v3036 = vunpack.c.l.b16 %v2912
        %v3037 = vunpack.c.l.b16 %v2916
        %v3038 = vunpack.c.l.b16 %v2919
        %v3039 = vunpack.c.l.b16 %v2923
        %v3040 = vunpack.c.l.b16 %v2926
        %v3041 = vunpack.c.l.b16 %v2930
        %v3042 = vunpack.c.l.b16 %v2933
        %v3043 = vunpack.c.l.b16 %v2937
        %v3044 = vunpack.c.l.b16 %v2940
        %v3045 = vunpack.c.l.b16 %v2944
        %v3046 = vunpack.c.l.b16 %v2947
        %v3047 = vunpack.c.l.b16 %v2951
        %v3048 = vunpack.c.l.b16 %v2954
        %v3049 = vunpack.c.l.b16 %v2958
        %v3050 = vunpack.c.l.b16 %v2961
        %v3051 = vunpack.c.l.b16 %v2965
        %v3052 = vunpack.c.l.b16 %v2968
        %v3053 = vunpack.c.l.b16 %v2972
        %v3054 = vunpack.c.l.b16 %v2975
        %v3055 = vunpack.c.l.b16 %v2979
        %v3056 = vunpack.c.l.b16 %v2982
        %v3057 = vunpack.c.l.b16 %v2986
        %v3058 = vunpack.c.l.b16 %v2989
        %v3059 = vunpack.c.l.b16 %v2993
        %v3060 = vunpack.c.l.b16 %v2996
        %v3061 = vunpack.c.l.b16 %v3000
        %v3062 = vunpack.c.l.b16 %v3003
        %v3063 = vunpack.c.l.b16 %v3007
        %v3064 = vunpack.c.l.b16 %v3010
        %v3065 = vunpack.c.l.b16 %v3014
        %v3066 = vunpack.c.l.b16 %v3017
        %v3067 = vpack.c.b16 %v3036, %v3035
        %v3068 = vpack.c.b16 %v3038, %v3037
        %v3069 = vpack.c.b16 %v3040, %v3039
        %v3070 = vpack.c.b16 %v3042, %v3041
        %v3071 = vpack.c.b16 %v3044, %v3043
        %v3072 = vpack.c.b16 %v3046, %v3045
        %v3073 = vpack.c.b16 %v3048, %v3047
        %v3074 = vpack.c.b16 %v3050, %v3049
        %v3075 = vpack.c.b16 %v3052, %v3051
        %v3076 = vpack.c.b16 %v3054, %v3053
        %v3077 = vpack.c.b16 %v3056, %v3055
        %v3078 = vpack.c.b16 %v3058, %v3057
        %v3079 = vpack.c.b16 %v3060, %v3059
        %v3080 = vpack.c.b16 %v3062, %v3061
        %v3081 = vpack.c.b16 %v3064, %v3063
        %v3082 = vpack.c.b16 %v3066, %v3065
        %v3115 = vunpack.c.l.b16 %v3019
        %v3116 = vunpack.c.l.b16 %v3020
        %v3117 = vunpack.c.l.b16 %v3021
        %v3118 = vunpack.c.l.b16 %v3022
        %v3119 = vunpack.c.l.b16 %v3023
        %v3120 = vunpack.c.l.b16 %v3024
        %v3121 = vunpack.c.l.b16 %v3025
        %v3122 = vunpack.c.l.b16 %v3026
        %v3123 = vunpack.c.l.b16 %v3027
        %v3124 = vunpack.c.l.b16 %v3028
        %v3125 = vunpack.c.l.b16 %v3029
        %v3126 = vunpack.c.l.b16 %v3030
        %v3127 = vunpack.c.l.b16 %v3031
        %v3128 = vunpack.c.l.b16 %v3032
        %v3129 = vunpack.c.l.b16 %v3033
        %v3130 = vunpack.c.l.b16 %v3034
        %v3131 = vpack.c.b16 %v3116, %v3115
        %v3132 = vpack.c.b16 %v3118, %v3117
        %v3133 = vpack.c.b16 %v3120, %v3119
        %v3134 = vpack.c.b16 %v3122, %v3121
        %v3135 = vpack.c.b16 %v3124, %v3123
        %v3136 = vpack.c.b16 %v3126, %v3125
        %v3137 = vpack.c.b16 %v3128, %v3127
        %v3138 = vpack.c.b16 %v3130, %v3129
        %3147 = vmatprep.subr.bf16.mxu0 0
        %3148 = vmatpush1.bf16.msra.mxu0 %v3131
        %3149 = vmatprep.subr.bf16.mxu0 0
        %3150 = vmatpush1.bf16.msra.mxu0 %v3132
        %3151 = vmatprep.subr.bf16.mxu0 0
        %3152 = vmatpush1.bf16.msra.mxu0 %v3133
        %3153 = vmatprep.subr.bf16.mxu0 0
        %3154 = vmatpush1.bf16.msra.mxu0 %v3134
        %3155 = vmatprep.subr.bf16.mxu0 0
        %3156 = vmatpush1.bf16.msra.mxu0 %v3135
        %3157 = vmatprep.subr.bf16.mxu0 0
        %3158 = vmatpush1.bf16.msra.mxu0 %v3136
        %3159 = vmatprep.subr.bf16.mxu0 0
        %3160 = vmatpush1.bf16.msra.mxu0 %v3137
        %3161 = vmatprep.subr.bf16.mxu0 0
        %3162 = vmatpush1.bf16.msra.mxu0 %v3138
        %3163 = vmatprep.subr.bf16.mxu0 0
        %3164 = vmatpush1.bf16.msra.mxu0 0
        %3165 = vmatprep.subr.bf16.mxu0 0
        %3166 = vmatpush1.bf16.msra.mxu0 0
        %3167 = vmatprep.subr.bf16.mxu0 0
        %3168 = vmatpush1.bf16.msra.mxu0 0
        %3169 = vmatprep.subr.bf16.mxu0 0
        %3170 = vmatpush1.bf16.msra.mxu0 0
        %3171 = vmatprep.subr.bf16.mxu0 0
        %3172 = vmatpush1.bf16.msra.mxu0 0
        %3173 = vmatprep.subr.bf16.mxu0 0
        %3174 = vmatpush1.bf16.msra.mxu0 0
        %3175 = vmatprep.subr.bf16.mxu0 0
        %3176 = vmatpush1.bf16.msra.mxu0 0
        %3177 = vmatprep.subr.bf16.mxu0 0
        %3178 = vmatpush1.bf16.msra.mxu0 0
        %3179 = vmatprep.mubr.bf16.mxu0 0
        %3180 = vmatmul.mubr.bf16.gmra.mrb[0].mxu0 %v3067
        %v3181 = vpop.f32.mrb[0].mxu0
        %v3182 = vadd.f32 0.0, %v3181
        %v3183 = vpop.f32.mrb[0].mxu0
        %v3184 = vpop.f32.mrb[0].mxu0
        %v3185 = vadd.f32 0.0, %v3184
        %v3186 = vpop.f32.mrb[0].mxu0
        %3187 = vmatprep.mubr.bf16.mxu0 0
        %3188 = vmatmul.mubr.bf16.gmra.mrb[0].mxu0 %v3068
        %v3189 = vpop.f32.mrb[0].mxu0
        %v3190 = vadd.f32 0.0, %v3189
        %v3191 = vpop.f32.mrb[0].mxu0
        %v3192 = vpop.f32.mrb[0].mxu0
        %v3193 = vadd.f32 0.0, %v3192
        %v3194 = vpop.f32.mrb[0].mxu0
        %3195 = vmatprep.mubr.bf16.mxu0 0
        %3196 = vmatmul.mubr.bf16.gmra.mrb[0].mxu0 %v3069
        %v3197 = vpop.f32.mrb[0].mxu0
        %v3198 = vadd.f32 0.0, %v3197
        %v3199 = vpop.f32.mrb[0].mxu0
        %v3200 = vpop.f32.mrb[0].mxu0
        %v3201 = vadd.f32 0.0, %v3200
        %v3202 = vpop.f32.mrb[0].mxu0
        %3203 = vmatprep.mubr.bf16.mxu0 0
        %3204 = vmatmul.mubr.bf16.gmra.mrb[0].mxu0 %v3070
        %v3205 = vpop.f32.mrb[0].mxu0
        %v3206 = vadd.f32 0.0, %v3205
        %v3207 = vpop.f32.mrb[0].mxu0
        %v3208 = vpop.f32.mrb[0].mxu0
        %v3209 = vadd.f32 0.0, %v3208
        %v3210 = vpop.f32.mrb[0].mxu0
        %3211 = vmatprep.mubr.bf16.mxu0 0
        %3212 = vmatmul.mubr.bf16.gmra.mrb[0].mxu0 %v3071
        %v3213 = vpop.f32.mrb[0].mxu0
        %v3214 = vadd.f32 0.0, %v3213
        %v3215 = vpop.f32.mrb[0].mxu0
        %v3216 = vpop.f32.mrb[0].mxu0
        %v3217 = vadd.f32 0.0, %v3216
        %v3218 = vpop.f32.mrb[0].mxu0
        %3219 = vmatprep.mubr.bf16.mxu0 0
        %3220 = vmatmul.mubr.bf16.gmra.mrb[0].mxu0 %v3072
        %v3221 = vpop.f32.mrb[0].mxu0
        %v3222 = vadd.f32 0.0, %v3221
        %v3223 = vpop.f32.mrb[0].mxu0
        %v3224 = vpop.f32.mrb[0].mxu0
        %v3225 = vadd.f32 0.0, %v3224
        %v3226 = vpop.f32.mrb[0].mxu0
        %3227 = vmatprep.mubr.bf16.mxu0 0
        %3228 = vmatmul.mubr.bf16.gmra.mrb[0].mxu0 %v3073
        %v3229 = vpop.f32.mrb[0].mxu0
        %v3230 = vadd.f32 0.0, %v3229
        %v3231 = vpop.f32.mrb[0].mxu0
        %v3232 = vpop.f32.mrb[0].mxu0
        %v3233 = vadd.f32 0.0, %v3232
        %v3234 = vpop.f32.mrb[0].mxu0
        %3235 = vmatprep.mubr.bf16.mxu0 0
        %3236 = vmatmul.mubr.bf16.gmra.mrb[0].mxu0 %v3074
        %v3237 = vpop.f32.mrb[0].mxu0
        %v3238 = vadd.f32 0.0, %v3237
        %v3239 = vpop.f32.mrb[0].mxu0
        %v3240 = vpop.f32.mrb[0].mxu0
        %v3241 = vadd.f32 0.0, %v3240
        %v3242 = vpop.f32.mrb[0].mxu0
        %3243 = vmatprep.mubr.bf16.mxu0 0
        %3244 = vmatmul.mubr.bf16.gmra.mrb[0].mxu0 %v3075
        %v3245 = vpop.f32.mrb[0].mxu0
        %v3246 = vadd.f32 0.0, %v3245
        %v3247 = vpop.f32.mrb[0].mxu0
        %v3248 = vpop.f32.mrb[0].mxu0
        %v3249 = vadd.f32 0.0, %v3248
        %v3250 = vpop.f32.mrb[0].mxu0
        %3251 = vmatprep.mubr.bf16.mxu0 0
        %3252 = vmatmul.mubr.bf16.gmra.mrb[0].mxu0 %v3076
        %v3253 = vpop.f32.mrb[0].mxu0
        %v3254 = vadd.f32 0.0, %v3253
        %v3255 = vpop.f32.mrb[0].mxu0
        %v3256 = vpop.f32.mrb[0].mxu0
        %v3257 = vadd.f32 0.0, %v3256
        %v3258 = vpop.f32.mrb[0].mxu0
        %3259 = vmatprep.mubr.bf16.mxu0 0
        %3260 = vmatmul.mubr.bf16.gmra.mrb[0].mxu0 %v3077
        %v3261 = vpop.f32.mrb[0].mxu0
        %v3262 = vadd.f32 0.0, %v3261
        %v3263 = vpop.f32.mrb[0].mxu0
        %v3264 = vpop.f32.mrb[0].mxu0
        %v3265 = vadd.f32 0.0, %v3264
        %v3266 = vpop.f32.mrb[0].mxu0
        %3267 = vmatprep.mubr.bf16.mxu0 0
        %3268 = vmatmul.mubr.bf16.gmra.mrb[0].mxu0 %v3078
        %v3269 = vpop.f32.mrb[0].mxu0
        %v3270 = vadd.f32 0.0, %v3269
        %v3271 = vpop.f32.mrb[0].mxu0
        %v3272 = vpop.f32.mrb[0].mxu0
        %v3273 = vadd.f32 0.0, %v3272
        %v3274 = vpop.f32.mrb[0].mxu0
        %3275 = vmatprep.mubr.bf16.mxu0 0
        %3276 = vmatmul.mubr.bf16.gmra.mrb[0].mxu0 %v3079
        %v3277 = vpop.f32.mrb[0].mxu0
        %v3278 = vadd.f32 0.0, %v3277
        %v3279 = vpop.f32.mrb[0].mxu0
        %v3280 = vpop.f32.mrb[0].mxu0
        %v3281 = vadd.f32 0.0, %v3280
        %v3282 = vpop.f32.mrb[0].mxu0
        %3283 = vmatprep.mubr.bf16.mxu0 0
        %3284 = vmatmul.mubr.bf16.gmra.mrb[0].mxu0 %v3080
        %v3285 = vpop.f32.mrb[0].mxu0
        %v3286 = vadd.f32 0.0, %v3285
        %v3287 = vpop.f32.mrb[0].mxu0
        %v3288 = vpop.f32.mrb[0].mxu0
        %v3289 = vadd.f32 0.0, %v3288
        %v3290 = vpop.f32.mrb[0].mxu0
        %3291 = vmatprep.mubr.bf16.mxu0 0
        %3292 = vmatmul.mubr.bf16.gmra.mrb[0].mxu0 %v3081
        %v3293 = vpop.f32.mrb[0].mxu0
        %v3294 = vadd.f32 0.0, %v3293
        %v3295 = vpop.f32.mrb[0].mxu0
        %v3296 = vpop.f32.mrb[0].mxu0
        %v3297 = vadd.f32 0.0, %v3296
        %v3298 = vpop.f32.mrb[0].mxu0
        %3299 = vmatprep.mubr.bf16.mxu0 0
        %3300 = vmatmul.mubr.bf16.gmra.mrb[0].mxu0 %v3082
        %v3301 = vpop.f32.mrb[0].mxu0
        %v3302 = vadd.f32 0.0, %v3301
        %v3303 = vpop.f32.mrb[0].mxu0
        %v3304 = vpop.f32.mrb[0].mxu0
        %v3305 = vadd.f32 0.0, %v3304
        %v3306 = vpop.f32.mrb[0].mxu0
        %3307 = vdwg.mxu0
        %v3308 = vadd.f32 %v2810, %v3182
        %v3309 = vadd.f32 %v2811, %v3185
        %v3310 = vadd.f32 %v2812, %v3190
        %v3311 = vadd.f32 %v2813, %v3193
        %v3312 = vadd.f32 %v2814, %v3198
        %v3313 = vadd.f32 %v2815, %v3201
        %v3314 = vadd.f32 %v2816, %v3206
        %v3315 = vadd.f32 %v2817, %v3209
        %v3316 = vadd.f32 %v2818, %v3214
        %v3317 = vadd.f32 %v2819, %v3217
        %v3318 = vadd.f32 %v2820, %v3222
        %v3319 = vadd.f32 %v2821, %v3225
        %v3320 = vadd.f32 %v2822, %v3230
        %v3321 = vadd.f32 %v2823, %v3233
        %v3322 = vadd.f32 %v2824, %v3238
        %v3323 = vadd.f32 %v2825, %v3241
        %v3324 = vadd.f32 %v2826, %v3246
        %v3325 = vadd.f32 %v2827, %v3249
        %v3326 = vadd.f32 %v2828, %v3254
        %v3327 = vadd.f32 %v2829, %v3257
        %v3328 = vadd.f32 %v2830, %v3262
        %v3329 = vadd.f32 %v2831, %v3265
        %v3330 = vadd.f32 %v2832, %v3270
        %v3331 = vadd.f32 %v2833, %v3273
        %v3332 = vadd.f32 %v2834, %v3278
        %v3333 = vadd.f32 %v2835, %v3281
        %v3334 = vadd.f32 %v2836, %v3286
        %v3335 = vadd.f32 %v2837, %v3289
        %v3336 = vadd.f32 %v2838, %v3294
        %v3337 = vadd.f32 %v2839, %v3297
        %v3338 = vadd.f32 %v2840, %v3302
        %v3339 = vadd.f32 %v2841, %v3305
        %s3340 = scalar_lea.vmem %s168, 24
        %v3341 = vld [vmem:[%s3340] sm:$0xf]
        %v3342 = vld [vmem:[%s3340 + $0x4] sm:$0xf]
        %v3343 = vld [vmem:[%s3340 + $0xc] sm:$0xf]
        %v3344 = vld [vmem:[%s3340 + $0x10] sm:$0xf]
        %v3345 = vld [vmem:[%s3340 + $0x18] sm:$0xf]
        %v3346 = vld [vmem:[%s3340 + $0x1c] sm:$0xf]
        %v3347 = vld [vmem:[%s3340 + $0x24] sm:$0xf]
        %v3348 = vld [vmem:[%s3340 + $0x28] sm:$0xf]
        %v3349 = vld [vmem:[%s3340 + $0x30] sm:$0xf]
        %v3350 = vld [vmem:[%s3340 + $0x34] sm:$0xf]
        %v3351 = vld [vmem:[%s3340 + $0x3c] sm:$0xf]
        %v3352 = vld [vmem:[%s3340 + $0x40] sm:$0xf]
        %v3353 = vld [vmem:[%s3340 + $0x48] sm:$0xf]
        %v3354 = vld [vmem:[%s3340 + $0x4c] sm:$0xf]
        %v3355 = vld [vmem:[%s3340 + $0x54] sm:$0xf]
        %v3356 = vld [vmem:[%s3340 + $0x58] sm:$0xf]
        %v3357 = vld [vmem:[%s3340 + $0x60] sm:$0xf]
        %v3358 = vld [vmem:[%s3340 + $0x64] sm:$0xf]
        %v3359 = vld [vmem:[%s3340 + $0x6c] sm:$0xf]
        %v3360 = vld [vmem:[%s3340 + $0x70] sm:$0xf]
        %v3361 = vld [vmem:[%s3340 + $0x78] sm:$0xf]
        %v3362 = vld [vmem:[%s3340 + $0x7c] sm:$0xf]
        %v3363 = vld [vmem:[%s3340 + $0x84] sm:$0xf]
        %v3364 = vld [vmem:[%s3340 + $0x88] sm:$0xf]
        %v3365 = vld [vmem:[%s3340 + $0x90] sm:$0xf]
        %v3366 = vld [vmem:[%s3340 + $0x94] sm:$0xf]
        %v3367 = vld [vmem:[%s3340 + $0x9c] sm:$0xf]
        %v3368 = vld [vmem:[%s3340 + $0xa0] sm:$0xf]
        %v3369 = vld [vmem:[%s3340 + $0xa8] sm:$0xf]
        %v3370 = vld [vmem:[%s3340 + $0xac] sm:$0xf]
        %v3371 = vld [vmem:[%s3340 + $0xb4] sm:$0xf]
        %v3372 = vld [vmem:[%s3340 + $0xb8] sm:$0xf]
        %s3373 = scalar_lea.vmem %s1, 384
        %v3374 = vld [vmem:[%s3373] sm:$0xf]
        %v3375 = vld [vmem:[%s3373 + $0x4] sm:$0xf]
        %v3376 = vld [vmem:[%s3373 + $0x8] sm:$0xf]
        %v3377 = vld [vmem:[%s3373 + $0xc] sm:$0xf]
        %v3378 = vld [vmem:[%s3373 + $0x10] sm:$0xf]
        %v3379 = vld [vmem:[%s3373 + $0x14] sm:$0xf]
        %v3380 = vld [vmem:[%s3373 + $0x18] sm:$0xf]
        %v3381 = vld [vmem:[%s3373 + $0x1c] sm:$0xf]
        %v3382 = vld [vmem:[%s3373 + $0x20] sm:$0xf]
        %v3383 = vld [vmem:[%s3373 + $0x24] sm:$0xf]
        %v3384 = vld [vmem:[%s3373 + $0x28] sm:$0xf]
        %v3385 = vld [vmem:[%s3373 + $0x2c] sm:$0xf]
        %v3386 = vld [vmem:[%s3373 + $0x30] sm:$0xf]
        %v3387 = vld [vmem:[%s3373 + $0x34] sm:$0xf]
        %v3388 = vld [vmem:[%s3373 + $0x38] sm:$0xf]
        %v3389 = vld [vmem:[%s3373 + $0x3c] sm:$0xf]
        %v3422 = vunpack.c.l.b16 %v3341
        %v3423 = vunpack.c.l.b16 %v3342
        %v3424 = vunpack.c.l.b16 %v3343
        %v3425 = vunpack.c.l.b16 %v3344
        %v3426 = vunpack.c.l.b16 %v3345
        %v3427 = vunpack.c.l.b16 %v3346
        %v3428 = vunpack.c.l.b16 %v3347
        %v3429 = vunpack.c.l.b16 %v3348
        %v3430 = vunpack.c.l.b16 %v3349
        %v3431 = vunpack.c.l.b16 %v3350
        %v3432 = vunpack.c.l.b16 %v3351
        %v3433 = vunpack.c.l.b16 %v3352
        %v3434 = vunpack.c.l.b16 %v3353
        %v3435 = vunpack.c.l.b16 %v3354
        %v3436 = vunpack.c.l.b16 %v3355
        %v3437 = vunpack.c.l.b16 %v3356
        %v3438 = vunpack.c.l.b16 %v3357
        %v3439 = vunpack.c.l.b16 %v3358
        %v3440 = vunpack.c.l.b16 %v3359
        %v3441 = vunpack.c.l.b16 %v3360
        %v3442 = vunpack.c.l.b16 %v3361
        %v3443 = vunpack.c.l.b16 %v3362
        %v3444 = vunpack.c.l.b16 %v3363
        %v3445 = vunpack.c.l.b16 %v3364
        %v3446 = vunpack.c.l.b16 %v3365
        %v3447 = vunpack.c.l.b16 %v3366
        %v3448 = vunpack.c.l.b16 %v3367
        %v3449 = vunpack.c.l.b16 %v3368
        %v3450 = vunpack.c.l.b16 %v3369
        %v3451 = vunpack.c.l.b16 %v3370
        %v3452 = vunpack.c.l.b16 %v3371
        %v3453 = vunpack.c.l.b16 %v3372
        %v3454 = vpack.c.b16 %v3423, %v3422
        %v3455 = vpack.c.b16 %v3425, %v3424
        %v3456 = vpack.c.b16 %v3427, %v3426
        %v3457 = vpack.c.b16 %v3429, %v3428
        %v3458 = vpack.c.b16 %v3431, %v3430
        %v3459 = vpack.c.b16 %v3433, %v3432
        %v3460 = vpack.c.b16 %v3435, %v3434
        %v3461 = vpack.c.b16 %v3437, %v3436
        %v3462 = vpack.c.b16 %v3439, %v3438
        %v3463 = vpack.c.b16 %v3441, %v3440
        %v3464 = vpack.c.b16 %v3443, %v3442
        %v3465 = vpack.c.b16 %v3445, %v3444
        %v3466 = vpack.c.b16 %v3447, %v3446
        %v3467 = vpack.c.b16 %v3449, %v3448
        %v3468 = vpack.c.b16 %v3451, %v3450
        %v3469 = vpack.c.b16 %v3453, %v3452
        %v3502 = vunpack.c.l.b16 %v3374
        %v3503 = vunpack.c.l.b16 %v3375
        %v3504 = vunpack.c.l.b16 %v3376
        %v3505 = vunpack.c.l.b16 %v3377
        %v3506 = vunpack.c.l.b16 %v3378
        %v3507 = vunpack.c.l.b16 %v3379
        %v3508 = vunpack.c.l.b16 %v3380
        %v3509 = vunpack.c.l.b16 %v3381
        %v3510 = vunpack.c.l.b16 %v3382
        %v3511 = vunpack.c.l.b16 %v3383
        %v3512 = vunpack.c.l.b16 %v3384
        %v3513 = vunpack.c.l.b16 %v3385
        %v3514 = vunpack.c.l.b16 %v3386
        %v3515 = vunpack.c.l.b16 %v3387
        %v3516 = vunpack.c.l.b16 %v3388
        %v3517 = vunpack.c.l.b16 %v3389
        %v3518 = vpack.c.b16 %v3503, %v3502
        %v3519 = vpack.c.b16 %v3505, %v3504
        %v3520 = vpack.c.b16 %v3507, %v3506
        %v3521 = vpack.c.b16 %v3509, %v3508
        %v3522 = vpack.c.b16 %v3511, %v3510
        %v3523 = vpack.c.b16 %v3513, %v3512
        %v3524 = vpack.c.b16 %v3515, %v3514
        %v3525 = vpack.c.b16 %v3517, %v3516
        %3534 = vmatprep.subr.bf16.mxu0 0
        %3535 = vmatpush1.bf16.msra.mxu0 %v3518
        %3536 = vmatprep.subr.bf16.mxu0 0
        %3537 = vmatpush1.bf16.msra.mxu0 %v3519
        %3538 = vmatprep.subr.bf16.mxu0 0
        %3539 = vmatpush1.bf16.msra.mxu0 %v3520
        %3540 = vmatprep.subr.bf16.mxu0 0
        %3541 = vmatpush1.bf16.msra.mxu0 %v3521
        %3542 = vmatprep.subr.bf16.mxu0 0
        %3543 = vmatpush1.bf16.msra.mxu0 %v3522
        %3544 = vmatprep.subr.bf16.mxu0 0
        %3545 = vmatpush1.bf16.msra.mxu0 %v3523
        %3546 = vmatprep.subr.bf16.mxu0 0
        %3547 = vmatpush1.bf16.msra.mxu0 %v3524
        %3548 = vmatprep.subr.bf16.mxu0 0
        %3549 = vmatpush1.bf16.msra.mxu0 %v3525
        %3550 = vmatprep.subr.bf16.mxu0 0
        %3551 = vmatpush1.bf16.msra.mxu0 0
        %3552 = vmatprep.subr.bf16.mxu0 0
        %3553 = vmatpush1.bf16.msra.mxu0 0
        %3554 = vmatprep.subr.bf16.mxu0 0
        %3555 = vmatpush1.bf16.msra.mxu0 0
        %3556 = vmatprep.subr.bf16.mxu0 0
        %3557 = vmatpush1.bf16.msra.mxu0 0
        %3558 = vmatprep.subr.bf16.mxu0 0
        %3559 = vmatpush1.bf16.msra.mxu0 0
        %3560 = vmatprep.subr.bf16.mxu0 0
        %3561 = vmatpush1.bf16.msra.mxu0 0
        %3562 = vmatprep.subr.bf16.mxu0 0
        %3563 = vmatpush1.bf16.msra.mxu0 0
        %3564 = vmatprep.subr.bf16.mxu0 0
        %3565 = vmatpush1.bf16.msra.mxu0 0
        %3566 = vmatprep.mubr.bf16.mxu0 0
        %3567 = vmatmul.mubr.bf16.gmra.mrb[0].mxu0 %v3454
        %v3568 = vpop.f32.mrb[0].mxu0
        %v3569 = vadd.f32 0.0, %v3568
        %v3570 = vpop.f32.mrb[0].mxu0
        %v3571 = vpop.f32.mrb[0].mxu0
        %v3572 = vadd.f32 0.0, %v3571
        %v3573 = vpop.f32.mrb[0].mxu0
        %3574 = vmatprep.mubr.bf16.mxu0 0
        %3575 = vmatmul.mubr.bf16.gmra.mrb[0].mxu0 %v3455
        %v3576 = vpop.f32.mrb[0].mxu0
        %v3577 = vadd.f32 0.0, %v3576
        %v3578 = vpop.f32.mrb[0].mxu0
        %v3579 = vpop.f32.mrb[0].mxu0
        %v3580 = vadd.f32 0.0, %v3579
        %v3581 = vpop.f32.mrb[0].mxu0
        %3582 = vmatprep.mubr.bf16.mxu0 0
        %3583 = vmatmul.mubr.bf16.gmra.mrb[0].mxu0 %v3456
        %v3584 = vpop.f32.mrb[0].mxu0
        %v3585 = vadd.f32 0.0, %v3584
        %v3586 = vpop.f32.mrb[0].mxu0
        %v3587 = vpop.f32.mrb[0].mxu0
        %v3588 = vadd.f32 0.0, %v3587
        %v3589 = vpop.f32.mrb[0].mxu0
        %3590 = vmatprep.mubr.bf16.mxu0 0
        %3591 = vmatmul.mubr.bf16.gmra.mrb[0].mxu0 %v3457
        %v3592 = vpop.f32.mrb[0].mxu0
        %v3593 = vadd.f32 0.0, %v3592
        %v3594 = vpop.f32.mrb[0].mxu0
        %v3595 = vpop.f32.mrb[0].mxu0
        %v3596 = vadd.f32 0.0, %v3595
        %v3597 = vpop.f32.mrb[0].mxu0
        %3598 = vmatprep.mubr.bf16.mxu0 0
        %3599 = vmatmul.mubr.bf16.gmra.mrb[0].mxu0 %v3458
        %v3600 = vpop.f32.mrb[0].mxu0
        %v3601 = vadd.f32 0.0, %v3600
        %v3602 = vpop.f32.mrb[0].mxu0
        %v3603 = vpop.f32.mrb[0].mxu0
        %v3604 = vadd.f32 0.0, %v3603
        %v3605 = vpop.f32.mrb[0].mxu0
        %3606 = vmatprep.mubr.bf16.mxu0 0
        %3607 = vmatmul.mubr.bf16.gmra.mrb[0].mxu0 %v3459
        %v3608 = vpop.f32.mrb[0].mxu0
        %v3609 = vadd.f32 0.0, %v3608
        %v3610 = vpop.f32.mrb[0].mxu0
        %v3611 = vpop.f32.mrb[0].mxu0
        %v3612 = vadd.f32 0.0, %v3611
        %v3613 = vpop.f32.mrb[0].mxu0
        %3614 = vmatprep.mubr.bf16.mxu0 0
        %3615 = vmatmul.mubr.bf16.gmra.mrb[0].mxu0 %v3460
        %v3616 = vpop.f32.mrb[0].mxu0
        %v3617 = vadd.f32 0.0, %v3616
        %v3618 = vpop.f32.mrb[0].mxu0
        %v3619 = vpop.f32.mrb[0].mxu0
        %v3620 = vadd.f32 0.0, %v3619
        %v3621 = vpop.f32.mrb[0].mxu0
        %3622 = vmatprep.mubr.bf16.mxu0 0
        %3623 = vmatmul.mubr.bf16.gmra.mrb[0].mxu0 %v3461
        %v3624 = vpop.f32.mrb[0].mxu0
        %v3625 = vadd.f32 0.0, %v3624
        %v3626 = vpop.f32.mrb[0].mxu0
        %v3627 = vpop.f32.mrb[0].mxu0
        %v3628 = vadd.f32 0.0, %v3627
        %v3629 = vpop.f32.mrb[0].mxu0
        %3630 = vmatprep.mubr.bf16.mxu0 0
        %3631 = vmatmul.mubr.bf16.gmra.mrb[0].mxu0 %v3462
        %v3632 = vpop.f32.mrb[0].mxu0
        %v3633 = vadd.f32 0.0, %v3632
        %v3634 = vpop.f32.mrb[0].mxu0
        %v3635 = vpop.f32.mrb[0].mxu0
        %v3636 = vadd.f32 0.0, %v3635
        %v3637 = vpop.f32.mrb[0].mxu0
        %3638 = vmatprep.mubr.bf16.mxu0 0
        %3639 = vmatmul.mubr.bf16.gmra.mrb[0].mxu0 %v3463
        %v3640 = vpop.f32.mrb[0].mxu0
        %v3641 = vadd.f32 0.0, %v3640
        %v3642 = vpop.f32.mrb[0].mxu0
        %v3643 = vpop.f32.mrb[0].mxu0
        %v3644 = vadd.f32 0.0, %v3643
        %v3645 = vpop.f32.mrb[0].mxu0
        %3646 = vmatprep.mubr.bf16.mxu0 0
        %3647 = vmatmul.mubr.bf16.gmra.mrb[0].mxu0 %v3464
        %v3648 = vpop.f32.mrb[0].mxu0
        %v3649 = vadd.f32 0.0, %v3648
        %v3650 = vpop.f32.mrb[0].mxu0
        %v3651 = vpop.f32.mrb[0].mxu0
        %v3652 = vadd.f32 0.0, %v3651
        %v3653 = vpop.f32.mrb[0].mxu0
        %3654 = vmatprep.mubr.bf16.mxu0 0
        %3655 = vmatmul.mubr.bf16.gmra.mrb[0].mxu0 %v3465
        %v3656 = vpop.f32.mrb[0].mxu0
        %v3657 = vadd.f32 0.0, %v3656
        %v3658 = vpop.f32.mrb[0].mxu0
        %v3659 = vpop.f32.mrb[0].mxu0
        %v3660 = vadd.f32 0.0, %v3659
        %v3661 = vpop.f32.mrb[0].mxu0
        %3662 = vmatprep.mubr.bf16.mxu0 0
        %3663 = vmatmul.mubr.bf16.gmra.mrb[0].mxu0 %v3466
        %v3664 = vpop.f32.mrb[0].mxu0
        %v3665 = vadd.f32 0.0, %v3664
        %v3666 = vpop.f32.mrb[0].mxu0
        %v3667 = vpop.f32.mrb[0].mxu0
        %v3668 = vadd.f32 0.0, %v3667
        %v3669 = vpop.f32.mrb[0].mxu0
        %3670 = vmatprep.mubr.bf16.mxu0 0
        %3671 = vmatmul.mubr.bf16.gmra.mrb[0].mxu0 %v3467
        %v3672 = vpop.f32.mrb[0].mxu0
        %v3673 = vadd.f32 0.0, %v3672
        %v3674 = vpop.f32.mrb[0].mxu0
        %v3675 = vpop.f32.mrb[0].mxu0
        %v3676 = vadd.f32 0.0, %v3675
        %v3677 = vpop.f32.mrb[0].mxu0
        %3678 = vmatprep.mubr.bf16.mxu0 0
        %3679 = vmatmul.mubr.bf16.gmra.mrb[0].mxu0 %v3468
        %v3680 = vpop.f32.mrb[0].mxu0
        %v3681 = vadd.f32 0.0, %v3680
        %v3682 = vpop.f32.mrb[0].mxu0
        %v3683 = vpop.f32.mrb[0].mxu0
        %v3684 = vadd.f32 0.0, %v3683
        %v3685 = vpop.f32.mrb[0].mxu0
        %3686 = vmatprep.mubr.bf16.mxu0 0
        %3687 = vmatmul.mubr.bf16.gmra.mrb[0].mxu0 %v3469
        %v3688 = vpop.f32.mrb[0].mxu0
        %v3689 = vadd.f32 0.0, %v3688
        %v3690 = vpop.f32.mrb[0].mxu0
        %v3691 = vpop.f32.mrb[0].mxu0
        %v3692 = vadd.f32 0.0, %v3691
        %v3693 = vpop.f32.mrb[0].mxu0
        %3694 = vdwg.mxu0
        %v3695 = vadd.f32 %v3308, %v3569
        %v3696 = vadd.f32 %v3309, %v3572
        %v3697 = vadd.f32 %v3310, %v3577
        %v3698 = vadd.f32 %v3311, %v3580
        %v3699 = vadd.f32 %v3312, %v3585
        %v3700 = vadd.f32 %v3313, %v3588
        %v3701 = vadd.f32 %v3314, %v3593
        %v3702 = vadd.f32 %v3315, %v3596
        %v3703 = vadd.f32 %v3316, %v3601
        %v3704 = vadd.f32 %v3317, %v3604
        %v3705 = vadd.f32 %v3318, %v3609
        %v3706 = vadd.f32 %v3319, %v3612
        %v3707 = vadd.f32 %v3320, %v3617
        %v3708 = vadd.f32 %v3321, %v3620
        %v3709 = vadd.f32 %v3322, %v3625
        %v3710 = vadd.f32 %v3323, %v3628
        %v3711 = vadd.f32 %v3324, %v3633
        %v3712 = vadd.f32 %v3325, %v3636
        %v3713 = vadd.f32 %v3326, %v3641
        %v3714 = vadd.f32 %v3327, %v3644
        %v3715 = vadd.f32 %v3328, %v3649
        %v3716 = vadd.f32 %v3329, %v3652
        %v3717 = vadd.f32 %v3330, %v3657
        %v3718 = vadd.f32 %v3331, %v3660
        %v3719 = vadd.f32 %v3332, %v3665
        %v3720 = vadd.f32 %v3333, %v3668
        %v3721 = vadd.f32 %v3334, %v3673
        %v3722 = vadd.f32 %v3335, %v3676
        %v3723 = vadd.f32 %v3336, %v3681
        %v3724 = vadd.f32 %v3337, %v3684
        %v3725 = vadd.f32 %v3338, %v3689
        %v3726 = vadd.f32 %v3339, %v3692
        %v3727 = vld [vmem:[%s3340] sm:$0xf]
        %v3728 = vld [vmem:[%s3340 + $0x4] sm:$0xf]
        %v3729 = vld [vmem:[%s3340 + $0x8] sm:$0x1]
        %v3730 = vld [vmem:[%s3340 + $0xc] sm:$0xf]
        %v3731 = vld [vmem:[%s3340 + $0x10] sm:$0xf]
        %v3732 = vld [vmem:[%s3340 + $0x14] sm:$0x1]
        %v3733 = vld [vmem:[%s3340 + $0x18] sm:$0xf]
        %v3734 = vld [vmem:[%s3340 + $0x1c] sm:$0xf]
        %v3735 = vld [vmem:[%s3340 + $0x20] sm:$0x1]
        %v3736 = vld [vmem:[%s3340 + $0x24] sm:$0xf]
        %v3737 = vld [vmem:[%s3340 + $0x28] sm:$0xf]
        %v3738 = vld [vmem:[%s3340 + $0x2c] sm:$0x1]
        %v3739 = vld [vmem:[%s3340 + $0x30] sm:$0xf]
        %v3740 = vld [vmem:[%s3340 + $0x34] sm:$0xf]
        %v3741 = vld [vmem:[%s3340 + $0x38] sm:$0x1]
        %v3742 = vld [vmem:[%s3340 + $0x3c] sm:$0xf]
        %v3743 = vld [vmem:[%s3340 + $0x40] sm:$0xf]
        %v3744 = vld [vmem:[%s3340 + $0x44] sm:$0x1]
        %v3745 = vld [vmem:[%s3340 + $0x48] sm:$0xf]
        %v3746 = vld [vmem:[%s3340 + $0x4c] sm:$0xf]
        %v3747 = vld [vmem:[%s3340 + $0x50] sm:$0x1]
        %v3748 = vld [vmem:[%s3340 + $0x54] sm:$0xf]
        %v3749 = vld [vmem:[%s3340 + $0x58] sm:$0xf]
        %v3750 = vld [vmem:[%s3340 + $0x5c] sm:$0x1]
        %v3751 = vld [vmem:[%s3340 + $0x60] sm:$0xf]
        %v3752 = vld [vmem:[%s3340 + $0x64] sm:$0xf]
        %v3753 = vld [vmem:[%s3340 + $0x68] sm:$0x1]
        %v3754 = vld [vmem:[%s3340 + $0x6c] sm:$0xf]
        %v3755 = vld [vmem:[%s3340 + $0x70] sm:$0xf]
        %v3756 = vld [vmem:[%s3340 + $0x74] sm:$0x1]
        %v3757 = vld [vmem:[%s3340 + $0x78] sm:$0xf]
        %v3758 = vld [vmem:[%s3340 + $0x7c] sm:$0xf]
        %v3759 = vld [vmem:[%s3340 + $0x80] sm:$0x1]
        %v3760 = vld [vmem:[%s3340 + $0x84] sm:$0xf]
        %v3761 = vld [vmem:[%s3340 + $0x88] sm:$0xf]
        %v3762 = vld [vmem:[%s3340 + $0x8c] sm:$0x1]
        %v3763 = vld [vmem:[%s3340 + $0x90] sm:$0xf]
        %v3764 = vld [vmem:[%s3340 + $0x94] sm:$0xf]
        %v3765 = vld [vmem:[%s3340 + $0x98] sm:$0x1]
        %v3766 = vld [vmem:[%s3340 + $0x9c] sm:$0xf]
        %v3767 = vld [vmem:[%s3340 + $0xa0] sm:$0xf]
        %v3768 = vld [vmem:[%s3340 + $0xa4] sm:$0x1]
        %v3769 = vld [vmem:[%s3340 + $0xa8] sm:$0xf]
        %v3770 = vld [vmem:[%s3340 + $0xac] sm:$0xf]
        %v3771 = vld [vmem:[%s3340 + $0xb0] sm:$0x1]
        %v3772 = vld [vmem:[%s3340 + $0xb4] sm:$0xf]
        %v3773 = vld [vmem:[%s3340 + $0xb8] sm:$0xf]
        %v3774 = vld [vmem:[%s3340 + $0xbc] sm:$0x1]
        %v3776 = vshrl.u32 %v3727, 16
        %v3778 = vrot.slane %v3776, 4
        %v3779 = vshll.u32 %v3727, 16
        %v3781 = vrot.slane %v3779, 5
        %v3782 = vor.u32 %v3778, %v3781
        %v3783 = vrot.slane %v3782, 4
        %v3785 = vshll.u32 %v3728, 16
        %v3787 = vrot.slane %v3785, 5
        %v3788 = vsel %vm236, %v3783, %v3787
        %v3789 = vshrl.u32 %v3728, 16
        %v3791 = vrot.slane %v3789, 4
        %v3792 = vor.u32 %v3791, %v3787
        %v3793 = vrot.slane %v3792, 4
        %v3795 = vshll.u32 %v3729, 16
        %v3797 = vrot.slane %v3795, 5
        %v3798 = vsel %vm236, %v3793, %v3797
        %v3800 = vshrl.u32 %v3730, 16
        %v3802 = vrot.slane %v3800, 4
        %v3803 = vshll.u32 %v3730, 16
        %v3805 = vrot.slane %v3803, 5
        %v3806 = vor.u32 %v3802, %v3805
        %v3807 = vrot.slane %v3806, 4
        %v3809 = vshll.u32 %v3731, 16
        %v3811 = vrot.slane %v3809, 5
        %v3812 = vsel %vm236, %v3807, %v3811
        %v3813 = vshrl.u32 %v3731, 16
        %v3815 = vrot.slane %v3813, 4
        %v3816 = vor.u32 %v3815, %v3811
        %v3817 = vrot.slane %v3816, 4
        %v3819 = vshll.u32 %v3732, 16
        %v3821 = vrot.slane %v3819, 5
        %v3822 = vsel %vm236, %v3817, %v3821
        %v3824 = vshrl.u32 %v3733, 16
        %v3826 = vrot.slane %v3824, 4
        %v3827 = vshll.u32 %v3733, 16
        %v3829 = vrot.slane %v3827, 5
        %v3830 = vor.u32 %v3826, %v3829
        %v3831 = vrot.slane %v3830, 4
        %v3833 = vshll.u32 %v3734, 16
        %v3835 = vrot.slane %v3833, 5
        %v3836 = vsel %vm236, %v3831, %v3835
        %v3837 = vshrl.u32 %v3734, 16
        %v3839 = vrot.slane %v3837, 4
        %v3840 = vor.u32 %v3839, %v3835
        %v3841 = vrot.slane %v3840, 4
        %v3843 = vshll.u32 %v3735, 16
        %v3845 = vrot.slane %v3843, 5
        %v3846 = vsel %vm236, %v3841, %v3845
        %v3848 = vshrl.u32 %v3736, 16
        %v3850 = vrot.slane %v3848, 4
        %v3851 = vshll.u32 %v3736, 16
        %v3853 = vrot.slane %v3851, 5
        %v3854 = vor.u32 %v3850, %v3853
        %v3855 = vrot.slane %v3854, 4
        %v3857 = vshll.u32 %v3737, 16
        %v3859 = vrot.slane %v3857, 5
        %v3860 = vsel %vm236, %v3855, %v3859
        %v3861 = vshrl.u32 %v3737, 16
        %v3863 = vrot.slane %v3861, 4
        %v3864 = vor.u32 %v3863, %v3859
        %v3865 = vrot.slane %v3864, 4
        %v3867 = vshll.u32 %v3738, 16
        %v3869 = vrot.slane %v3867, 5
        %v3870 = vsel %vm236, %v3865, %v3869
        %v3872 = vshrl.u32 %v3739, 16
        %v3874 = vrot.slane %v3872, 4
        %v3875 = vshll.u32 %v3739, 16
        %v3877 = vrot.slane %v3875, 5
        %v3878 = vor.u32 %v3874, %v3877
        %v3879 = vrot.slane %v3878, 4
        %v3881 = vshll.u32 %v3740, 16
        %v3883 = vrot.slane %v3881, 5
        %v3884 = vsel %vm236, %v3879, %v3883
        %v3885 = vshrl.u32 %v3740, 16
        %v3887 = vrot.slane %v3885, 4
        %v3888 = vor.u32 %v3887, %v3883
        %v3889 = vrot.slane %v3888, 4
        %v3891 = vshll.u32 %v3741, 16
        %v3893 = vrot.slane %v3891, 5
        %v3894 = vsel %vm236, %v3889, %v3893
        %v3896 = vshrl.u32 %v3742, 16
        %v3898 = vrot.slane %v3896, 4
        %v3899 = vshll.u32 %v3742, 16
        %v3901 = vrot.slane %v3899, 5
        %v3902 = vor.u32 %v3898, %v3901
        %v3903 = vrot.slane %v3902, 4
        %v3905 = vshll.u32 %v3743, 16
        %v3907 = vrot.slane %v3905, 5
        %v3908 = vsel %vm236, %v3903, %v3907
        %v3909 = vshrl.u32 %v3743, 16
        %v3911 = vrot.slane %v3909, 4
        %v3912 = vor.u32 %v3911, %v3907
        %v3913 = vrot.slane %v3912, 4
        %v3915 = vshll.u32 %v3744, 16
        %v3917 = vrot.slane %v3915, 5
        %v3918 = vsel %vm236, %v3913, %v3917
        %v3920 = vshrl.u32 %v3745, 16
        %v3922 = vrot.slane %v3920, 4
        %v3923 = vshll.u32 %v3745, 16
        %v3925 = vrot.slane %v3923, 5
        %v3926 = vor.u32 %v3922, %v3925
        %v3927 = vrot.slane %v3926, 4
        %v3929 = vshll.u32 %v3746, 16
        %v3931 = vrot.slane %v3929, 5
        %v3932 = vsel %vm236, %v3927, %v3931
        %v3933 = vshrl.u32 %v3746, 16
        %v3935 = vrot.slane %v3933, 4
        %v3936 = vor.u32 %v3935, %v3931
        %v3937 = vrot.slane %v3936, 4
        %v3939 = vshll.u32 %v3747, 16
        %v3941 = vrot.slane %v3939, 5
        %v3942 = vsel %vm236, %v3937, %v3941
        %v3944 = vshrl.u32 %v3748, 16
        %v3946 = vrot.slane %v3944, 4
        %v3947 = vshll.u32 %v3748, 16
        %v3949 = vrot.slane %v3947, 5
        %v3950 = vor.u32 %v3946, %v3949
        %v3951 = vrot.slane %v3950, 4
        %v3953 = vshll.u32 %v3749, 16
        %v3955 = vrot.slane %v3953, 5
        %v3956 = vsel %vm236, %v3951, %v3955
        %v3957 = vshrl.u32 %v3749, 16
        %v3959 = vrot.slane %v3957, 4
        %v3960 = vor.u32 %v3959, %v3955
        %v3961 = vrot.slane %v3960, 4
        %v3963 = vshll.u32 %v3750, 16
        %v3965 = vrot.slane %v3963, 5
        %v3966 = vsel %vm236, %v3961, %v3965
        %v3968 = vshrl.u32 %v3751, 16
        %v3970 = vrot.slane %v3968, 4
        %v3971 = vshll.u32 %v3751, 16
        %v3973 = vrot.slane %v3971, 5
        %v3974 = vor.u32 %v3970, %v3973
        %v3975 = vrot.slane %v3974, 4
        %v3977 = vshll.u32 %v3752, 16
        %v3979 = vrot.slane %v3977, 5
        %v3980 = vsel %vm236, %v3975, %v3979
        %v3981 = vshrl.u32 %v3752, 16
        %v3983 = vrot.slane %v3981, 4
        %v3984 = vor.u32 %v3983, %v3979
        %v3985 = vrot.slane %v3984, 4
        %v3987 = vshll.u32 %v3753, 16
        %v3989 = vrot.slane %v3987, 5
        %v3990 = vsel %vm236, %v3985, %v3989
        %v3992 = vshrl.u32 %v3754, 16
        %v3994 = vrot.slane %v3992, 4
        %v3995 = vshll.u32 %v3754, 16
        %v3997 = vrot.slane %v3995, 5
        %v3998 = vor.u32 %v3994, %v3997
        %v3999 = vrot.slane %v3998, 4
        %v4001 = vshll.u32 %v3755, 16
        %v4003 = vrot.slane %v4001, 5
        %v4004 = vsel %vm236, %v3999, %v4003
        %v4005 = vshrl.u32 %v3755, 16
        %v4007 = vrot.slane %v4005, 4
        %v4008 = vor.u32 %v4007, %v4003
        %v4009 = vrot.slane %v4008, 4
        %v4011 = vshll.u32 %v3756, 16
        %v4013 = vrot.slane %v4011, 5
        %v4014 = vsel %vm236, %v4009, %v4013
        %v4016 = vshrl.u32 %v3757, 16
        %v4018 = vrot.slane %v4016, 4
        %v4019 = vshll.u32 %v3757, 16
        %v4021 = vrot.slane %v4019, 5
        %v4022 = vor.u32 %v4018, %v4021
        %v4023 = vrot.slane %v4022, 4
        %v4025 = vshll.u32 %v3758, 16
        %v4027 = vrot.slane %v4025, 5
        %v4028 = vsel %vm236, %v4023, %v4027
        %v4029 = vshrl.u32 %v3758, 16
        %v4031 = vrot.slane %v4029, 4
        %v4032 = vor.u32 %v4031, %v4027
        %v4033 = vrot.slane %v4032, 4
        %v4035 = vshll.u32 %v3759, 16
        %v4037 = vrot.slane %v4035, 5
        %v4038 = vsel %vm236, %v4033, %v4037
        %v4040 = vshrl.u32 %v3760, 16
        %v4042 = vrot.slane %v4040, 4
        %v4043 = vshll.u32 %v3760, 16
        %v4045 = vrot.slane %v4043, 5
        %v4046 = vor.u32 %v4042, %v4045
        %v4047 = vrot.slane %v4046, 4
        %v4049 = vshll.u32 %v3761, 16
        %v4051 = vrot.slane %v4049, 5
        %v4052 = vsel %vm236, %v4047, %v4051
        %v4053 = vshrl.u32 %v3761, 16
        %v4055 = vrot.slane %v4053, 4
        %v4056 = vor.u32 %v4055, %v4051
        %v4057 = vrot.slane %v4056, 4
        %v4059 = vshll.u32 %v3762, 16
        %v4061 = vrot.slane %v4059, 5
        %v4062 = vsel %vm236, %v4057, %v4061
        %v4064 = vshrl.u32 %v3763, 16
        %v4066 = vrot.slane %v4064, 4
        %v4067 = vshll.u32 %v3763, 16
        %v4069 = vrot.slane %v4067, 5
        %v4070 = vor.u32 %v4066, %v4069
        %v4071 = vrot.slane %v4070, 4
        %v4073 = vshll.u32 %v3764, 16
        %v4075 = vrot.slane %v4073, 5
        %v4076 = vsel %vm236, %v4071, %v4075
        %v4077 = vshrl.u32 %v3764, 16
        %v4079 = vrot.slane %v4077, 4
        %v4080 = vor.u32 %v4079, %v4075
        %v4081 = vrot.slane %v4080, 4
        %v4083 = vshll.u32 %v3765, 16
        %v4085 = vrot.slane %v4083, 5
        %v4086 = vsel %vm236, %v4081, %v4085
        %v4088 = vshrl.u32 %v3766, 16
        %v4090 = vrot.slane %v4088, 4
        %v4091 = vshll.u32 %v3766, 16
        %v4093 = vrot.slane %v4091, 5
        %v4094 = vor.u32 %v4090, %v4093
        %v4095 = vrot.slane %v4094, 4
        %v4097 = vshll.u32 %v3767, 16
        %v4099 = vrot.slane %v4097, 5
        %v4100 = vsel %vm236, %v4095, %v4099
        %v4101 = vshrl.u32 %v3767, 16
        %v4103 = vrot.slane %v4101, 4
        %v4104 = vor.u32 %v4103, %v4099
        %v4105 = vrot.slane %v4104, 4
        %v4107 = vshll.u32 %v3768, 16
        %v4109 = vrot.slane %v4107, 5
        %v4110 = vsel %vm236, %v4105, %v4109
        %v4112 = vshrl.u32 %v3769, 16
        %v4114 = vrot.slane %v4112, 4
        %v4115 = vshll.u32 %v3769, 16
        %v4117 = vrot.slane %v4115, 5
        %v4118 = vor.u32 %v4114, %v4117
        %v4119 = vrot.slane %v4118, 4
        %v4121 = vshll.u32 %v3770, 16
        %v4123 = vrot.slane %v4121, 5
        %v4124 = vsel %vm236, %v4119, %v4123
        %v4125 = vshrl.u32 %v3770, 16
        %v4127 = vrot.slane %v4125, 4
        %v4128 = vor.u32 %v4127, %v4123
        %v4129 = vrot.slane %v4128, 4
        %v4131 = vshll.u32 %v3771, 16
        %v4133 = vrot.slane %v4131, 5
        %v4134 = vsel %vm236, %v4129, %v4133
        %v4136 = vshrl.u32 %v3772, 16
        %v4138 = vrot.slane %v4136, 4
        %v4139 = vshll.u32 %v3772, 16
        %v4141 = vrot.slane %v4139, 5
        %v4142 = vor.u32 %v4138, %v4141
        %v4143 = vrot.slane %v4142, 4
        %v4145 = vshll.u32 %v3773, 16
        %v4147 = vrot.slane %v4145, 5
        %v4148 = vsel %vm236, %v4143, %v4147
        %v4149 = vshrl.u32 %v3773, 16
        %v4151 = vrot.slane %v4149, 4
        %v4152 = vor.u32 %v4151, %v4147
        %v4153 = vrot.slane %v4152, 4
        %v4155 = vshll.u32 %v3774, 16
        %v4157 = vrot.slane %v4155, 5
        %v4158 = vsel %vm236, %v4153, %v4157
        %s4159 = scalar_lea.vmem %s1, 448
        %v4160 = vld [vmem:[%s4159] sm:$0xf]
        %v4161 = vld [vmem:[%s4159 + $0x4] sm:$0xf]
        %v4162 = vld [vmem:[%s4159 + $0x8] sm:$0xf]
        %v4163 = vld [vmem:[%s4159 + $0xc] sm:$0xf]
        %v4164 = vld [vmem:[%s4159 + $0x10] sm:$0xf]
        %v4165 = vld [vmem:[%s4159 + $0x14] sm:$0xf]
        %v4166 = vld [vmem:[%s4159 + $0x18] sm:$0xf]
        %v4167 = vld [vmem:[%s4159 + $0x1c] sm:$0xf]
        %v4168 = vld [vmem:[%s4159 + $0x20] sm:$0xf]
        %v4169 = vld [vmem:[%s4159 + $0x24] sm:$0xf]
        %v4170 = vld [vmem:[%s4159 + $0x28] sm:$0xf]
        %v4171 = vld [vmem:[%s4159 + $0x2c] sm:$0xf]
        %v4172 = vld [vmem:[%s4159 + $0x30] sm:$0xf]
        %v4173 = vld [vmem:[%s4159 + $0x34] sm:$0xf]
        %v4174 = vld [vmem:[%s4159 + $0x38] sm:$0xf]
        %v4175 = vld [vmem:[%s4159 + $0x3c] sm:$0xf]
        %v4176 = vunpack.c.l.b16 %v3788
        %v4177 = vunpack.c.l.b16 %v3798
        %v4178 = vunpack.c.l.b16 %v3812
        %v4179 = vunpack.c.l.b16 %v3822
        %v4180 = vunpack.c.l.b16 %v3836
        %v4181 = vunpack.c.l.b16 %v3846
        %v4182 = vunpack.c.l.b16 %v3860
        %v4183 = vunpack.c.l.b16 %v3870
        %v4184 = vunpack.c.l.b16 %v3884
        %v4185 = vunpack.c.l.b16 %v3894
        %v4186 = vunpack.c.l.b16 %v3908
        %v4187 = vunpack.c.l.b16 %v3918
        %v4188 = vunpack.c.l.b16 %v3932
        %v4189 = vunpack.c.l.b16 %v3942
        %v4190 = vunpack.c.l.b16 %v3956
        %v4191 = vunpack.c.l.b16 %v3966
        %v4192 = vunpack.c.l.b16 %v3980
        %v4193 = vunpack.c.l.b16 %v3990
        %v4194 = vunpack.c.l.b16 %v4004
        %v4195 = vunpack.c.l.b16 %v4014
        %v4196 = vunpack.c.l.b16 %v4028
        %v4197 = vunpack.c.l.b16 %v4038
        %v4198 = vunpack.c.l.b16 %v4052
        %v4199 = vunpack.c.l.b16 %v4062
        %v4200 = vunpack.c.l.b16 %v4076
        %v4201 = vunpack.c.l.b16 %v4086
        %v4202 = vunpack.c.l.b16 %v4100
        %v4203 = vunpack.c.l.b16 %v4110
        %v4204 = vunpack.c.l.b16 %v4124
        %v4205 = vunpack.c.l.b16 %v4134
        %v4206 = vunpack.c.l.b16 %v4148
        %v4207 = vunpack.c.l.b16 %v4158
        %v4208 = vpack.c.b16 %v4177, %v4176
        %v4209 = vpack.c.b16 %v4179, %v4178
        %v4210 = vpack.c.b16 %v4181, %v4180
        %v4211 = vpack.c.b16 %v4183, %v4182
        %v4212 = vpack.c.b16 %v4185, %v4184
        %v4213 = vpack.c.b16 %v4187, %v4186
        %v4214 = vpack.c.b16 %v4189, %v4188
        %v4215 = vpack.c.b16 %v4191, %v4190
        %v4216 = vpack.c.b16 %v4193, %v4192
        %v4217 = vpack.c.b16 %v4195, %v4194
        %v4218 = vpack.c.b16 %v4197, %v4196
        %v4219 = vpack.c.b16 %v4199, %v4198
        %v4220 = vpack.c.b16 %v4201, %v4200
        %v4221 = vpack.c.b16 %v4203, %v4202
        %v4222 = vpack.c.b16 %v4205, %v4204
        %v4223 = vpack.c.b16 %v4207, %v4206
        %v4256 = vunpack.c.l.b16 %v4160
        %v4257 = vunpack.c.l.b16 %v4161
        %v4258 = vunpack.c.l.b16 %v4162
        %v4259 = vunpack.c.l.b16 %v4163
        %v4260 = vunpack.c.l.b16 %v4164
        %v4261 = vunpack.c.l.b16 %v4165
        %v4262 = vunpack.c.l.b16 %v4166
        %v4263 = vunpack.c.l.b16 %v4167
        %v4264 = vunpack.c.l.b16 %v4168
        %v4265 = vunpack.c.l.b16 %v4169
        %v4266 = vunpack.c.l.b16 %v4170
        %v4267 = vunpack.c.l.b16 %v4171
        %v4268 = vunpack.c.l.b16 %v4172
        %v4269 = vunpack.c.l.b16 %v4173
        %v4270 = vunpack.c.l.b16 %v4174
        %v4271 = vunpack.c.l.b16 %v4175
        %v4272 = vpack.c.b16 %v4257, %v4256
        %v4273 = vpack.c.b16 %v4259, %v4258
        %v4274 = vpack.c.b16 %v4261, %v4260
        %v4275 = vpack.c.b16 %v4263, %v4262
        %v4276 = vpack.c.b16 %v4265, %v4264
        %v4277 = vpack.c.b16 %v4267, %v4266
        %v4278 = vpack.c.b16 %v4269, %v4268
        %v4279 = vpack.c.b16 %v4271, %v4270
        %4288 = vmatprep.subr.bf16.mxu0 0
        %4289 = vmatpush1.bf16.msra.mxu0 %v4272
        %4290 = vmatprep.subr.bf16.mxu0 0
        %4291 = vmatpush1.bf16.msra.mxu0 %v4273
        %4292 = vmatprep.subr.bf16.mxu0 0
        %4293 = vmatpush1.bf16.msra.mxu0 %v4274
        %4294 = vmatprep.subr.bf16.mxu0 0
        %4295 = vmatpush1.bf16.msra.mxu0 %v4275
        %4296 = vmatprep.subr.bf16.mxu0 0
        %4297 = vmatpush1.bf16.msra.mxu0 %v4276
        %4298 = vmatprep.subr.bf16.mxu0 0
        %4299 = vmatpush1.bf16.msra.mxu0 %v4277
        %4300 = vmatprep.subr.bf16.mxu0 0
        %4301 = vmatpush1.bf16.msra.mxu0 %v4278
        %4302 = vmatprep.subr.bf16.mxu0 0
        %4303 = vmatpush1.bf16.msra.mxu0 %v4279
        %4304 = vmatprep.subr.bf16.mxu0 0
        %4305 = vmatpush1.bf16.msra.mxu0 0
        %4306 = vmatprep.subr.bf16.mxu0 0
        %4307 = vmatpush1.bf16.msra.mxu0 0
        %4308 = vmatprep.subr.bf16.mxu0 0
        %4309 = vmatpush1.bf16.msra.mxu0 0
        %4310 = vmatprep.subr.bf16.mxu0 0
        %4311 = vmatpush1.bf16.msra.mxu0 0
        %4312 = vmatprep.subr.bf16.mxu0 0
        %4313 = vmatpush1.bf16.msra.mxu0 0
        %4314 = vmatprep.subr.bf16.mxu0 0
        %4315 = vmatpush1.bf16.msra.mxu0 0
        %4316 = vmatprep.subr.bf16.mxu0 0
        %4317 = vmatpush1.bf16.msra.mxu0 0
        %4318 = vmatprep.subr.bf16.mxu0 0
        %4319 = vmatpush1.bf16.msra.mxu0 0
        %4320 = vmatprep.mubr.bf16.mxu0 0
        %4321 = vmatmul.mubr.bf16.gmra.mrb[0].mxu0 %v4208
        %v4322 = vpop.f32.mrb[0].mxu0
        %v4323 = vadd.f32 0.0, %v4322
        %v4324 = vpop.f32.mrb[0].mxu0
        %v4325 = vpop.f32.mrb[0].mxu0
        %v4326 = vadd.f32 0.0, %v4325
        %v4327 = vpop.f32.mrb[0].mxu0
        %4328 = vmatprep.mubr.bf16.mxu0 0
        %4329 = vmatmul.mubr.bf16.gmra.mrb[0].mxu0 %v4209
        %v4330 = vpop.f32.mrb[0].mxu0
        %v4331 = vadd.f32 0.0, %v4330
        %v4332 = vpop.f32.mrb[0].mxu0
        %v4333 = vpop.f32.mrb[0].mxu0
        %v4334 = vadd.f32 0.0, %v4333
        %v4335 = vpop.f32.mrb[0].mxu0
        %4336 = vmatprep.mubr.bf16.mxu0 0
        %4337 = vmatmul.mubr.bf16.gmra.mrb[0].mxu0 %v4210
        %v4338 = vpop.f32.mrb[0].mxu0
        %v4339 = vadd.f32 0.0, %v4338
        %v4340 = vpop.f32.mrb[0].mxu0
        %v4341 = vpop.f32.mrb[0].mxu0
        %v4342 = vadd.f32 0.0, %v4341
        %v4343 = vpop.f32.mrb[0].mxu0
        %4344 = vmatprep.mubr.bf16.mxu0 0
        %4345 = vmatmul.mubr.bf16.gmra.mrb[0].mxu0 %v4211
        %v4346 = vpop.f32.mrb[0].mxu0
        %v4347 = vadd.f32 0.0, %v4346
        %v4348 = vpop.f32.mrb[0].mxu0
        %v4349 = vpop.f32.mrb[0].mxu0
        %v4350 = vadd.f32 0.0, %v4349
        %v4351 = vpop.f32.mrb[0].mxu0
        %4352 = vmatprep.mubr.bf16.mxu0 0
        %4353 = vmatmul.mubr.bf16.gmra.mrb[0].mxu0 %v4212
        %v4354 = vpop.f32.mrb[0].mxu0
        %v4355 = vadd.f32 0.0, %v4354
        %v4356 = vpop.f32.mrb[0].mxu0
        %v4357 = vpop.f32.mrb[0].mxu0
        %v4358 = vadd.f32 0.0, %v4357
        %v4359 = vpop.f32.mrb[0].mxu0
        %4360 = vmatprep.mubr.bf16.mxu0 0
        %4361 = vmatmul.mubr.bf16.gmra.mrb[0].mxu0 %v4213
        %v4362 = vpop.f32.mrb[0].mxu0
        %v4363 = vadd.f32 0.0, %v4362
        %v4364 = vpop.f32.mrb[0].mxu0
        %v4365 = vpop.f32.mrb[0].mxu0
        %v4366 = vadd.f32 0.0, %v4365
        %v4367 = vpop.f32.mrb[0].mxu0
        %4368 = vmatprep.mubr.bf16.mxu0 0
        %4369 = vmatmul.mubr.bf16.gmra.mrb[0].mxu0 %v4214
        %v4370 = vpop.f32.mrb[0].mxu0
        %v4371 = vadd.f32 0.0, %v4370
        %v4372 = vpop.f32.mrb[0].mxu0
        %v4373 = vpop.f32.mrb[0].mxu0
        %v4374 = vadd.f32 0.0, %v4373
        %v4375 = vpop.f32.mrb[0].mxu0
        %4376 = vmatprep.mubr.bf16.mxu0 0
        %4377 = vmatmul.mubr.bf16.gmra.mrb[0].mxu0 %v4215
        %v4378 = vpop.f32.mrb[0].mxu0
        %v4379 = vadd.f32 0.0, %v4378
        %v4380 = vpop.f32.mrb[0].mxu0
        %v4381 = vpop.f32.mrb[0].mxu0
        %v4382 = vadd.f32 0.0, %v4381
        %v4383 = vpop.f32.mrb[0].mxu0
        %4384 = vmatprep.mubr.bf16.mxu0 0
        %4385 = vmatmul.mubr.bf16.gmra.mrb[0].mxu0 %v4216
        %v4386 = vpop.f32.mrb[0].mxu0
        %v4387 = vadd.f32 0.0, %v4386
        %v4388 = vpop.f32.mrb[0].mxu0
        %v4389 = vpop.f32.mrb[0].mxu0
        %v4390 = vadd.f32 0.0, %v4389
        %v4391 = vpop.f32.mrb[0].mxu0
        %4392 = vmatprep.mubr.bf16.mxu0 0
        %4393 = vmatmul.mubr.bf16.gmra.mrb[0].mxu0 %v4217
        %v4394 = vpop.f32.mrb[0].mxu0
        %v4395 = vadd.f32 0.0, %v4394
        %v4396 = vpop.f32.mrb[0].mxu0
        %v4397 = vpop.f32.mrb[0].mxu0
        %v4398 = vadd.f32 0.0, %v4397
        %v4399 = vpop.f32.mrb[0].mxu0
        %4400 = vmatprep.mubr.bf16.mxu0 0
        %4401 = vmatmul.mubr.bf16.gmra.mrb[0].mxu0 %v4218
        %v4402 = vpop.f32.mrb[0].mxu0
        %v4403 = vadd.f32 0.0, %v4402
        %v4404 = vpop.f32.mrb[0].mxu0
        %v4405 = vpop.f32.mrb[0].mxu0
        %v4406 = vadd.f32 0.0, %v4405
        %v4407 = vpop.f32.mrb[0].mxu0
        %4408 = vmatprep.mubr.bf16.mxu0 0
        %4409 = vmatmul.mubr.bf16.gmra.mrb[0].mxu0 %v4219
        %v4410 = vpop.f32.mrb[0].mxu0
        %v4411 = vadd.f32 0.0, %v4410
        %v4412 = vpop.f32.mrb[0].mxu0
        %v4413 = vpop.f32.mrb[0].mxu0
        %v4414 = vadd.f32 0.0, %v4413
        %v4415 = vpop.f32.mrb[0].mxu0
        %4416 = vmatprep.mubr.bf16.mxu0 0
        %4417 = vmatmul.mubr.bf16.gmra.mrb[0].mxu0 %v4220
        %v4418 = vpop.f32.mrb[0].mxu0
        %v4419 = vadd.f32 0.0, %v4418
        %v4420 = vpop.f32.mrb[0].mxu0
        %v4421 = vpop.f32.mrb[0].mxu0
        %v4422 = vadd.f32 0.0, %v4421
        %v4423 = vpop.f32.mrb[0].mxu0
        %4424 = vmatprep.mubr.bf16.mxu0 0
        %4425 = vmatmul.mubr.bf16.gmra.mrb[0].mxu0 %v4221
        %v4426 = vpop.f32.mrb[0].mxu0
        %v4427 = vadd.f32 0.0, %v4426
        %v4428 = vpop.f32.mrb[0].mxu0
        %v4429 = vpop.f32.mrb[0].mxu0
        %v4430 = vadd.f32 0.0, %v4429
        %v4431 = vpop.f32.mrb[0].mxu0
        %4432 = vmatprep.mubr.bf16.mxu0 0
        %4433 = vmatmul.mubr.bf16.gmra.mrb[0].mxu0 %v4222
        %v4434 = vpop.f32.mrb[0].mxu0
        %v4435 = vadd.f32 0.0, %v4434
        %v4436 = vpop.f32.mrb[0].mxu0
        %v4437 = vpop.f32.mrb[0].mxu0
        %v4438 = vadd.f32 0.0, %v4437
        %v4439 = vpop.f32.mrb[0].mxu0
        %4440 = vmatprep.mubr.bf16.mxu0 0
        %4441 = vmatmul.mubr.bf16.gmra.mrb[0].mxu0 %v4223
        %v4442 = vpop.f32.mrb[0].mxu0
        %v4443 = vadd.f32 0.0, %v4442
        %v4444 = vpop.f32.mrb[0].mxu0
        %v4445 = vpop.f32.mrb[0].mxu0
        %v4446 = vadd.f32 0.0, %v4445
        %v4447 = vpop.f32.mrb[0].mxu0
        %4448 = vdwg.mxu0
        %v4449 = vadd.f32 %v3695, %v4323
        %v4450 = vadd.f32 %v3696, %v4326
        %v4451 = vadd.f32 %v3697, %v4331
        %v4452 = vadd.f32 %v3698, %v4334
        %v4453 = vadd.f32 %v3699, %v4339
        %v4454 = vadd.f32 %v3700, %v4342
        %v4455 = vadd.f32 %v3701, %v4347
        %v4456 = vadd.f32 %v3702, %v4350
        %v4457 = vadd.f32 %v3703, %v4355
        %v4458 = vadd.f32 %v3704, %v4358
        %v4459 = vadd.f32 %v3705, %v4363
        %v4460 = vadd.f32 %v3706, %v4366
        %v4461 = vadd.f32 %v3707, %v4371
        %v4462 = vadd.f32 %v3708, %v4374
        %v4463 = vadd.f32 %v3709, %v4379
        %v4464 = vadd.f32 %v3710, %v4382
        %v4465 = vadd.f32 %v3711, %v4387
        %v4466 = vadd.f32 %v3712, %v4390
        %v4467 = vadd.f32 %v3713, %v4395
        %v4468 = vadd.f32 %v3714, %v4398
        %v4469 = vadd.f32 %v3715, %v4403
        %v4470 = vadd.f32 %v3716, %v4406
        %v4471 = vadd.f32 %v3717, %v4411
        %v4472 = vadd.f32 %v3718, %v4414
        %v4473 = vadd.f32 %v3719, %v4419
        %v4474 = vadd.f32 %v3720, %v4422
        %v4475 = vadd.f32 %v3721, %v4427
        %v4476 = vadd.f32 %v3722, %v4430
        %v4477 = vadd.f32 %v3723, %v4435
        %v4478 = vadd.f32 %v3724, %v4438
        %v4479 = vadd.f32 %v3725, %v4443
        %v4480 = vadd.f32 %v3726, %v4446
        %v4481 = vld [vmem:[%s3340] sm:$0xe]
        %v4482 = vld [vmem:[%s3340 + $0xc] sm:$0xe]
        %v4483 = vld [vmem:[%s3340 + $0x18] sm:$0xe]
        %v4484 = vld [vmem:[%s3340 + $0x24] sm:$0xe]
        %v4485 = vld [vmem:[%s3340 + $0x30] sm:$0xe]
        %v4486 = vld [vmem:[%s3340 + $0x3c] sm:$0xe]
        %v4487 = vld [vmem:[%s3340 + $0x48] sm:$0xe]
        %v4488 = vld [vmem:[%s3340 + $0x54] sm:$0xe]
        %v4489 = vld [vmem:[%s3340 + $0x60] sm:$0xe]
        %v4490 = vld [vmem:[%s3340 + $0x6c] sm:$0xe]
        %v4491 = vld [vmem:[%s3340 + $0x78] sm:$0xe]
        %v4492 = vld [vmem:[%s3340 + $0x84] sm:$0xe]
        %v4493 = vld [vmem:[%s3340 + $0x90] sm:$0xe]
        %v4494 = vld [vmem:[%s3340 + $0x9c] sm:$0xe]
        %v4495 = vld [vmem:[%s3340 + $0xa8] sm:$0xe]
        %v4496 = vld [vmem:[%s3340 + $0xb4] sm:$0xe]
        %v4545 = vrot.slane %v4481, 5
        %v4546 = vrot.slane %v4545, 4
        %v4547 = vrot.slane %v3728, 5
        %v4548 = vsel %vm1266, %v4546, %v4547
        %v4549 = vrot.slane %v4547, 4
        %v4550 = vrot.slane %v3729, 5
        %v4551 = vsel %vm1266, %v4549, %v4550
        %v4552 = vrot.slane %v4482, 5
        %v4553 = vrot.slane %v4552, 4
        %v4554 = vrot.slane %v3731, 5
        %v4555 = vsel %vm1266, %v4553, %v4554
        %v4556 = vrot.slane %v4554, 4
        %v4557 = vrot.slane %v3732, 5
        %v4558 = vsel %vm1266, %v4556, %v4557
        %v4559 = vrot.slane %v4483, 5
        %v4560 = vrot.slane %v4559, 4
        %v4561 = vrot.slane %v3734, 5
        %v4562 = vsel %vm1266, %v4560, %v4561
        %v4563 = vrot.slane %v4561, 4
        %v4564 = vrot.slane %v3735, 5
        %v4565 = vsel %vm1266, %v4563, %v4564
        %v4566 = vrot.slane %v4484, 5
        %v4567 = vrot.slane %v4566, 4
        %v4568 = vrot.slane %v3737, 5
        %v4569 = vsel %vm1266, %v4567, %v4568
        %v4570 = vrot.slane %v4568, 4
        %v4571 = vrot.slane %v3738, 5
        %v4572 = vsel %vm1266, %v4570, %v4571
        %v4573 = vrot.slane %v4485, 5
        %v4574 = vrot.slane %v4573, 4
        %v4575 = vrot.slane %v3740, 5
        %v4576 = vsel %vm1266, %v4574, %v4575
        %v4577 = vrot.slane %v4575, 4
        %v4578 = vrot.slane %v3741, 5
        %v4579 = vsel %vm1266, %v4577, %v4578
        %v4580 = vrot.slane %v4486, 5
        %v4581 = vrot.slane %v4580, 4
        %v4582 = vrot.slane %v3743, 5
        %v4583 = vsel %vm1266, %v4581, %v4582
        %v4584 = vrot.slane %v4582, 4
        %v4585 = vrot.slane %v3744, 5
        %v4586 = vsel %vm1266, %v4584, %v4585
        %v4587 = vrot.slane %v4487, 5
        %v4588 = vrot.slane %v4587, 4
        %v4589 = vrot.slane %v3746, 5
        %v4590 = vsel %vm1266, %v4588, %v4589
        %v4591 = vrot.slane %v4589, 4
        %v4592 = vrot.slane %v3747, 5
        %v4593 = vsel %vm1266, %v4591, %v4592
        %v4594 = vrot.slane %v4488, 5
        %v4595 = vrot.slane %v4594, 4
        %v4596 = vrot.slane %v3749, 5
        %v4597 = vsel %vm1266, %v4595, %v4596
        %v4598 = vrot.slane %v4596, 4
        %v4599 = vrot.slane %v3750, 5
        %v4600 = vsel %vm1266, %v4598, %v4599
        %v4601 = vrot.slane %v4489, 5
        %v4602 = vrot.slane %v4601, 4
        %v4603 = vrot.slane %v3752, 5
        %v4604 = vsel %vm1266, %v4602, %v4603
        %v4605 = vrot.slane %v4603, 4
        %v4606 = vrot.slane %v3753, 5
        %v4607 = vsel %vm1266, %v4605, %v4606
        %v4608 = vrot.slane %v4490, 5
        %v4609 = vrot.slane %v4608, 4
        %v4610 = vrot.slane %v3755, 5
        %v4611 = vsel %vm1266, %v4609, %v4610
        %v4612 = vrot.slane %v4610, 4
        %v4613 = vrot.slane %v3756, 5
        %v4614 = vsel %vm1266, %v4612, %v4613
        %v4615 = vrot.slane %v4491, 5
        %v4616 = vrot.slane %v4615, 4
        %v4617 = vrot.slane %v3758, 5
        %v4618 = vsel %vm1266, %v4616, %v4617
        %v4619 = vrot.slane %v4617, 4
        %v4620 = vrot.slane %v3759, 5
        %v4621 = vsel %vm1266, %v4619, %v4620
        %v4622 = vrot.slane %v4492, 5
        %v4623 = vrot.slane %v4622, 4
        %v4624 = vrot.slane %v3761, 5
        %v4625 = vsel %vm1266, %v4623, %v4624
        %v4626 = vrot.slane %v4624, 4
        %v4627 = vrot.slane %v3762, 5
        %v4628 = vsel %vm1266, %v4626, %v4627
        %v4629 = vrot.slane %v4493, 5
        %v4630 = vrot.slane %v4629, 4
        %v4631 = vrot.slane %v3764, 5
        %v4632 = vsel %vm1266, %v4630, %v4631
        %v4633 = vrot.slane %v4631, 4
        %v4634 = vrot.slane %v3765, 5
        %v4635 = vsel %vm1266, %v4633, %v4634
        %v4636 = vrot.slane %v4494, 5
        %v4637 = vrot.slane %v4636, 4
        %v4638 = vrot.slane %v3767, 5
        %v4639 = vsel %vm1266, %v4637, %v4638
        %v4640 = vrot.slane %v4638, 4
        %v4641 = vrot.slane %v3768, 5
        %v4642 = vsel %vm1266, %v4640, %v4641
        %v4643 = vrot.slane %v4495, 5
        %v4644 = vrot.slane %v4643, 4
        %v4645 = vrot.slane %v3770, 5
        %v4646 = vsel %vm1266, %v4644, %v4645
        %v4647 = vrot.slane %v4645, 4
        %v4648 = vrot.slane %v3771, 5
        %v4649 = vsel %vm1266, %v4647, %v4648
        %v4650 = vrot.slane %v4496, 5
        %v4651 = vrot.slane %v4650, 4
        %v4652 = vrot.slane %v3773, 5
        %v4653 = vsel %vm1266, %v4651, %v4652
        %v4654 = vrot.slane %v4652, 4
        %v4655 = vrot.slane %v3774, 5
        %v4656 = vsel %vm1266, %v4654, %v4655
        %s4657 = scalar_lea.vmem %s1, 512
        %v4658 = vld [vmem:[%s4657] sm:$0xf]
        %v4659 = vld [vmem:[%s4657 + $0x4] sm:$0xf]
        %v4660 = vld [vmem:[%s4657 + $0x8] sm:$0xf]
        %v4661 = vld [vmem:[%s4657 + $0xc] sm:$0xf]
        %v4662 = vld [vmem:[%s4657 + $0x10] sm:$0xf]
        %v4663 = vld [vmem:[%s4657 + $0x14] sm:$0xf]
        %v4664 = vld [vmem:[%s4657 + $0x18] sm:$0xf]
        %v4665 = vld [vmem:[%s4657 + $0x1c] sm:$0xf]
        %v4666 = vld [vmem:[%s4657 + $0x20] sm:$0xf]
        %v4667 = vld [vmem:[%s4657 + $0x24] sm:$0xf]
        %v4668 = vld [vmem:[%s4657 + $0x28] sm:$0xf]
        %v4669 = vld [vmem:[%s4657 + $0x2c] sm:$0xf]
        %v4670 = vld [vmem:[%s4657 + $0x30] sm:$0xf]
        %v4671 = vld [vmem:[%s4657 + $0x34] sm:$0xf]
        %v4672 = vld [vmem:[%s4657 + $0x38] sm:$0xf]
        %v4673 = vld [vmem:[%s4657 + $0x3c] sm:$0xf]
        %v4674 = vunpack.c.l.b16 %v4548
        %v4675 = vunpack.c.l.b16 %v4551
        %v4676 = vunpack.c.l.b16 %v4555
        %v4677 = vunpack.c.l.b16 %v4558
        %v4678 = vunpack.c.l.b16 %v4562
        %v4679 = vunpack.c.l.b16 %v4565
        %v4680 = vunpack.c.l.b16 %v4569
        %v4681 = vunpack.c.l.b16 %v4572
        %v4682 = vunpack.c.l.b16 %v4576
        %v4683 = vunpack.c.l.b16 %v4579
        %v4684 = vunpack.c.l.b16 %v4583
        %v4685 = vunpack.c.l.b16 %v4586
        %v4686 = vunpack.c.l.b16 %v4590
        %v4687 = vunpack.c.l.b16 %v4593
        %v4688 = vunpack.c.l.b16 %v4597
        %v4689 = vunpack.c.l.b16 %v4600
        %v4690 = vunpack.c.l.b16 %v4604
        %v4691 = vunpack.c.l.b16 %v4607
        %v4692 = vunpack.c.l.b16 %v4611
        %v4693 = vunpack.c.l.b16 %v4614
        %v4694 = vunpack.c.l.b16 %v4618
        %v4695 = vunpack.c.l.b16 %v4621
        %v4696 = vunpack.c.l.b16 %v4625
        %v4697 = vunpack.c.l.b16 %v4628
        %v4698 = vunpack.c.l.b16 %v4632
        %v4699 = vunpack.c.l.b16 %v4635
        %v4700 = vunpack.c.l.b16 %v4639
        %v4701 = vunpack.c.l.b16 %v4642
        %v4702 = vunpack.c.l.b16 %v4646
        %v4703 = vunpack.c.l.b16 %v4649
        %v4704 = vunpack.c.l.b16 %v4653
        %v4705 = vunpack.c.l.b16 %v4656
        %v4706 = vpack.c.b16 %v4675, %v4674
        %v4707 = vpack.c.b16 %v4677, %v4676
        %v4708 = vpack.c.b16 %v4679, %v4678
        %v4709 = vpack.c.b16 %v4681, %v4680
        %v4710 = vpack.c.b16 %v4683, %v4682
        %v4711 = vpack.c.b16 %v4685, %v4684
        %v4712 = vpack.c.b16 %v4687, %v4686
        %v4713 = vpack.c.b16 %v4689, %v4688
        %v4714 = vpack.c.b16 %v4691, %v4690
        %v4715 = vpack.c.b16 %v4693, %v4692
        %v4716 = vpack.c.b16 %v4695, %v4694
        %v4717 = vpack.c.b16 %v4697, %v4696
        %v4718 = vpack.c.b16 %v4699, %v4698
        %v4719 = vpack.c.b16 %v4701, %v4700
        %v4720 = vpack.c.b16 %v4703, %v4702
        %v4721 = vpack.c.b16 %v4705, %v4704
        %v4754 = vunpack.c.l.b16 %v4658
        %v4755 = vunpack.c.l.b16 %v4659
        %v4756 = vunpack.c.l.b16 %v4660
        %v4757 = vunpack.c.l.b16 %v4661
        %v4758 = vunpack.c.l.b16 %v4662
        %v4759 = vunpack.c.l.b16 %v4663
        %v4760 = vunpack.c.l.b16 %v4664
        %v4761 = vunpack.c.l.b16 %v4665
        %v4762 = vunpack.c.l.b16 %v4666
        %v4763 = vunpack.c.l.b16 %v4667
        %v4764 = vunpack.c.l.b16 %v4668
        %v4765 = vunpack.c.l.b16 %v4669
        %v4766 = vunpack.c.l.b16 %v4670
        %v4767 = vunpack.c.l.b16 %v4671
        %v4768 = vunpack.c.l.b16 %v4672
        %v4769 = vunpack.c.l.b16 %v4673
        %v4770 = vpack.c.b16 %v4755, %v4754
        %v4771 = vpack.c.b16 %v4757, %v4756
        %v4772 = vpack.c.b16 %v4759, %v4758
        %v4773 = vpack.c.b16 %v4761, %v4760
        %v4774 = vpack.c.b16 %v4763, %v4762
        %v4775 = vpack.c.b16 %v4765, %v4764
        %v4776 = vpack.c.b16 %v4767, %v4766
        %v4777 = vpack.c.b16 %v4769, %v4768
        %4786 = vmatprep.subr.bf16.mxu0 0
        %4787 = vmatpush1.bf16.msra.mxu0 %v4770
        %4788 = vmatprep.subr.bf16.mxu0 0
        %4789 = vmatpush1.bf16.msra.mxu0 %v4771
        %4790 = vmatprep.subr.bf16.mxu0 0
        %4791 = vmatpush1.bf16.msra.mxu0 %v4772
        %4792 = vmatprep.subr.bf16.mxu0 0
        %4793 = vmatpush1.bf16.msra.mxu0 %v4773
        %4794 = vmatprep.subr.bf16.mxu0 0
        %4795 = vmatpush1.bf16.msra.mxu0 %v4774
        %4796 = vmatprep.subr.bf16.mxu0 0
        %4797 = vmatpush1.bf16.msra.mxu0 %v4775
        %4798 = vmatprep.subr.bf16.mxu0 0
        %4799 = vmatpush1.bf16.msra.mxu0 %v4776
        %4800 = vmatprep.subr.bf16.mxu0 0
        %4801 = vmatpush1.bf16.msra.mxu0 %v4777
        %4802 = vmatprep.subr.bf16.mxu0 0
        %4803 = vmatpush1.bf16.msra.mxu0 0
        %4804 = vmatprep.subr.bf16.mxu0 0
        %4805 = vmatpush1.bf16.msra.mxu0 0
        %4806 = vmatprep.subr.bf16.mxu0 0
        %4807 = vmatpush1.bf16.msra.mxu0 0
        %4808 = vmatprep.subr.bf16.mxu0 0
        %4809 = vmatpush1.bf16.msra.mxu0 0
        %4810 = vmatprep.subr.bf16.mxu0 0
        %4811 = vmatpush1.bf16.msra.mxu0 0
        %4812 = vmatprep.subr.bf16.mxu0 0
        %4813 = vmatpush1.bf16.msra.mxu0 0
        %4814 = vmatprep.subr.bf16.mxu0 0
        %4815 = vmatpush1.bf16.msra.mxu0 0
        %4816 = vmatprep.subr.bf16.mxu0 0
        %4817 = vmatpush1.bf16.msra.mxu0 0
        %4818 = vmatprep.mubr.bf16.mxu0 0
        %4819 = vmatmul.mubr.bf16.gmra.mrb[0].mxu0 %v4706
        %v4820 = vpop.f32.mrb[0].mxu0
        %v4821 = vadd.f32 0.0, %v4820
        %v4822 = vpop.f32.mrb[0].mxu0
        %v4823 = vpop.f32.mrb[0].mxu0
        %v4824 = vadd.f32 0.0, %v4823
        %v4825 = vpop.f32.mrb[0].mxu0
        %4826 = vmatprep.mubr.bf16.mxu0 0
        %4827 = vmatmul.mubr.bf16.gmra.mrb[0].mxu0 %v4707
        %v4828 = vpop.f32.mrb[0].mxu0
        %v4829 = vadd.f32 0.0, %v4828
        %v4830 = vpop.f32.mrb[0].mxu0
        %v4831 = vpop.f32.mrb[0].mxu0
        %v4832 = vadd.f32 0.0, %v4831
        %v4833 = vpop.f32.mrb[0].mxu0
        %4834 = vmatprep.mubr.bf16.mxu0 0
        %4835 = vmatmul.mubr.bf16.gmra.mrb[0].mxu0 %v4708
        %v4836 = vpop.f32.mrb[0].mxu0
        %v4837 = vadd.f32 0.0, %v4836
        %v4838 = vpop.f32.mrb[0].mxu0
        %v4839 = vpop.f32.mrb[0].mxu0
        %v4840 = vadd.f32 0.0, %v4839
        %v4841 = vpop.f32.mrb[0].mxu0
        %4842 = vmatprep.mubr.bf16.mxu0 0
        %4843 = vmatmul.mubr.bf16.gmra.mrb[0].mxu0 %v4709
        %v4844 = vpop.f32.mrb[0].mxu0
        %v4845 = vadd.f32 0.0, %v4844
        %v4846 = vpop.f32.mrb[0].mxu0
        %v4847 = vpop.f32.mrb[0].mxu0
        %v4848 = vadd.f32 0.0, %v4847
        %v4849 = vpop.f32.mrb[0].mxu0
        %4850 = vmatprep.mubr.bf16.mxu0 0
        %4851 = vmatmul.mubr.bf16.gmra.mrb[0].mxu0 %v4710
        %v4852 = vpop.f32.mrb[0].mxu0
        %v4853 = vadd.f32 0.0, %v4852
        %v4854 = vpop.f32.mrb[0].mxu0
        %v4855 = vpop.f32.mrb[0].mxu0
        %v4856 = vadd.f32 0.0, %v4855
        %v4857 = vpop.f32.mrb[0].mxu0
        %4858 = vmatprep.mubr.bf16.mxu0 0
        %4859 = vmatmul.mubr.bf16.gmra.mrb[0].mxu0 %v4711
        %v4860 = vpop.f32.mrb[0].mxu0
        %v4861 = vadd.f32 0.0, %v4860
        %v4862 = vpop.f32.mrb[0].mxu0
        %v4863 = vpop.f32.mrb[0].mxu0
        %v4864 = vadd.f32 0.0, %v4863
        %v4865 = vpop.f32.mrb[0].mxu0
        %4866 = vmatprep.mubr.bf16.mxu0 0
        %4867 = vmatmul.mubr.bf16.gmra.mrb[0].mxu0 %v4712
        %v4868 = vpop.f32.mrb[0].mxu0
        %v4869 = vadd.f32 0.0, %v4868
        %v4870 = vpop.f32.mrb[0].mxu0
        %v4871 = vpop.f32.mrb[0].mxu0
        %v4872 = vadd.f32 0.0, %v4871
        %v4873 = vpop.f32.mrb[0].mxu0
        %4874 = vmatprep.mubr.bf16.mxu0 0
        %4875 = vmatmul.mubr.bf16.gmra.mrb[0].mxu0 %v4713
        %v4876 = vpop.f32.mrb[0].mxu0
        %v4877 = vadd.f32 0.0, %v4876
        %v4878 = vpop.f32.mrb[0].mxu0
        %v4879 = vpop.f32.mrb[0].mxu0
        %v4880 = vadd.f32 0.0, %v4879
        %v4881 = vpop.f32.mrb[0].mxu0
        %4882 = vmatprep.mubr.bf16.mxu0 0
        %4883 = vmatmul.mubr.bf16.gmra.mrb[0].mxu0 %v4714
        %v4884 = vpop.f32.mrb[0].mxu0
        %v4885 = vadd.f32 0.0, %v4884
        %v4886 = vpop.f32.mrb[0].mxu0
        %v4887 = vpop.f32.mrb[0].mxu0
        %v4888 = vadd.f32 0.0, %v4887
        %v4889 = vpop.f32.mrb[0].mxu0
        %4890 = vmatprep.mubr.bf16.mxu0 0
        %4891 = vmatmul.mubr.bf16.gmra.mrb[0].mxu0 %v4715
        %v4892 = vpop.f32.mrb[0].mxu0
        %v4893 = vadd.f32 0.0, %v4892
        %v4894 = vpop.f32.mrb[0].mxu0
        %v4895 = vpop.f32.mrb[0].mxu0
        %v4896 = vadd.f32 0.0, %v4895
        %v4897 = vpop.f32.mrb[0].mxu0
        %4898 = vmatprep.mubr.bf16.mxu0 0
        %4899 = vmatmul.mubr.bf16.gmra.mrb[0].mxu0 %v4716
        %v4900 = vpop.f32.mrb[0].mxu0
        %v4901 = vadd.f32 0.0, %v4900
        %v4902 = vpop.f32.mrb[0].mxu0
        %v4903 = vpop.f32.mrb[0].mxu0
        %v4904 = vadd.f32 0.0, %v4903
        %v4905 = vpop.f32.mrb[0].mxu0
        %4906 = vmatprep.mubr.bf16.mxu0 0
        %4907 = vmatmul.mubr.bf16.gmra.mrb[0].mxu0 %v4717
        %v4908 = vpop.f32.mrb[0].mxu0
        %v4909 = vadd.f32 0.0, %v4908
        %v4910 = vpop.f32.mrb[0].mxu0
        %v4911 = vpop.f32.mrb[0].mxu0
        %v4912 = vadd.f32 0.0, %v4911
        %v4913 = vpop.f32.mrb[0].mxu0
        %4914 = vmatprep.mubr.bf16.mxu0 0
        %4915 = vmatmul.mubr.bf16.gmra.mrb[0].mxu0 %v4718
        %v4916 = vpop.f32.mrb[0].mxu0
        %v4917 = vadd.f32 0.0, %v4916
        %v4918 = vpop.f32.mrb[0].mxu0
        %v4919 = vpop.f32.mrb[0].mxu0
        %v4920 = vadd.f32 0.0, %v4919
        %v4921 = vpop.f32.mrb[0].mxu0
        %4922 = vmatprep.mubr.bf16.mxu0 0
        %4923 = vmatmul.mubr.bf16.gmra.mrb[0].mxu0 %v4719
        %v4924 = vpop.f32.mrb[0].mxu0
        %v4925 = vadd.f32 0.0, %v4924
        %v4926 = vpop.f32.mrb[0].mxu0
        %v4927 = vpop.f32.mrb[0].mxu0
        %v4928 = vadd.f32 0.0, %v4927
        %v4929 = vpop.f32.mrb[0].mxu0
        %4930 = vmatprep.mubr.bf16.mxu0 0
        %4931 = vmatmul.mubr.bf16.gmra.mrb[0].mxu0 %v4720
        %v4932 = vpop.f32.mrb[0].mxu0
        %v4933 = vadd.f32 0.0, %v4932
        %v4934 = vpop.f32.mrb[0].mxu0
        %v4935 = vpop.f32.mrb[0].mxu0
        %v4936 = vadd.f32 0.0, %v4935
        %v4937 = vpop.f32.mrb[0].mxu0
        %4938 = vmatprep.mubr.bf16.mxu0 0
        %4939 = vmatmul.mubr.bf16.gmra.mrb[0].mxu0 %v4721
        %v4940 = vpop.f32.mrb[0].mxu0
        %v4941 = vadd.f32 0.0, %v4940
        %v4942 = vpop.f32.mrb[0].mxu0
        %v4943 = vpop.f32.mrb[0].mxu0
        %v4944 = vadd.f32 0.0, %v4943
        %v4945 = vpop.f32.mrb[0].mxu0
        %4946 = vdwg.mxu0
        %v4947 = vadd.f32 %v4449, %v4821
        %v4948 = vadd.f32 %v4450, %v4824
        %v4949 = vadd.f32 %v4451, %v4829
        %v4950 = vadd.f32 %v4452, %v4832
        %v4951 = vadd.f32 %v4453, %v4837
        %v4952 = vadd.f32 %v4454, %v4840
        %v4953 = vadd.f32 %v4455, %v4845
        %v4954 = vadd.f32 %v4456, %v4848
        %v4955 = vadd.f32 %v4457, %v4853
        %v4956 = vadd.f32 %v4458, %v4856
        %v4957 = vadd.f32 %v4459, %v4861
        %v4958 = vadd.f32 %v4460, %v4864
        %v4959 = vadd.f32 %v4461, %v4869
        %v4960 = vadd.f32 %v4462, %v4872
        %v4961 = vadd.f32 %v4463, %v4877
        %v4962 = vadd.f32 %v4464, %v4880
        %v4963 = vadd.f32 %v4465, %v4885
        %v4964 = vadd.f32 %v4466, %v4888
        %v4965 = vadd.f32 %v4467, %v4893
        %v4966 = vadd.f32 %v4468, %v4896
        %v4967 = vadd.f32 %v4469, %v4901
        %v4968 = vadd.f32 %v4470, %v4904
        %v4969 = vadd.f32 %v4471, %v4909
        %v4970 = vadd.f32 %v4472, %v4912
        %v4971 = vadd.f32 %v4473, %v4917
        %v4972 = vadd.f32 %v4474, %v4920
        %v4973 = vadd.f32 %v4475, %v4925
        %v4974 = vadd.f32 %v4476, %v4928
        %v4975 = vadd.f32 %v4477, %v4933
        %v4976 = vadd.f32 %v4478, %v4936
        %v4977 = vadd.f32 %v4479, %v4941
        %v4978 = vadd.f32 %v4480, %v4944
        %v4979 = vld [vmem:[%s2] sm:$0x1]
        %v4981 = vlaneseq
        %v4982 = vshrl.u32 %v4981, 7
        %v4983 = vsub.s32 0, %v4982
        %v4984 = vrot.slane %v4979, %v4983
        %v4986 = vadd.f32 %v4947, %v4984
        %v4987 = vadd.f32 %v4948, %v4984
        %v4988 = vadd.f32 %v4949, %v4984
        %v4989 = vadd.f32 %v4950, %v4984
        %v4990 = vadd.f32 %v4951, %v4984
        %v4991 = vadd.f32 %v4952, %v4984
        %v4992 = vadd.f32 %v4953, %v4984
        %v4993 = vadd.f32 %v4954, %v4984
        %v4994 = vadd.f32 %v4955, %v4984
        %v4995 = vadd.f32 %v4956, %v4984
        %v4996 = vadd.f32 %v4957, %v4984
        %v4997 = vadd.f32 %v4958, %v4984
        %v4998 = vadd.f32 %v4959, %v4984
        %v4999 = vadd.f32 %v4960, %v4984
        %v5000 = vadd.f32 %v4961, %v4984
        %v5001 = vadd.f32 %v4962, %v4984
        %v5002 = vadd.f32 %v4963, %v4984
        %v5003 = vadd.f32 %v4964, %v4984
        %v5004 = vadd.f32 %v4965, %v4984
        %v5005 = vadd.f32 %v4966, %v4984
        %v5006 = vadd.f32 %v4967, %v4984
        %v5007 = vadd.f32 %v4968, %v4984
        %v5008 = vadd.f32 %v4969, %v4984
        %v5009 = vadd.f32 %v4970, %v4984
        %v5010 = vadd.f32 %v4971, %v4984
        %v5011 = vadd.f32 %v4972, %v4984
        %v5012 = vadd.f32 %v4973, %v4984
        %v5013 = vadd.f32 %v4974, %v4984
        %v5014 = vadd.f32 %v4975, %v4984
        %v5015 = vadd.f32 %v4976, %v4984
        %v5016 = vadd.f32 %v4977, %v4984
        %v5017 = vadd.f32 %v4978, %v4984
        %v5018 = vmax.f32 %v4986, 0.0
        %v5019 = vmax.f32 %v4987, 0.0
        %v5020 = vmax.f32 %v4988, 0.0
        %v5021 = vmax.f32 %v4989, 0.0
        %v5022 = vmax.f32 %v4990, 0.0
        %v5023 = vmax.f32 %v4991, 0.0
        %v5024 = vmax.f32 %v4992, 0.0
        %v5025 = vmax.f32 %v4993, 0.0
        %v5026 = vmax.f32 %v4994, 0.0
        %v5027 = vmax.f32 %v4995, 0.0
        %v5028 = vmax.f32 %v4996, 0.0
        %v5029 = vmax.f32 %v4997, 0.0
        %v5030 = vmax.f32 %v4998, 0.0
        %v5031 = vmax.f32 %v4999, 0.0
        %v5032 = vmax.f32 %v5000, 0.0
        %v5033 = vmax.f32 %v5001, 0.0
        %v5034 = vmax.f32 %v5002, 0.0
        %v5035 = vmax.f32 %v5003, 0.0
        %v5036 = vmax.f32 %v5004, 0.0
        %v5037 = vmax.f32 %v5005, 0.0
        %v5038 = vmax.f32 %v5006, 0.0
        %v5039 = vmax.f32 %v5007, 0.0
        %v5040 = vmax.f32 %v5008, 0.0
        %v5041 = vmax.f32 %v5009, 0.0
        %v5042 = vmax.f32 %v5010, 0.0
        %v5043 = vmax.f32 %v5011, 0.0
        %v5044 = vmax.f32 %v5012, 0.0
        %v5045 = vmax.f32 %v5013, 0.0
        %v5046 = vmax.f32 %v5014, 0.0
        %v5047 = vmax.f32 %v5015, 0.0
        %v5048 = vmax.f32 %v5016, 0.0
        %v5049 = vmax.f32 %v5017, 0.0
        %v5050 = vpack.c.bf16 %v5019, %v5018
        %v5051 = vpack.c.bf16 %v5021, %v5020
        %v5052 = vpack.c.bf16 %v5023, %v5022
        %v5053 = vpack.c.bf16 %v5025, %v5024
        %v5054 = vpack.c.bf16 %v5027, %v5026
        %v5055 = vpack.c.bf16 %v5029, %v5028
        %v5056 = vpack.c.bf16 %v5031, %v5030
        %v5057 = vpack.c.bf16 %v5033, %v5032
        %v5058 = vpack.c.bf16 %v5035, %v5034
        %v5059 = vpack.c.bf16 %v5037, %v5036
        %v5060 = vpack.c.bf16 %v5039, %v5038
        %v5061 = vpack.c.bf16 %v5041, %v5040
        %v5062 = vpack.c.bf16 %v5043, %v5042
        %v5063 = vpack.c.bf16 %v5045, %v5044
        %v5064 = vpack.c.bf16 %v5047, %v5046
        %v5065 = vpack.c.bf16 %v5049, %v5048
        %v5082 = vunpack.c.l.b16 %v5050
        %v5083 = vunpack.c.h.b16 %v5050
        %v5084 = vunpack.c.l.b16 %v5051
        %v5085 = vunpack.c.h.b16 %v5051
        %v5086 = vunpack.c.l.b16 %v5052
        %v5087 = vunpack.c.h.b16 %v5052
        %v5088 = vunpack.c.l.b16 %v5053
        %v5089 = vunpack.c.h.b16 %v5053
        %v5090 = vunpack.c.l.b16 %v5054
        %v5091 = vunpack.c.h.b16 %v5054
        %v5092 = vunpack.c.l.b16 %v5055
        %v5093 = vunpack.c.h.b16 %v5055
        %v5094 = vunpack.c.l.b16 %v5056
        %v5095 = vunpack.c.h.b16 %v5056
        %v5096 = vunpack.c.l.b16 %v5057
        %v5097 = vunpack.c.h.b16 %v5057
        %v5098 = vunpack.c.l.b16 %v5058
        %v5099 = vunpack.c.h.b16 %v5058
        %v5100 = vunpack.c.l.b16 %v5059
        %v5101 = vunpack.c.h.b16 %v5059
        %v5102 = vunpack.c.l.b16 %v5060
        %v5103 = vunpack.c.h.b16 %v5060
        %v5104 = vunpack.c.l.b16 %v5061
        %v5105 = vunpack.c.h.b16 %v5061
        %v5106 = vunpack.c.l.b16 %v5062
        %v5107 = vunpack.c.h.b16 %v5062
        %v5108 = vunpack.c.l.b16 %v5063
        %v5109 = vunpack.c.h.b16 %v5063
        %v5110 = vunpack.c.l.b16 %v5064
        %v5111 = vunpack.c.h.b16 %v5064
        %v5112 = vunpack.c.l.b16 %v5065
        %v5113 = vunpack.c.h.b16 %v5065
        %v5114 = vpack.c.b16 %v5082, %v5082
        %v5115 = vpack.c.b16 %v5083, %v5083
        %v5116 = vpack.c.b16 %v5084, %v5084
        %v5117 = vpack.c.b16 %v5085, %v5085
        %v5118 = vpack.c.b16 %v5086, %v5086
        %v5119 = vpack.c.b16 %v5087, %v5087
        %v5120 = vpack.c.b16 %v5088, %v5088
        %v5121 = vpack.c.b16 %v5089, %v5089
        %v5122 = vpack.c.b16 %v5090, %v5090
        %v5123 = vpack.c.b16 %v5091, %v5091
        %v5124 = vpack.c.b16 %v5092, %v5092
        %v5125 = vpack.c.b16 %v5093, %v5093
        %v5126 = vpack.c.b16 %v5094, %v5094
        %v5127 = vpack.c.b16 %v5095, %v5095
        %v5128 = vpack.c.b16 %v5096, %v5096
        %v5129 = vpack.c.b16 %v5097, %v5097
        %v5130 = vpack.c.b16 %v5098, %v5098
        %v5131 = vpack.c.b16 %v5099, %v5099
        %v5132 = vpack.c.b16 %v5100, %v5100
        %v5133 = vpack.c.b16 %v5101, %v5101
        %v5134 = vpack.c.b16 %v5102, %v5102
        %v5135 = vpack.c.b16 %v5103, %v5103
        %v5136 = vpack.c.b16 %v5104, %v5104
        %v5137 = vpack.c.b16 %v5105, %v5105
        %v5138 = vpack.c.b16 %v5106, %v5106
        %v5139 = vpack.c.b16 %v5107, %v5107
        %v5140 = vpack.c.b16 %v5108, %v5108
        %v5141 = vpack.c.b16 %v5109, %v5109
        %v5142 = vpack.c.b16 %v5110, %v5110
        %v5143 = vpack.c.b16 %v5111, %v5111
        %v5144 = vpack.c.b16 %v5112, %v5112
        %v5145 = vpack.c.b16 %v5113, %v5113
        %5178 = vst [vmem:[%s163] sm:$0xf] %v5114
        %5179 = vst [vmem:[%s163 + $0x4] sm:$0xf] %v5115
        %5180 = vst [vmem:[%s163 + $0x8] sm:$0xf] %v5116
        %5181 = vst [vmem:[%s163 + $0xc] sm:$0xf] %v5117
        %5182 = vst [vmem:[%s163 + $0x10] sm:$0xf] %v5118
        %5183 = vst [vmem:[%s163 + $0x14] sm:$0xf] %v5119
        %5184 = vst [vmem:[%s163 + $0x18] sm:$0xf] %v5120
        %5185 = vst [vmem:[%s163 + $0x1c] sm:$0xf] %v5121
        %5186 = vst [vmem:[%s163 + $0x20] sm:$0xf] %v5122
        %5187 = vst [vmem:[%s163 + $0x24] sm:$0xf] %v5123
        %5188 = vst [vmem:[%s163 + $0x28] sm:$0xf] %v5124
        %5189 = vst [vmem:[%s163 + $0x2c] sm:$0xf] %v5125
        %5190 = vst [vmem:[%s163 + $0x30] sm:$0xf] %v5126
        %5191 = vst [vmem:[%s163 + $0x34] sm:$0xf] %v5127
        %5192 = vst [vmem:[%s163 + $0x38] sm:$0xf] %v5128
        %5193 = vst [vmem:[%s163 + $0x3c] sm:$0xf] %v5129
        %5194 = vst [vmem:[%s163 + $0x40] sm:$0xf] %v5130
        %5195 = vst [vmem:[%s163 + $0x44] sm:$0xf] %v5131
        %5196 = vst [vmem:[%s163 + $0x48] sm:$0xf] %v5132
        %5197 = vst [vmem:[%s163 + $0x4c] sm:$0xf] %v5133
        %5198 = vst [vmem:[%s163 + $0x50] sm:$0xf] %v5134
        %5199 = vst [vmem:[%s163 + $0x54] sm:$0xf] %v5135
        %5200 = vst [vmem:[%s163 + $0x58] sm:$0xf] %v5136
        %5201 = vst [vmem:[%s163 + $0x5c] sm:$0xf] %v5137
        %5202 = vst [vmem:[%s163 + $0x60] sm:$0xf] %v5138
        %5203 = vst [vmem:[%s163 + $0x64] sm:$0xf] %v5139
        %5204 = vst [vmem:[%s163 + $0x68] sm:$0xf] %v5140
        %5205 = vst [vmem:[%s163 + $0x6c] sm:$0xf] %v5141
        %5206 = vst [vmem:[%s163 + $0x70] sm:$0xf] %v5142
        %5207 = vst [vmem:[%s163 + $0x74] sm:$0xf] %v5143
        %5208 = vst [vmem:[%s163 + $0x78] sm:$0xf] %v5144
        %5209 = vst [vmem:[%s163 + $0x7c] sm:$0xf] %v5145
        %s5210 = sand.u32 %s93, 1
        %s5211 = scalar_lea.sflag [#allocation3], %s5210
        %s5212 = sand.u32 %s93, 1
        %s5213 = smul.addr %s5212, 128
        %s5214 = scalar_lea.vmem [#allocation2], %s5213
        // Predicated region
        $region33: #{tpu_custom_call.1} parent=31 // pred_check
          %p5215 = pneg %p103
        $region34: #{tpu_custom_call.1} parent=31 // pred_check_branch
          %5217 = sbr.rel (%p5215) target = $region36
        $region35: #{tpu_custom_call.1} parent=31 // pred_region
          %s5219 = ssub.s32 2048, 2048
          %5220 = vsyncadd %s5211, %s5219
          %s5221 = smul.addr %s17, 32
          %s5222 = smul.addr %s5221, 64
          %s5223 = scalar_lea.hbm %s3, %s5222
          %s5224 = sshll.u32 %s5214, 4
          %s5225 = int_to_ptr.vmem [resolvable:$true] %s5224
          %5230 = dma.vmem_to_hbm [thread:$0]  %s5225, 2048, %s5223, %s5211, 64, 64, 4
        $region36: #{tpu_custom_call.1} parent=31 // pred_fallthru
          _
      $region32: #{tpu_custom_call.1} parent=5 // pred_fallthru
        _
      %p5231 = scmp.le.s32.totalorder 2, %s12
      // Predicated region
      $region37: #{tpu_custom_call.1} parent=5 // pred_check
        %p5232 = pneg %p5231
      $region38: #{tpu_custom_call.1} parent=5 // pred_check_branch
        %5234 = sbr.rel (%p5232) target = $region40
      $region39: #{tpu_custom_call.1} parent=5 // pred_region
        %s5235 = ssub.s32 %s12, 2
        // Predicated region
        $region41: #{tpu_custom_call.1} parent=39 // pred_check
          %p5236 = pneg %p109
        $region42: #{tpu_custom_call.1} parent=39 // pred_check_branch
          %5238 = sbr.rel (%p5236) target = $region44
        $region43: #{tpu_custom_call.1} parent=39 // pred_region
          %s5239 = sand.u32 %s94, 1
          %s5240 = scalar_lea.sflag [#allocation3], %s5239
          %s5241 = sand.u32 %s94, 1
          %s5242 = smul.addr %s5241, 128
          %s5243 = scalar_lea.vmem [#allocation2], %s5242
          %5244 = dma.done %s5240, 2048
        $region44: #{tpu_custom_call.1} parent=39 // pred_fallthru
          _
      $region40: #{tpu_custom_call.1} parent=5 // pred_fallthru
        _
    $region6: #{tpu_custom_call.1} parent=1 // loop_footer
      %s16 = sadd.s32 1, %s12
    $region7: #{tpu_custom_call.1} parent=1 // loop_footer_branch
      %11 = sbr.rel target = $region3
    $region8: #{tpu_custom_call.1} parent=1 // loop_exit
      _
    %5245 = vsyncpa [#allocation3], 1
    %s5246 = scalar_lea.sflag [#allocation3], 1
    %5247 = vsyncpa %s5246, 1

</llo_original>
